<compile_context>
chip_gen: v5e
topology: v5e:2x2
jax: 0.10.0
libtpu: 0.0.40
codegen_flags: <defaults>
</compile_context>

<pallas_src>
import functools

import jax
import jax.numpy as jnp
from jax import lax
from jax.experimental import pallas as pl
from jax.experimental.pallas import tpu as pltpu

EPS = 1e-5


# ----------------------------------------------------------------------------
# In-kernel helpers
# ----------------------------------------------------------------------------
def _fill_padded(pad_ref, interior):
    """Write `interior` (H, W, C) into pad_ref (H+2, W+2, C) with a zero border."""
    H, W, C = interior.shape
    zrow = jnp.zeros((1, W + 2, C), pad_ref.dtype)
    zcol = jnp.zeros((H + 2, 1, C), pad_ref.dtype)
    # Re-zero the border every grid step (cheap; stays correct even if the grid is
    # sharded across TensorCores, where scratch is per-core).
    pad_ref[0:1, :, :] = zrow
    pad_ref[H + 1:H + 2, :, :] = zrow
    pad_ref[:, 0:1, :] = zcol
    pad_ref[:, W + 1:W + 2, :] = zcol
    pad_ref[1:H + 1, 1:W + 1, :] = interior.astype(pad_ref.dtype)


def _conv3x3_from_padded(pad_ref, w_ref, H, W, compute_dtype):
    """Single K=9*Cin MXU contraction over an im2col slab of the padded tile.

    pad_ref: (H+2, W+2, Cin) VMEM scratch with zero border
    w_ref  : (9*Cin, Cout)   flattened HWIO weights
    returns: (H*W, Cout)     float32 accumulator
    """
    Cin = pad_ref.shape[-1]
    cols = []
    for kh in range(3):
        for kw in range(3):
            cols.append(pad_ref[kh:kh + H, kw:kw + W, :].reshape(H * W, Cin))
    slab = jnp.concatenate(cols, axis=-1)                         # (H*W, 9*Cin)
    return jnp.dot(slab.astype(compute_dtype),
                   w_ref[...].astype(compute_dtype),
                   preferred_element_type=jnp.float32)            # f32 accumulate


# ----------------------------------------------------------------------------
# Kernel 1: conv3x3 + bias, emitting per-image BN partial statistics
# ----------------------------------------------------------------------------
def _conv_bias_stats_kernel(x_ref, w_ref, b_ref,
                            y_ref, psum_ref, psq_ref,
                            pad_ref, *, compute_dtype):
    # x_ref : (1, H, W, Cin); w_ref: (9*Cin, Cout); b_ref: (1, Cout)
    # y_ref : (1, H, W, Cout); psum_ref/psq_ref: (1, 1, Cout)
    H, W = y_ref.shape[1], y_ref.shape[2]
    Cout = y_ref.shape[3]
    _fill_padded(pad_ref, x_ref[0])
    y = _conv3x3_from_padded(pad_ref, w_ref, H, W, compute_dtype)
    y = y + b_ref[...].astype(jnp.float32)                        # (H*W, Cout)
    y_ref[...] = y.reshape(1, H, W, Cout).astype(y_ref.dtype)
    psum_ref[...] = jnp.sum(y, axis=0).reshape(1, 1, Cout)
    psq_ref[...] = jnp.sum(y * y, axis=0).reshape(1, 1, Cout)


# ----------------------------------------------------------------------------
# Kernel 2: fused BN-affine + ReLU prologue, then conv3x3 + bias + BN partials
# ----------------------------------------------------------------------------
def _bnrelu_conv_bias_stats_kernel(a_ref, scale_ref, shift_ref, w_ref, b_ref,
                                   y_ref, psum_ref, psq_ref,
                                   pad_ref, *, compute_dtype):
    # a_ref : (1, H, W, Cmid) pre-BN activations of the previous conv
    # scale_ref/shift_ref: (1, 1, Cmid) precomputed BN scale/shift
    H, W = y_ref.shape[1], y_ref.shape[2]
    Cout = y_ref.shape[3]
    a = a_ref[0].astype(jnp.float32) * scale_ref[...] + shift_ref[...]
    a = jnp.maximum(a, 0.0)                                       # BN1 + ReLU in VMEM
    _fill_padded(pad_ref, a)                                      # zero halo = pad(relu(bn(x)))
    y = _conv3x3_from_padded(pad_ref, w_ref, H, W, compute_dtype)
    y = y + b_ref[...].astype(jnp.float32)
    y_ref[...] = y.reshape(1, H, W, Cout).astype(y_ref.dtype)
    psum_ref[...] = jnp.sum(y, axis=0).reshape(1, 1, Cout)
    psq_ref[...] = jnp.sum(y * y, axis=0).reshape(1, 1, Cout)


# ----------------------------------------------------------------------------
# Kernel 3: final BN-affine + ReLU epilogue
# ----------------------------------------------------------------------------
def _bn_relu_kernel(y_ref, scale_ref, shift_ref, o_ref):
    y = y_ref[...].astype(jnp.float32)
    o_ref[...] = jnp.maximum(y * scale_ref[...] + shift_ref[...], 0.0).astype(o_ref.dtype)


# ----------------------------------------------------------------------------
# pallas_call wrappers
# ----------------------------------------------------------------------------
# NOTE: at realistic VGG resolutions a halo'd row-tile grid axis should be added so
# that double-buffered tiles fit v7x's 64 MiB VMEM; at these shapes a whole image
# per grid step is far below any VMEM limit and keeps the batch axis "parallel".
def _conv1_call(x, w_flat, bias, *, compute_dtype):
    N, H, W, Cin = x.shape
    Cout = w_flat.shape[-1]
    kernel = functools.partial(_conv_bias_stats_kernel, compute_dtype=compute_dtype)
    return pl.pallas_call(
        kernel,
        out_shape=(
            jax.ShapeDtypeStruct((N, H, W, Cout), jnp.float32),
            jax.ShapeDtypeStruct((N, 1, Cout), jnp.float32),
            jax.ShapeDtypeStruct((N, 1, Cout), jnp.float32),
        ),
        grid_spec=pltpu.PrefetchScalarGridSpec(
            num_scalar_prefetch=0,
            grid=(N,),
            in_specs=[
                pl.BlockSpec((1, H, W, Cin), lambda n: (n, 0, 0, 0)),
                pl.BlockSpec((9 * Cin, Cout), lambda n: (0, 0)),
                pl.BlockSpec((1, Cout), lambda n: (0, 0)),
            ],
            out_specs=(
                pl.BlockSpec((1, H, W, Cout), lambda n: (n, 0, 0, 0)),
                pl.BlockSpec((1, 1, Cout), lambda n: (n, 0, 0)),
                pl.BlockSpec((1, 1, Cout), lambda n: (n, 0, 0)),
            ),
            scratch_shapes=[pltpu.VMEM((H + 2, W + 2, Cin), jnp.float32)],
        ),
        compiler_params=pltpu.CompilerParams(dimension_semantics=("parallel",)),
    )(x, w_flat, bias.reshape(1, Cout))


def _bnrelu_conv2_call(y1, scale, shift, w_flat, bias, *, compute_dtype):
    N, H, W, Cmid = y1.shape
    Cout = w_flat.shape[-1]
    kernel = functools.partial(_bnrelu_conv_bias_stats_kernel, compute_dtype=compute_dtype)
    return pl.pallas_call(
        kernel,
        out_shape=(
            jax.ShapeDtypeStruct((N, H, W, Cout), jnp.float32),
            jax.ShapeDtypeStruct((N, 1, Cout), jnp.float32),
            jax.ShapeDtypeStruct((N, 1, Cout), jnp.float32),
        ),
        grid_spec=pltpu.PrefetchScalarGridSpec(
            num_scalar_prefetch=0,
            grid=(N,),
            in_specs=[
                pl.BlockSpec((1, H, W, Cmid), lambda n: (n, 0, 0, 0)),
                pl.BlockSpec((1, 1, Cmid), lambda n: (0, 0, 0)),
                pl.BlockSpec((1, 1, Cmid), lambda n: (0, 0, 0)),
                pl.BlockSpec((9 * Cmid, Cout), lambda n: (0, 0)),
                pl.BlockSpec((1, Cout), lambda n: (0, 0)),
            ],
            out_specs=(
                pl.BlockSpec((1, H, W, Cout), lambda n: (n, 0, 0, 0)),
                pl.BlockSpec((1, 1, Cout), lambda n: (n, 0, 0)),
                pl.BlockSpec((1, 1, Cout), lambda n: (n, 0, 0)),
            ),
            scratch_shapes=[pltpu.VMEM((H + 2, W + 2, Cmid), jnp.float32)],
        ),
        compiler_params=pltpu.CompilerParams(dimension_semantics=("parallel",)),
    )(y1, scale.reshape(1, 1, Cmid), shift.reshape(1, 1, Cmid),
      w_flat, bias.reshape(1, Cout))


def _bn_relu_call(y, scale, shift):
    N, H, W, C = y.shape
    return pl.pallas_call(
        _bn_relu_kernel,
        out_shape=jax.ShapeDtypeStruct((N, H, W, C), jnp.float32),
        grid_spec=pltpu.PrefetchScalarGridSpec(
            num_scalar_prefetch=0,
            grid=(N,),
            in_specs=[
                pl.BlockSpec((1, H, W, C), lambda n: (n, 0, 0, 0)),
                pl.BlockSpec((1, 1, 1, C), lambda n: (0, 0, 0, 0)),
                pl.BlockSpec((1, 1, 1, C), lambda n: (0, 0, 0, 0)),
            ],
            out_specs=pl.BlockSpec((1, H, W, C), lambda n: (n, 0, 0, 0)),
        ),
        compiler_params=pltpu.CompilerParams(dimension_semantics=("parallel",)),
    )(y, scale.reshape(1, 1, 1, C), shift.reshape(1, 1, 1, C))


# ----------------------------------------------------------------------------
# BN statistics finalize (tiny (N, C) reduction in JAX glue)
# ----------------------------------------------------------------------------
def _bn_scale_shift(psum, psq, gamma, beta, count):
    s = jnp.sum(psum, axis=0).reshape(-1)                         # (C,)
    sq = jnp.sum(psq, axis=0).reshape(-1)                         # (C,)
    mean = s / count
    var = jnp.maximum(sq / count - mean * mean, 0.0)              # biased batch variance
    scale = gamma * lax.rsqrt(var + EPS)
    shift = beta - mean * scale
    return scale.astype(jnp.float32), shift.astype(jnp.float32)


# ----------------------------------------------------------------------------
# VGGBlock forward (NCHW in / NCHW out, like PyTorch)
# ----------------------------------------------------------------------------
def init_vgg_block_params(key, in_channels, middle_channels, out_channels):
    k1, k2, k3, k4, k5, k6 = jax.random.split(key, 6)
    return {
        # stored in PyTorch OIHW layout, converted to flattened HWIO inside forward
        "w1": jax.random.normal(k1, (middle_channels, in_channels, 3, 3), jnp.float32) * 0.1,
        "b1": jax.random.normal(k2, (middle_channels,), jnp.float32) * 0.1,
        "gamma1": 1.0 + 0.1 * jax.random.normal(k3, (middle_channels,), jnp.float32),
        "beta1": 0.1 * jax.random.normal(k4, (middle_channels,), jnp.float32),
        "w2": jax.random.normal(k5, (out_channels, middle_channels, 3, 3), jnp.float32) * 0.1,
        "b2": jax.random.normal(k6, (out_channels,), jnp.float32) * 0.1,
        "gamma2": jnp.ones((out_channels,), jnp.float32),
        "beta2": jnp.zeros((out_channels,), jnp.float32),
    }


@functools.partial(jax.jit, static_argnames=("compute_dtype",))
def vgg_block_forward(params, x_nchw, *, compute_dtype=jnp.float32):
    # NCHW -> NHWC at the module boundary only.
    # NOTE: when chaining multiple VGG blocks, keep activations NHWC between blocks
    # and transpose only at the true model boundary (saves 2 HBM relayouts / block).
    x = jnp.transpose(x_nchw, (0, 2, 3, 1)).astype(jnp.float32)
    N, H, W, Cin = x.shape
    Cmid = params["w1"].shape[0]
    Cout = params["w2"].shape[0]
    count = float(N * H * W)

    # OIHW -> HWIO -> (9*Cin, Cout) flattened for the single K=9*Cin contraction.
    w1 = jnp.transpose(params["w1"], (2, 3, 1, 0)).reshape(9 * Cin, Cmid).astype(compute_dtype)
    w2 = jnp.transpose(params["w2"], (2, 3, 1, 0)).reshape(9 * Cmid, Cout).astype(compute_dtype)

    # Stage 1: conv1 + bias, BN1 partial stats fused into the conv epilogue.
    y1, ps1, pq1 = _conv1_call(x, w1, params["b1"], compute_dtype=compute_dtype)
    scale1, shift1 = _bn_scale_shift(ps1, pq1, params["gamma1"], params["beta1"], count)

    # Stage 2: BN1 + ReLU applied in-VMEM as the prologue of conv2; BN2 partials fused.
    y2, ps2, pq2 = _bnrelu_conv2_call(y1, scale1, shift1, w2, params["b2"],
                                      compute_dtype=compute_dtype)
    scale2, shift2 = _bn_scale_shift(ps2, pq2, params["gamma2"], params["beta2"], count)

    # Stage 3: final BN2 + ReLU (needs global y2 stats, hence a separate pass).
    out = _bn_relu_call(y2, scale2, shift2)

    return jnp.transpose(out, (0, 3, 1, 2))                       # NHWC -> NCHW


# ----------------------------------------------------------------------------
# Pure-JAX reference (correctness check)
# ----------------------------------------------------------------------------
def _ref_forward(params, x_nchw):
    def conv(x, w, b):
        y = lax.conv_general_dilated(
            x, w, window_strides=(1, 1), padding="SAME",
            dimension_numbers=("NCHW", "OIHW", "NCHW"),
            precision=lax.Precision.HIGHEST)
        return y + b.reshape(1, -1, 1, 1)

    def bn_relu(x, g, bta):
        m = jnp.mean(x, axis=(0, 2, 3), keepdims=True)
        v = jnp.mean(jnp.square(x - m), axis=(0, 2, 3), keepdims=True)
        y = (x - m) * lax.rsqrt(v + EPS)
        y = y * g.reshape(1, -1, 1, 1) + bta.reshape(1, -1, 1, 1)
        return jnp.maximum(y, 0.0)

    out = bn_relu(conv(x_nchw, params["w1"], params["b1"]),
                  params["gamma1"], params["beta1"])
    out = bn_relu(conv(out, params["w2"], params["b2"]),
                  params["gamma2"], params["beta2"])
    return out


if __name__ == "__main__":
    key = jax.random.PRNGKey(0)
    kx, kp = jax.random.split(key)

    N, Cin, H, W = 2, 4, 16, 16
    Cmid, Cout = 8, 8

    x = jax.random.normal(kx, (N, Cin, H, W), jnp.float32)
    params = init_vgg_block_params(kp, Cin, Cmid, Cout)
    ref = _ref_forward(params, x)

    # f32 MXU-operand path: tight check against the pure-JAX reference.
    out = jax.block_until_ready(vgg_block_forward(params, x, compute_dtype=jnp.float32))
    assert out.shape == (N, Cout, H, W), out.shape
    err_f32 = float(jnp.max(jnp.abs(out - ref)))
    assert jnp.allclose(out, ref, atol=2e-3, rtol=2e-3), err_f32

    # bf16 MXU-operand path (f32 accumulation & BN stats): sanity check, looser tolerance.
    out_bf16 = jax.block_until_ready(vgg_block_forward(params, x, compute_dtype=jnp.bfloat16))
    err_bf16 = float(jnp.max(jnp.abs(out_bf16 - ref)))
    assert jnp.allclose(out_bf16, ref, atol=1e-1, rtol=1e-1), err_bf16

    print("KERNEL_OK")
</pallas_src>

<mosaic_0001>
module attributes {stable_mosaic.version = 11 : i64} {
  func.func @_conv_bias_stats_kernel(%arg0: i32, %arg1: memref<1x16x16x4xf32, #tpu.memory_space<vmem>>, %arg2: memref<36x8xf32, #tpu.memory_space<vmem>>, %arg3: memref<1x8xf32, #tpu.memory_space<vmem>>, %arg4: memref<1x16x16x8xf32, #tpu.memory_space<vmem>>, %arg5: memref<1x1x8xf32, #tpu.memory_space<vmem>>, %arg6: memref<1x1x8xf32, #tpu.memory_space<vmem>>, %arg7: memref<18x18x4xf32, #tpu.memory_space<vmem>>) attributes {dimension_semantics = [#tpu.dimension_semantics<parallel>], iteration_bounds = array<i64: 2>, scalar_prefetch = 0 : i64, scratch_operands = 1 : i64, tpu.core_type = #tpu.core_type<tc>, window_params = [{transform_indices = @transform_0, window_bounds = array<i64: 1, 16, 16, 4>}, {pipeline_mode = #tpu.pipeline_mode<synchronous>, transform_indices = @transform_1, window_bounds = array<i64: 36, 8>}, {pipeline_mode = #tpu.pipeline_mode<synchronous>, transform_indices = @transform_2, window_bounds = array<i64: 1, 8>}, {transform_indices = @transform_3, window_bounds = array<i64: 1, 16, 16, 8>}, {transform_indices = @transform_4, window_bounds = array<i64: 1, 1, 8>}, {transform_indices = @transform_5, window_bounds = array<i64: 1, 1, 8>}]} {
    %c0 = arith.constant 0 : index
    %c0_0 = arith.constant 0 : index
    %c0_1 = arith.constant 0 : index
    %c0_2 = arith.constant 0 : index
    %0 = vector.load %arg1[%c0, %c0_0, %c0_1, %c0_2] : memref<1x16x16x4xf32, #tpu.memory_space<vmem>>, vector<1x16x16x4xf32>
    %1 = vector.shape_cast %0 : vector<1x16x16x4xf32> to vector<16x16x4xf32>
    %cst = arith.constant 0.000000e+00 : f32
    %2 = vector.broadcast %cst : f32 to vector<1x18x4xf32>
    %cst_3 = arith.constant 0.000000e+00 : f32
    %3 = vector.broadcast %cst_3 : f32 to vector<18x1x4xf32>
    %c0_4 = arith.constant 0 : index
    %c0_5 = arith.constant 0 : index
    %c0_6 = arith.constant 0 : index
    %4 = vector.load %arg7[%c0_4, %c0_5, %c0_6] : memref<18x18x4xf32, #tpu.memory_space<vmem>>, vector<1x18x4xf32>
    tpu.vector_store %arg7[%c0_4, %c0_5, %c0_6], %2 {strides = array<i32>} : memref<18x18x4xf32, #tpu.memory_space<vmem>>, vector<1x18x4xf32>,
    %c17 = arith.constant 17 : index
    %c0_7 = arith.constant 0 : index
    %c0_8 = arith.constant 0 : index
    %5 = vector.load %arg7[%c17, %c0_7, %c0_8] : memref<18x18x4xf32, #tpu.memory_space<vmem>>, vector<1x18x4xf32>
    tpu.vector_store %arg7[%c17, %c0_7, %c0_8], %2 {strides = array<i32>} : memref<18x18x4xf32, #tpu.memory_space<vmem>>, vector<1x18x4xf32>,
    %c0_9 = arith.constant 0 : index
    %c0_10 = arith.constant 0 : index
    %c0_11 = arith.constant 0 : index
    %6 = vector.load %arg7[%c0_9, %c0_10, %c0_11] : memref<18x18x4xf32, #tpu.memory_space<vmem>>, vector<18x1x4xf32>
    tpu.vector_store %arg7[%c0_9, %c0_10, %c0_11], %3 {strides = array<i32>} : memref<18x18x4xf32, #tpu.memory_space<vmem>>, vector<18x1x4xf32>,
    %c0_12 = arith.constant 0 : index
    %c17_13 = arith.constant 17 : index
    %c0_14 = arith.constant 0 : index
    %7 = vector.load %arg7[%c0_12, %c17_13, %c0_14] : memref<18x18x4xf32, #tpu.memory_space<vmem>>, vector<18x1x4xf32>
    tpu.vector_store %arg7[%c0_12, %c17_13, %c0_14], %3 {strides = array<i32>} : memref<18x18x4xf32, #tpu.memory_space<vmem>>, vector<18x1x4xf32>,
    %c1 = arith.constant 1 : index
    %c1_15 = arith.constant 1 : index
    %c0_16 = arith.constant 0 : index
    %8 = vector.load %arg7[%c1, %c1_15, %c0_16] : memref<18x18x4xf32, #tpu.memory_space<vmem>>, vector<16x16x4xf32>
    tpu.vector_store %arg7[%c1, %c1_15, %c0_16], %1 {strides = array<i32>} : memref<18x18x4xf32, #tpu.memory_space<vmem>>, vector<16x16x4xf32>,
    %c0_17 = arith.constant 0 : index
    %c0_18 = arith.constant 0 : index
    %c0_19 = arith.constant 0 : index
    %9 = vector.load %arg7[%c0_17, %c0_18, %c0_19] : memref<18x18x4xf32, #tpu.memory_space<vmem>>, vector<16x16x4xf32>
    %10 = vector.shape_cast %9 : vector<16x16x4xf32> to vector<256x4xf32>
    %c0_20 = arith.constant 0 : index
    %c1_21 = arith.constant 1 : index
    %c0_22 = arith.constant 0 : index
    %11 = vector.load %arg7[%c0_20, %c1_21, %c0_22] : memref<18x18x4xf32, #tpu.memory_space<vmem>>, vector<16x16x4xf32>
    %12 = vector.shape_cast %11 : vector<16x16x4xf32> to vector<256x4xf32>
    %c0_23 = arith.constant 0 : index
    %c2 = arith.constant 2 : index
    %c0_24 = arith.constant 0 : index
    %13 = vector.load %arg7[%c0_23, %c2, %c0_24] : memref<18x18x4xf32, #tpu.memory_space<vmem>>, vector<16x16x4xf32>
    %14 = vector.shape_cast %13 : vector<16x16x4xf32> to vector<256x4xf32>
    %c1_25 = arith.constant 1 : index
    %c0_26 = arith.constant 0 : index
    %c0_27 = arith.constant 0 : index
    %15 = vector.load %arg7[%c1_25, %c0_26, %c0_27] : memref<18x18x4xf32, #tpu.memory_space<vmem>>, vector<16x16x4xf32>
    %16 = vector.shape_cast %15 : vector<16x16x4xf32> to vector<256x4xf32>
    %c1_28 = arith.constant 1 : index
    %c1_29 = arith.constant 1 : index
    %c0_30 = arith.constant 0 : index
    %17 = vector.load %arg7[%c1_28, %c1_29, %c0_30] : memref<18x18x4xf32, #tpu.memory_space<vmem>>, vector<16x16x4xf32>
    %18 = vector.shape_cast %17 : vector<16x16x4xf32> to vector<256x4xf32>
    %c1_31 = arith.constant 1 : index
    %c2_32 = arith.constant 2 : index
    %c0_33 = arith.constant 0 : index
    %19 = vector.load %arg7[%c1_31, %c2_32, %c0_33] : memref<18x18x4xf32, #tpu.memory_space<vmem>>, vector<16x16x4xf32>
    %20 = vector.shape_cast %19 : vector<16x16x4xf32> to vector<256x4xf32>
    %c2_34 = arith.constant 2 : index
    %c0_35 = arith.constant 0 : index
    %c0_36 = arith.constant 0 : index
    %21 = vector.load %arg7[%c2_34, %c0_35, %c0_36] : memref<18x18x4xf32, #tpu.memory_space<vmem>>, vector<16x16x4xf32>
    %22 = vector.shape_cast %21 : vector<16x16x4xf32> to vector<256x4xf32>
    %c2_37 = arith.constant 2 : index
    %c1_38 = arith.constant 1 : index
    %c0_39 = arith.constant 0 : index
    %23 = vector.load %arg7[%c2_37, %c1_38, %c0_39] : memref<18x18x4xf32, #tpu.memory_space<vmem>>, vector<16x16x4xf32>
    %24 = vector.shape_cast %23 : vector<16x16x4xf32> to vector<256x4xf32>
    %c2_40 = arith.constant 2 : index
    %c2_41 = arith.constant 2 : index
    %c0_42 = arith.constant 0 : index
    %25 = vector.load %arg7[%c2_40, %c2_41, %c0_42] : memref<18x18x4xf32, #tpu.memory_space<vmem>>, vector<16x16x4xf32>
    %26 = vector.shape_cast %25 : vector<16x16x4xf32> to vector<256x4xf32>
    %27 = tpu.concatenate %10, %12, %14, %16, %18, %20, %22, %24, %26 in 1 : vector<256x4xf32>, vector<256x4xf32>, vector<256x4xf32>, vector<256x4xf32>, vector<256x4xf32>, vector<256x4xf32>, vector<256x4xf32>, vector<256x4xf32>, vector<256x4xf32> -> vector<256x36xf32>
    %c0_43 = arith.constant 0 : index
    %c0_44 = arith.constant 0 : index
    %28 = vector.load %arg2[%c0_43, %c0_44] : memref<36x8xf32, #tpu.memory_space<vmem>>, vector<36x8xf32>
    %cst_45 = arith.constant dense<0.000000e+00> : vector<256x8xf32>
    %29 = tpu.matmul %27, %28, %cst_45 {dimension_numbers = #tpu.dot_dimension_numbers<[1], [0], [0], [1], [0, 0, 1, 1], [], []>} : vector<256x36xf32>, vector<36x8xf32>, vector<256x8xf32> -> vector<256x8xf32>
    %c0_46 = arith.constant 0 : index
    %c0_47 = arith.constant 0 : index
    %30 = vector.load %arg3[%c0_46, %c0_47] : memref<1x8xf32, #tpu.memory_space<vmem>>, vector<1x8xf32>
    %31 = vector.broadcast %30 : vector<1x8xf32> to vector<256x8xf32>
    %32 = arith.addf %29, %31 : vector<256x8xf32>
    %33 = vector.shape_cast %32 : vector<256x8xf32> to vector<1x16x16x8xf32>
    %c0_48 = arith.constant 0 : index
    %c0_49 = arith.constant 0 : index
    %c0_50 = arith.constant 0 : index
    %c0_51 = arith.constant 0 : index
    %34 = vector.load %arg4[%c0_48, %c0_49, %c0_50, %c0_51] : memref<1x16x16x8xf32, #tpu.memory_space<vmem>>, vector<1x16x16x8xf32>
    tpu.vector_store %arg4[%c0_48, %c0_49, %c0_50, %c0_51], %33 {strides = array<i32>} : memref<1x16x16x8xf32, #tpu.memory_space<vmem>>, vector<1x16x16x8xf32>,
    %cst_52 = arith.constant dense<0.000000e+00> : vector<8xf32>
    %35 = vector.multi_reduction <add>, %32, %cst_52 [0] : vector<256x8xf32> to vector<8xf32>
    %36 = vector.shape_cast %35 : vector<8xf32> to vector<1x1x8xf32>
    %c0_53 = arith.constant 0 : index
    %c0_54 = arith.constant 0 : index
    %c0_55 = arith.constant 0 : index
    %37 = vector.load %arg5[%c0_53, %c0_54, %c0_55] : memref<1x1x8xf32, #tpu.memory_space<vmem>>, vector<1x1x8xf32>
    tpu.vector_store %arg5[%c0_53, %c0_54, %c0_55], %36 {strides = array<i32>} : memref<1x1x8xf32, #tpu.memory_space<vmem>>, vector<1x1x8xf32>,
    %38 = arith.mulf %32, %32 : vector<256x8xf32>
    %cst_56 = arith.constant dense<0.000000e+00> : vector<8xf32>
    %39 = vector.multi_reduction <add>, %38, %cst_56 [0] : vector<256x8xf32> to vector<8xf32>
    %40 = vector.shape_cast %39 : vector<8xf32> to vector<1x1x8xf32>
    %c0_57 = arith.constant 0 : index
    %c0_58 = arith.constant 0 : index
    %c0_59 = arith.constant 0 : index
    %41 = vector.load %arg6[%c0_57, %c0_58, %c0_59] : memref<1x1x8xf32, #tpu.memory_space<vmem>>, vector<1x1x8xf32>
    tpu.vector_store %arg6[%c0_57, %c0_58, %c0_59], %40 {strides = array<i32>} : memref<1x1x8xf32, #tpu.memory_space<vmem>>, vector<1x1x8xf32>,
    return
  }
  func.func @transform_0(%arg0: i32) -> (i32, i32, i32, i32) {
    %c0_i32 = arith.constant 0 : i32
    %c0_i32_0 = arith.constant 0 : i32
    %c0_i32_1 = arith.constant 0 : i32
    %c0_i32_2 = arith.constant 0 : i32
    return %arg0, %c0_i32, %c0_i32_0, %c0_i32_1 : i32, i32, i32, i32
  }
  func.func @transform_1(%arg0: i32) -> (i32, i32) {
    %c0_i32 = arith.constant 0 : i32
    %c0_i32_0 = arith.constant 0 : i32
    %c0_i32_1 = arith.constant 0 : i32
    return %c0_i32, %c0_i32_0 : i32, i32
  }
  func.func @transform_2(%arg0: i32) -> (i32, i32) {
    %c0_i32 = arith.constant 0 : i32
    %c0_i32_0 = arith.constant 0 : i32
    %c0_i32_1 = arith.constant 0 : i32
    return %c0_i32, %c0_i32_0 : i32, i32
  }
  func.func @transform_3(%arg0: i32) -> (i32, i32, i32, i32) {
    %c0_i32 = arith.constant 0 : i32
    %c0_i32_0 = arith.constant 0 : i32
    %c0_i32_1 = arith.constant 0 : i32
    %c0_i32_2 = arith.constant 0 : i32
    return %arg0, %c0_i32, %c0_i32_0, %c0_i32_1 : i32, i32, i32, i32
  }
  func.func @transform_4(%arg0: i32) -> (i32, i32, i32) {
    %c0_i32 = arith.constant 0 : i32
    %c0_i32_0 = arith.constant 0 : i32
    %c0_i32_1 = arith.constant 0 : i32
    return %arg0, %c0_i32, %c0_i32_0 : i32, i32, i32
  }
  func.func @transform_5(%arg0: i32) -> (i32, i32, i32) {
    %c0_i32 = arith.constant 0 : i32
    %c0_i32_0 = arith.constant 0 : i32
    %c0_i32_1 = arith.constant 0 : i32
    return %arg0, %c0_i32, %c0_i32_0 : i32, i32, i32
  }
}

module attributes {stable_mosaic.version = 11 : i64} {
  func.func @_bn_relu_kernel(%arg0: i32, %arg1: memref<1x16x16x8xf32, #tpu.memory_space<vmem>>, %arg2: memref<1x1x1x8xf32, #tpu.memory_space<vmem>>, %arg3: memref<1x1x1x8xf32, #tpu.memory_space<vmem>>, %arg4: memref<1x16x16x8xf32, #tpu.memory_space<vmem>>) attributes {dimension_semantics = [#tpu.dimension_semantics<parallel>], iteration_bounds = array<i64: 2>, scalar_prefetch = 0 : i64, scratch_operands = 0 : i64, tpu.core_type = #tpu.core_type<tc>, window_params = [{transform_indices = @transform_0, window_bounds = array<i64: 1, 16, 16, 8>}, {pipeline_mode = #tpu.pipeline_mode<synchronous>, transform_indices = @transform_1, window_bounds = array<i64: 1, 1, 1, 8>}, {pipeline_mode = #tpu.pipeline_mode<synchronous>, transform_indices = @transform_2, window_bounds = array<i64: 1, 1, 1, 8>}, {transform_indices = @transform_3, window_bounds = array<i64: 1, 16, 16, 8>}]} {
    %c0 = arith.constant 0 : index
    %c0_0 = arith.constant 0 : index
    %c0_1 = arith.constant 0 : index
    %c0_2 = arith.constant 0 : index
    %0 = vector.load %arg1[%c0, %c0_0, %c0_1, %c0_2] : memref<1x16x16x8xf32, #tpu.memory_space<vmem>>, vector<1x16x16x8xf32>
    %c0_3 = arith.constant 0 : index
    %c0_4 = arith.constant 0 : index
    %c0_5 = arith.constant 0 : index
    %c0_6 = arith.constant 0 : index
    %1 = vector.load %arg2[%c0_3, %c0_4, %c0_5, %c0_6] : memref<1x1x1x8xf32, #tpu.memory_space<vmem>>, vector<1x1x1x8xf32>
    %2 = vector.broadcast %1 : vector<1x1x1x8xf32> to vector<1x16x16x8xf32>
    %3 = arith.mulf %0, %2 : vector<1x16x16x8xf32>
    %c0_7 = arith.constant 0 : index
    %c0_8 = arith.constant 0 : index
    %c0_9 = arith.constant 0 : index
    %c0_10 = arith.constant 0 : index
    %4 = vector.load %arg3[%c0_7, %c0_8, %c0_9, %c0_10] : memref<1x1x1x8xf32, #tpu.memory_space<vmem>>, vector<1x1x1x8xf32>
    %5 = vector.broadcast %4 : vector<1x1x1x8xf32> to vector<1x16x16x8xf32>
    %6 = arith.addf %3, %5 : vector<1x16x16x8xf32>
    %cst = arith.constant 0.000000e+00 : f32
    %7 = vector.broadcast %cst : f32 to vector<1x16x16x8xf32>
    %8 = arith.maximumf %6, %7 : vector<1x16x16x8xf32>
    %c0_11 = arith.constant 0 : index
    %c0_12 = arith.constant 0 : index
    %c0_13 = arith.constant 0 : index
    %c0_14 = arith.constant 0 : index
    %9 = vector.load %arg4[%c0_11, %c0_12, %c0_13, %c0_14] : memref<1x16x16x8xf32, #tpu.memory_space<vmem>>, vector<1x16x16x8xf32>
    tpu.vector_store %arg4[%c0_11, %c0_12, %c0_13, %c0_14], %8 {strides = array<i32>} : memref<1x16x16x8xf32, #tpu.memory_space<vmem>>, vector<1x16x16x8xf32>,
    return
  }
  func.func @transform_0(%arg0: i32) -> (i32, i32, i32, i32) {
    %c0_i32 = arith.constant 0 : i32
    %c0_i32_0 = arith.constant 0 : i32
    %c0_i32_1 = arith.constant 0 : i32
    %c0_i32_2 = arith.constant 0 : i32
    return %arg0, %c0_i32, %c0_i32_0, %c0_i32_1 : i32, i32, i32, i32
  }
  func.func @transform_1(%arg0: i32) -> (i32, i32, i32, i32) {
    %c0_i32 = arith.constant 0 : i32
    %c0_i32_0 = arith.constant 0 : i32
    %c0_i32_1 = arith.constant 0 : i32
    %c0_i32_2 = arith.constant 0 : i32
    %c0_i32_3 = arith.constant 0 : i32
    return %c0_i32, %c0_i32_0, %c0_i32_1, %c0_i32_2 : i32, i32, i32, i32
  }
  func.func @transform_2(%arg0: i32) -> (i32, i32, i32, i32) {
    %c0_i32 = arith.constant 0 : i32
    %c0_i32_0 = arith.constant 0 : i32
    %c0_i32_1 = arith.constant 0 : i32
    %c0_i32_2 = arith.constant 0 : i32
    %c0_i32_3 = arith.constant 0 : i32
    return %c0_i32, %c0_i32_0, %c0_i32_1, %c0_i32_2 : i32, i32, i32, i32
  }
  func.func @transform_3(%arg0: i32) -> (i32, i32, i32, i32) {
    %c0_i32 = arith.constant 0 : i32
    %c0_i32_0 = arith.constant 0 : i32
    %c0_i32_1 = arith.constant 0 : i32
    %c0_i32_2 = arith.constant 0 : i32
    return %arg0, %c0_i32, %c0_i32_0, %c0_i32_1 : i32, i32, i32, i32
  }
}

module attributes {stable_mosaic.version = 11 : i64} {
  func.func @_bnrelu_conv_bias_stats_kernel(%arg0: i32, %arg1: memref<1x16x16x8xf32, #tpu.memory_space<vmem>>, %arg2: memref<1x1x8xf32, #tpu.memory_space<vmem>>, %arg3: memref<1x1x8xf32, #tpu.memory_space<vmem>>, %arg4: memref<72x8xf32, #tpu.memory_space<vmem>>, %arg5: memref<1x8xf32, #tpu.memory_space<vmem>>, %arg6: memref<1x16x16x8xf32, #tpu.memory_space<vmem>>, %arg7: memref<1x1x8xf32, #tpu.memory_space<vmem>>, %arg8: memref<1x1x8xf32, #tpu.memory_space<vmem>>, %arg9: memref<18x18x8xf32, #tpu.memory_space<vmem>>) attributes {dimension_semantics = [#tpu.dimension_semantics<parallel>], iteration_bounds = array<i64: 2>, scalar_prefetch = 0 : i64, scratch_operands = 1 : i64, tpu.core_type = #tpu.core_type<tc>, window_params = [{transform_indices = @transform_0, window_bounds = array<i64: 1, 16, 16, 8>}, {pipeline_mode = #tpu.pipeline_mode<synchronous>, transform_indices = @transform_1, window_bounds = array<i64: 1, 1, 8>}, {pipeline_mode = #tpu.pipeline_mode<synchronous>, transform_indices = @transform_2, window_bounds = array<i64: 1, 1, 8>}, {pipeline_mode = #tpu.pipeline_mode<synchronous>, transform_indices = @transform_3, window_bounds = array<i64: 72, 8>}, {pipeline_mode = #tpu.pipeline_mode<synchronous>, transform_indices = @transform_4, window_bounds = array<i64: 1, 8>}, {transform_indices = @transform_5, window_bounds = array<i64: 1, 16, 16, 8>}, {transform_indices = @transform_6, window_bounds = array<i64: 1, 1, 8>}, {transform_indices = @transform_7, window_bounds = array<i64: 1, 1, 8>}]} {
    %c0 = arith.constant 0 : index
    %c0_0 = arith.constant 0 : index
    %c0_1 = arith.constant 0 : index
    %c0_2 = arith.constant 0 : index
    %0 = vector.load %arg1[%c0, %c0_0, %c0_1, %c0_2] : memref<1x16x16x8xf32, #tpu.memory_space<vmem>>, vector<1x16x16x8xf32>
    %1 = vector.shape_cast %0 : vector<1x16x16x8xf32> to vector<16x16x8xf32>
    %c0_3 = arith.constant 0 : index
    %c0_4 = arith.constant 0 : index
    %c0_5 = arith.constant 0 : index
    %2 = vector.load %arg2[%c0_3, %c0_4, %c0_5] : memref<1x1x8xf32, #tpu.memory_space<vmem>>, vector<1x1x8xf32>
    %3 = vector.broadcast %2 : vector<1x1x8xf32> to vector<16x16x8xf32>
    %4 = arith.mulf %1, %3 : vector<16x16x8xf32>
    %c0_6 = arith.constant 0 : index
    %c0_7 = arith.constant 0 : index
    %c0_8 = arith.constant 0 : index
    %5 = vector.load %arg3[%c0_6, %c0_7, %c0_8] : memref<1x1x8xf32, #tpu.memory_space<vmem>>, vector<1x1x8xf32>
    %6 = vector.broadcast %5 : vector<1x1x8xf32> to vector<16x16x8xf32>
    %7 = arith.addf %4, %6 : vector<16x16x8xf32>
    %cst = arith.constant 0.000000e+00 : f32
    %8 = vector.broadcast %cst : f32 to vector<16x16x8xf32>
    %9 = arith.maximumf %7, %8 : vector<16x16x8xf32>
    %cst_9 = arith.constant 0.000000e+00 : f32
    %10 = vector.broadcast %cst_9 : f32 to vector<1x18x8xf32>
    %cst_10 = arith.constant 0.000000e+00 : f32
    %11 = vector.broadcast %cst_10 : f32 to vector<18x1x8xf32>
    %c0_11 = arith.constant 0 : index
    %c0_12 = arith.constant 0 : index
    %c0_13 = arith.constant 0 : index
    %12 = vector.load %arg9[%c0_11, %c0_12, %c0_13] : memref<18x18x8xf32, #tpu.memory_space<vmem>>, vector<1x18x8xf32>
    tpu.vector_store %arg9[%c0_11, %c0_12, %c0_13], %10 {strides = array<i32>} : memref<18x18x8xf32, #tpu.memory_space<vmem>>, vector<1x18x8xf32>,
    %c17 = arith.constant 17 : index
    %c0_14 = arith.constant 0 : index
    %c0_15 = arith.constant 0 : index
    %13 = vector.load %arg9[%c17, %c0_14, %c0_15] : memref<18x18x8xf32, #tpu.memory_space<vmem>>, vector<1x18x8xf32>
    tpu.vector_store %arg9[%c17, %c0_14, %c0_15], %10 {strides = array<i32>} : memref<18x18x8xf32, #tpu.memory_space<vmem>>, vector<1x18x8xf32>,
    %c0_16 = arith.constant 0 : index
    %c0_17 = arith.constant 0 : index
    %c0_18 = arith.constant 0 : index
    %14 = vector.load %arg9[%c0_16, %c0_17, %c0_18] : memref<18x18x8xf32, #tpu.memory_space<vmem>>, vector<18x1x8xf32>
    tpu.vector_store %arg9[%c0_16, %c0_17, %c0_18], %11 {strides = array<i32>} : memref<18x18x8xf32, #tpu.memory_space<vmem>>, vector<18x1x8xf32>,
    %c0_19 = arith.constant 0 : index
    %c17_20 = arith.constant 17 : index
    %c0_21 = arith.constant 0 : index
    %15 = vector.load %arg9[%c0_19, %c17_20, %c0_21] : memref<18x18x8xf32, #tpu.memory_space<vmem>>, vector<18x1x8xf32>
    tpu.vector_store %arg9[%c0_19, %c17_20, %c0_21], %11 {strides = array<i32>} : memref<18x18x8xf32, #tpu.memory_space<vmem>>, vector<18x1x8xf32>,
    %c1 = arith.constant 1 : index
    %c1_22 = arith.constant 1 : index
    %c0_23 = arith.constant 0 : index
    %16 = vector.load %arg9[%c1, %c1_22, %c0_23] : memref<18x18x8xf32, #tpu.memory_space<vmem>>, vector<16x16x8xf32>
    tpu.vector_store %arg9[%c1, %c1_22, %c0_23], %9 {strides = array<i32>} : memref<18x18x8xf32, #tpu.memory_space<vmem>>, vector<16x16x8xf32>,
    %c0_24 = arith.constant 0 : index
    %c0_25 = arith.constant 0 : index
    %c0_26 = arith.constant 0 : index
    %17 = vector.load %arg9[%c0_24, %c0_25, %c0_26] : memref<18x18x8xf32, #tpu.memory_space<vmem>>, vector<16x16x8xf32>
    %18 = vector.shape_cast %17 : vector<16x16x8xf32> to vector<256x8xf32>
    %c0_27 = arith.constant 0 : index
    %c1_28 = arith.constant 1 : index
    %c0_29 = arith.constant 0 : index
    %19 = vector.load %arg9[%c0_27, %c1_28, %c0_29] : memref<18x18x8xf32, #tpu.memory_space<vmem>>, vector<16x16x8xf32>
    %20 = vector.shape_cast %19 : vector<16x16x8xf32> to vector<256x8xf32>
    %c0_30 = arith.constant 0 : index
    %c2 = arith.constant 2 : index
    %c0_31 = arith.constant 0 : index
    %21 = vector.load %arg9[%c0_30, %c2, %c0_31] : memref<18x18x8xf32, #tpu.memory_space<vmem>>, vector<16x16x8xf32>
    %22 = vector.shape_cast %21 : vector<16x16x8xf32> to vector<256x8xf32>
    %c1_32 = arith.constant 1 : index
    %c0_33 = arith.constant 0 : index
    %c0_34 = arith.constant 0 : index
    %23 = vector.load %arg9[%c1_32, %c0_33, %c0_34] : memref<18x18x8xf32, #tpu.memory_space<vmem>>, vector<16x16x8xf32>
    %24 = vector.shape_cast %23 : vector<16x16x8xf32> to vector<256x8xf32>
    %c1_35 = arith.constant 1 : index
    %c1_36 = arith.constant 1 : index
    %c0_37 = arith.constant 0 : index
    %25 = vector.load %arg9[%c1_35, %c1_36, %c0_37] : memref<18x18x8xf32, #tpu.memory_space<vmem>>, vector<16x16x8xf32>
    %26 = vector.shape_cast %25 : vector<16x16x8xf32> to vector<256x8xf32>
    %c1_38 = arith.constant 1 : index
    %c2_39 = arith.constant 2 : index
    %c0_40 = arith.constant 0 : index
    %27 = vector.load %arg9[%c1_38, %c2_39, %c0_40] : memref<18x18x8xf32, #tpu.memory_space<vmem>>, vector<16x16x8xf32>
    %28 = vector.shape_cast %27 : vector<16x16x8xf32> to vector<256x8xf32>
    %c2_41 = arith.constant 2 : index
    %c0_42 = arith.constant 0 : index
    %c0_43 = arith.constant 0 : index
    %29 = vector.load %arg9[%c2_41, %c0_42, %c0_43] : memref<18x18x8xf32, #tpu.memory_space<vmem>>, vector<16x16x8xf32>
    %30 = vector.shape_cast %29 : vector<16x16x8xf32> to vector<256x8xf32>
    %c2_44 = arith.constant 2 : index
    %c1_45 = arith.constant 1 : index
    %c0_46 = arith.constant 0 : index
    %31 = vector.load %arg9[%c2_44, %c1_45, %c0_46] : memref<18x18x8xf32, #tpu.memory_space<vmem>>, vector<16x16x8xf32>
    %32 = vector.shape_cast %31 : vector<16x16x8xf32> to vector<256x8xf32>
    %c2_47 = arith.constant 2 : index
    %c2_48 = arith.constant 2 : index
    %c0_49 = arith.constant 0 : index
    %33 = vector.load %arg9[%c2_47, %c2_48, %c0_49] : memref<18x18x8xf32, #tpu.memory_space<vmem>>, vector<16x16x8xf32>
    %34 = vector.shape_cast %33 : vector<16x16x8xf32> to vector<256x8xf32>
    %35 = tpu.concatenate %18, %20, %22, %24, %26, %28, %30, %32, %34 in 1 : vector<256x8xf32>, vector<256x8xf32>, vector<256x8xf32>, vector<256x8xf32>, vector<256x8xf32>, vector<256x8xf32>, vector<256x8xf32>, vector<256x8xf32>, vector<256x8xf32> -> vector<256x72xf32>
    %c0_50 = arith.constant 0 : index
    %c0_51 = arith.constant 0 : index
    %36 = vector.load %arg4[%c0_50, %c0_51] : memref<72x8xf32, #tpu.memory_space<vmem>>, vector<72x8xf32>
    %cst_52 = arith.constant dense<0.000000e+00> : vector<256x8xf32>
    %37 = tpu.matmul %35, %36, %cst_52 {dimension_numbers = #tpu.dot_dimension_numbers<[1], [0], [0], [1], [0, 0, 1, 1], [], []>} : vector<256x72xf32>, vector<72x8xf32>, vector<256x8xf32> -> vector<256x8xf32>
    %c0_53 = arith.constant 0 : index
    %c0_54 = arith.constant 0 : index
    %38 = vector.load %arg5[%c0_53, %c0_54] : memref<1x8xf32, #tpu.memory_space<vmem>>, vector<1x8xf32>
    %39 = vector.broadcast %38 : vector<1x8xf32> to vector<256x8xf32>
    %40 = arith.addf %37, %39 : vector<256x8xf32>
    %41 = vector.shape_cast %40 : vector<256x8xf32> to vector<1x16x16x8xf32>
    %c0_55 = arith.constant 0 : index
    %c0_56 = arith.constant 0 : index
    %c0_57 = arith.constant 0 : index
    %c0_58 = arith.constant 0 : index
    %42 = vector.load %arg6[%c0_55, %c0_56, %c0_57, %c0_58] : memref<1x16x16x8xf32, #tpu.memory_space<vmem>>, vector<1x16x16x8xf32>
    tpu.vector_store %arg6[%c0_55, %c0_56, %c0_57, %c0_58], %41 {strides = array<i32>} : memref<1x16x16x8xf32, #tpu.memory_space<vmem>>, vector<1x16x16x8xf32>,
    %cst_59 = arith.constant dense<0.000000e+00> : vector<8xf32>
    %43 = vector.multi_reduction <add>, %40, %cst_59 [0] : vector<256x8xf32> to vector<8xf32>
    %44 = vector.shape_cast %43 : vector<8xf32> to vector<1x1x8xf32>
    %c0_60 = arith.constant 0 : index
    %c0_61 = arith.constant 0 : index
    %c0_62 = arith.constant 0 : index
    %45 = vector.load %arg7[%c0_60, %c0_61, %c0_62] : memref<1x1x8xf32, #tpu.memory_space<vmem>>, vector<1x1x8xf32>
    tpu.vector_store %arg7[%c0_60, %c0_61, %c0_62], %44 {strides = array<i32>} : memref<1x1x8xf32, #tpu.memory_space<vmem>>, vector<1x1x8xf32>,
    %46 = arith.mulf %40, %40 : vector<256x8xf32>
    %cst_63 = arith.constant dense<0.000000e+00> : vector<8xf32>
    %47 = vector.multi_reduction <add>, %46, %cst_63 [0] : vector<256x8xf32> to vector<8xf32>
    %48 = vector.shape_cast %47 : vector<8xf32> to vector<1x1x8xf32>
    %c0_64 = arith.constant 0 : index
    %c0_65 = arith.constant 0 : index
    %c0_66 = arith.constant 0 : index
    %49 = vector.load %arg8[%c0_64, %c0_65, %c0_66] : memref<1x1x8xf32, #tpu.memory_space<vmem>>, vector<1x1x8xf32>
    tpu.vector_store %arg8[%c0_64, %c0_65, %c0_66], %48 {strides = array<i32>} : memref<1x1x8xf32, #tpu.memory_space<vmem>>, vector<1x1x8xf32>,
    return
  }
  func.func @transform_0(%arg0: i32) -> (i32, i32, i32, i32) {
    %c0_i32 = arith.constant 0 : i32
    %c0_i32_0 = arith.constant 0 : i32
    %c0_i32_1 = arith.constant 0 : i32
    %c0_i32_2 = arith.constant 0 : i32
    return %arg0, %c0_i32, %c0_i32_0, %c0_i32_1 : i32, i32, i32, i32
  }
  func.func @transform_1(%arg0: i32) -> (i32, i32, i32) {
    %c0_i32 = arith.constant 0 : i32
    %c0_i32_0 = arith.constant 0 : i32
    %c0_i32_1 = arith.constant 0 : i32
    %c0_i32_2 = arith.constant 0 : i32
    return %c0_i32, %c0_i32_0, %c0_i32_1 : i32, i32, i32
  }
  func.func @transform_2(%arg0: i32) -> (i32, i32, i32) {
    %c0_i32 = arith.constant 0 : i32
    %c0_i32_0 = arith.constant 0 : i32
    %c0_i32_1 = arith.constant 0 : i32
    %c0_i32_2 = arith.constant 0 : i32
    return %c0_i32, %c0_i32_0, %c0_i32_1 : i32, i32, i32
  }
  func.func @transform_3(%arg0: i32) -> (i32, i32) {
    %c0_i32 = arith.constant 0 : i32
    %c0_i32_0 = arith.constant 0 : i32
    %c0_i32_1 = arith.constant 0 : i32
    return %c0_i32, %c0_i32_0 : i32, i32
  }
  func.func @transform_4(%arg0: i32) -> (i32, i32) {
    %c0_i32 = arith.constant 0 : i32
    %c0_i32_0 = arith.constant 0 : i32
    %c0_i32_1 = arith.constant 0 : i32
    return %c0_i32, %c0_i32_0 : i32, i32
  }
  func.func @transform_5(%arg0: i32) -> (i32, i32, i32, i32) {
    %c0_i32 = arith.constant 0 : i32
    %c0_i32_0 = arith.constant 0 : i32
    %c0_i32_1 = arith.constant 0 : i32
    %c0_i32_2 = arith.constant 0 : i32
    return %arg0, %c0_i32, %c0_i32_0, %c0_i32_1 : i32, i32, i32, i32
  }
  func.func @transform_6(%arg0: i32) -> (i32, i32, i32) {
    %c0_i32 = arith.constant 0 : i32
    %c0_i32_0 = arith.constant 0 : i32
    %c0_i32_1 = arith.constant 0 : i32
    return %arg0, %c0_i32, %c0_i32_0 : i32, i32, i32
  }
  func.func @transform_7(%arg0: i32) -> (i32, i32, i32) {
    %c0_i32 = arith.constant 0 : i32
    %c0_i32_0 = arith.constant 0 : i32
    %c0_i32_1 = arith.constant 0 : i32
    return %arg0, %c0_i32, %c0_i32_0 : i32, i32, i32
  }
}

</mosaic_0001>

<llo_original>
// kernel: vgg_block_forward.5
$region0: #{vgg_block_forward.5}
  #allocation0 [shape = 'u32[]', space=smem, size = 0x4, offset = 0x4, fixed_abs, tag = 'smem constant byte address 0x4 - core index']
  #allocation1 [shape = 'u32[72,128]{1,0:T(1,128)}', space=vmem, size = 0x9000, scoped, tag = 'internal scratch']
  %s0 = inlined_call_operand.vmem [shape: f32[2,16,16,8], index: 0, kind: input, shape index: {}]
  %s1 = inlined_call_operand.vmem [shape: f32[1,1,1,8], index: 1, kind: input, shape index: {}]
  %s2 = inlined_call_operand.vmem [shape: f32[1,1,1,8], index: 2, kind: input, shape index: {}]
  %s3 = inlined_call_operand.vmem [shape: f32[2,16,16,8], index: 3, kind: output, shape index: {}]
  %s4 = sld [smem:[#allocation0]]
  $region45: #{vgg_block_forward.5} parent=0
    _
  %s6 = ssub.s32 1, %s4
  %s7 = scalar_select 0, %s6, %s4
  loop: start=0, step=1, limit=4
  $region2: #{vgg_block_forward.5} parent=0 // loop_pre_header
    _
  $region3: #{vgg_block_forward.5} parent=0 // loop_header
    %s9 = sphi 0, %s13
    %p10 = scmp.ge.s32.totalorder %s9, 4
    %s19 = sphi 0, %s21
    %s22 = sphi 0, %s19
    %s23 = sphi 0, %s22
    %s39 = sphi 0, %s23
    %s43 = sphi 0, %s43
    %s45 = sphi 0, %s43
    %s46 = sphi 0, %s45
    %s60 = sphi 0, %s46
    %s64 = sphi 0, %s64
    %s66 = sphi 0, %s64
    %s67 = sphi 0, %s66
    %s81 = sphi 0, %s67
    %s87 = sphi 0, %s89
    %s90 = sphi 0, %s87
    %s91 = sphi 0, %s90
    %s107 = sphi 0, %s91
  $region4: #{vgg_block_forward.5} parent=0 // loop_header_branch
    %12 = sbr.rel (%p10) target = $region8
  $region5: #{vgg_block_forward.5} parent=0 // loop_body
    %s14 = ssub.s32 %s9, 1
    %s15 = ssub.s32 %s9, 2
    %s16 = sadd.s32 %s9, 1
    %s17 = ssub.s32 %s9, %s16
    %p18 = scmp.eq.s32.totalorder %s17, 0
    %s20 = sadd.s32 %s19, 1
    %s21 = scalar_select %p18, %s19, %s20
    %p24 = pneg %p18
    %p25 = scmp.eq.s32.totalorder %s9, 1
    %p26 = por %p24, %p25
    %p27 = scmp.ne.s32.totalorder %s19, %s22
    %p28 = scmp.eq.s32.totalorder %s9, 0
    %p29 = por %p27, %p28
    %p30 = scmp.ne.s32.totalorder %s19, %s22
    %p31 = scmp.eq.s32.totalorder %s14, 1
    %p32 = por %p30, %p31
    %p33 = scmp.ne.s32.totalorder %s22, %s23
    %p34 = scmp.eq.s32.totalorder %s14, 0
    %p35 = por %p33, %p34
    %p36 = scmp.ne.s32.totalorder %s22, %s23
    %p37 = scmp.eq.s32.totalorder %s15, 1
    %p38 = por %p36, %p37
    %p40 = scmp.ne.s32.totalorder %s23, %s39
    %p41 = scmp.eq.s32.totalorder %s15, 0
    %p42 = por %p40, %p41
    %s44 = sadd.s32 %s43, 1
    %p47 = scmp.eq.s32.totalorder %s9, 1
    %p48 = scmp.ne.s32.totalorder %s43, %s45
    %p49 = scmp.eq.s32.totalorder %s9, 0
    %p50 = por %p48, %p49
    %p51 = scmp.ne.s32.totalorder %s43, %s45
    %p52 = scmp.eq.s32.totalorder %s14, 1
    %p53 = por %p51, %p52
    %p54 = scmp.ne.s32.totalorder %s45, %s46
    %p55 = scmp.eq.s32.totalorder %s14, 0
    %p56 = por %p54, %p55
    %p57 = scmp.ne.s32.totalorder %s45, %s46
    %p58 = scmp.eq.s32.totalorder %s15, 1
    %p59 = por %p57, %p58
    %p61 = scmp.ne.s32.totalorder %s46, %s60
    %p62 = scmp.eq.s32.totalorder %s15, 0
    %p63 = por %p61, %p62
    %s65 = sadd.s32 %s64, 1
    %p68 = scmp.eq.s32.totalorder %s9, 1
    %p69 = scmp.ne.s32.totalorder %s64, %s66
    %p70 = scmp.eq.s32.totalorder %s9, 0
    %p71 = por %p69, %p70
    %p72 = scmp.ne.s32.totalorder %s64, %s66
    %p73 = scmp.eq.s32.totalorder %s14, 1
    %p74 = por %p72, %p73
    %p75 = scmp.ne.s32.totalorder %s66, %s67
    %p76 = scmp.eq.s32.totalorder %s14, 0
    %p77 = por %p75, %p76
    %p78 = scmp.ne.s32.totalorder %s66, %s67
    %p79 = scmp.eq.s32.totalorder %s15, 1
    %p80 = por %p78, %p79
    %p82 = scmp.ne.s32.totalorder %s67, %s81
    %p83 = scmp.eq.s32.totalorder %s15, 0
    %p84 = por %p82, %p83
    %s85 = ssub.s32 %s9, %s16
    %p86 = scmp.eq.s32.totalorder %s85, 0
    %s88 = sadd.s32 %s87, 1
    %s89 = scalar_select %p86, %s87, %s88
    %p92 = pneg %p86
    %p93 = scmp.eq.s32.totalorder %s9, 1
    %p94 = por %p92, %p93
    %p95 = scmp.ne.s32.totalorder %s87, %s90
    %p96 = scmp.eq.s32.totalorder %s9, 0
    %p97 = por %p95, %p96
    %p98 = scmp.ne.s32.totalorder %s87, %s90
    %p99 = scmp.eq.s32.totalorder %s14, 1
    %p100 = por %p98, %p99
    %p101 = scmp.ne.s32.totalorder %s90, %s91
    %p102 = scmp.eq.s32.totalorder %s14, 0
    %p103 = por %p101, %p102
    %p104 = scmp.ne.s32.totalorder %s90, %s91
    %p105 = scmp.eq.s32.totalorder %s15, 1
    %p106 = por %p104, %p105
    %p108 = scmp.ne.s32.totalorder %s91, %s107
    %p109 = scmp.eq.s32.totalorder %s15, 0
    %p110 = por %p108, %p109
    %p111 = scmp.le.s32.totalorder 1, %s9
    %p112 = scmp.lt.s32.totalorder %s9, 3
    %p113 = pnand %p111, %p112
    %p114 = pneg %p113
    // Predicated region
    $region9: #{vgg_block_forward.5} parent=5 // pred_check
      _
    $region10: #{vgg_block_forward.5} parent=5 // pred_check_branch
      %116 = sbr.rel (%p113) target = $region12
    $region11: #{vgg_block_forward.5} parent=5 // pred_region
      %s117 = ssub.s32 %s9, 1
      // Predicated region
      $region13: #{vgg_block_forward.5} parent=11 // pred_check
        %p118 = pneg %p56
      $region14: #{vgg_block_forward.5} parent=11 // pred_check_branch
        %120 = sbr.rel (%p118) target = $region16
      $region15: #{vgg_block_forward.5} parent=11 // pred_region
        _
      $region16: #{vgg_block_forward.5} parent=11 // pred_fallthru
        _
      // Predicated region
      $region17: #{vgg_block_forward.5} parent=11 // pred_check
        %p121 = pneg %p77
      $region18: #{vgg_block_forward.5} parent=11 // pred_check_branch
        %123 = sbr.rel (%p121) target = $region20
      $region19: #{vgg_block_forward.5} parent=11 // pred_region
        _
      $region20: #{vgg_block_forward.5} parent=11 // pred_fallthru
        _
    $region12: #{vgg_block_forward.5} parent=5 // pred_fallthru
      _
    %p124 = scmp.lt.s32.totalorder %s9, 2
    // Predicated region
    $region21: #{vgg_block_forward.5} parent=5 // pred_check
      %p125 = pneg %p124
    $region22: #{vgg_block_forward.5} parent=5 // pred_check_branch
      %127 = sbr.rel (%p125) target = $region24
    $region23: #{vgg_block_forward.5} parent=5 // pred_region
      // Predicated region
      $region25: #{vgg_block_forward.5} parent=23 // pred_check
        %p128 = pneg %p29
      $region26: #{vgg_block_forward.5} parent=23 // pred_check_branch
        %130 = sbr.rel (%p128) target = $region28
      $region27: #{vgg_block_forward.5} parent=23 // pred_region
        %p131 = scmp.lt.s32.totalorder %s9, 1
        %s132 = scalar_select %p131, %s9, 1
        %s133 = smul.addr %s132, 32
        %s134 = smul.addr %s133, 8
        %s135 = scalar_lea.vmem %s0, %s134
      $region28: #{vgg_block_forward.5} parent=23 // pred_fallthru
        _
    $region24: #{vgg_block_forward.5} parent=5 // pred_fallthru
      _
    %p136 = scmp.le.s32.totalorder 1, %s9
    %p137 = scmp.lt.s32.totalorder %s9, 3
    %p138 = pnand %p136, %p137
    %p139 = pneg %p138
    // Predicated region
    $region29: #{vgg_block_forward.5} parent=5 // pred_check
      _
    $region30: #{vgg_block_forward.5} parent=5 // pred_check_branch
      %141 = sbr.rel (%p138) target = $region32
    $region31: #{vgg_block_forward.5} parent=5 // pred_region
      %s142 = ssub.s32 %s9, 1
      %p143 = scmp.lt.s32.totalorder %s14, 1
      %s144 = scalar_select %p143, %s14, 1
      %s145 = smul.addr %s144, 32
      %s146 = smul.addr %s145, 8
      %s147 = scalar_lea.vmem %s0, %s146
      %p148 = pneg %p35
      %p149 = pneg %p32
      %p150 = pneg %p56
      %p151 = pneg %p53
      %p152 = pneg %p77
      %p153 = pneg %p74
      %p154 = pneg %p103
      %p155 = pneg %p100
      %p156 = scmp.lt.s32.totalorder %s14, 1
      %s157 = scalar_select %p156, %s14, 1
      %s158 = smul.addr %s157, 32
      %s159 = smul.addr %s158, 8
      %s160 = scalar_lea.vmem %s3, %s159
      %p161 = scmp.lt.s32.totalorder %s14, 1
      %s162 = scalar_select %p161, %s14, 1
      %s163 = smul.addr %s162, 32
      %s164 = smul.addr %s163, 8
      %s165 = scalar_lea.vmem %s0, %s164
      %p166 = scmp.lt.s32.totalorder %s14, 1
      %s167 = scalar_select %p166, %s14, 1
      %s168 = smul.addr %s167, 32
      %s169 = smul.addr %s168, 8
      %s170 = scalar_lea.vmem %s3, %s169
      %v171 = vld [vmem:[%s165] sm:$0xff]
      %v172 = vld [vmem:[%s165 + $0x8] sm:$0xff]
      %v173 = vld [vmem:[%s165 + $0x10] sm:$0xff]
      %v174 = vld [vmem:[%s165 + $0x18] sm:$0xff]
      %v175 = vld [vmem:[%s165 + $0x20] sm:$0xff]
      %v176 = vld [vmem:[%s165 + $0x28] sm:$0xff]
      %v177 = vld [vmem:[%s165 + $0x30] sm:$0xff]
      %v178 = vld [vmem:[%s165 + $0x38] sm:$0xff]
      %v179 = vld [vmem:[%s165 + $0x40] sm:$0xff]
      %v180 = vld [vmem:[%s165 + $0x48] sm:$0xff]
      %v181 = vld [vmem:[%s165 + $0x50] sm:$0xff]
      %v182 = vld [vmem:[%s165 + $0x58] sm:$0xff]
      %v183 = vld [vmem:[%s165 + $0x60] sm:$0xff]
      %v184 = vld [vmem:[%s165 + $0x68] sm:$0xff]
      %v185 = vld [vmem:[%s165 + $0x70] sm:$0xff]
      %v186 = vld [vmem:[%s165 + $0x78] sm:$0xff]
      %v187 = vld [vmem:[%s165 + $0x80] sm:$0xff]
      %v188 = vld [vmem:[%s165 + $0x88] sm:$0xff]
      %v189 = vld [vmem:[%s165 + $0x90] sm:$0xff]
      %v190 = vld [vmem:[%s165 + $0x98] sm:$0xff]
      %v191 = vld [vmem:[%s165 + $0xa0] sm:$0xff]
      %v192 = vld [vmem:[%s165 + $0xa8] sm:$0xff]
      %v193 = vld [vmem:[%s165 + $0xb0] sm:$0xff]
      %v194 = vld [vmem:[%s165 + $0xb8] sm:$0xff]
      %v195 = vld [vmem:[%s165 + $0xc0] sm:$0xff]
      %v196 = vld [vmem:[%s165 + $0xc8] sm:$0xff]
      %v197 = vld [vmem:[%s165 + $0xd0] sm:$0xff]
      %v198 = vld [vmem:[%s165 + $0xd8] sm:$0xff]
      %v199 = vld [vmem:[%s165 + $0xe0] sm:$0xff]
      %v200 = vld [vmem:[%s165 + $0xe8] sm:$0xff]
      %v201 = vld [vmem:[%s165 + $0xf0] sm:$0xff]
      %v202 = vld [vmem:[%s165 + $0xf8] sm:$0xff]
      %v203 = vld [vmem:[%s1] sm:$0x1]
      %v205 = vperm.slane %v203, 0
      %v207 = vmul.f32 %v171, %v205
      %v208 = vmul.f32 %v172, %v205
      %v209 = vmul.f32 %v173, %v205
      %v210 = vmul.f32 %v174, %v205
      %v211 = vmul.f32 %v175, %v205
      %v212 = vmul.f32 %v176, %v205
      %v213 = vmul.f32 %v177, %v205
      %v214 = vmul.f32 %v178, %v205
      %v215 = vmul.f32 %v179, %v205
      %v216 = vmul.f32 %v180, %v205
      %v217 = vmul.f32 %v181, %v205
      %v218 = vmul.f32 %v182, %v205
      %v219 = vmul.f32 %v183, %v205
      %v220 = vmul.f32 %v184, %v205
      %v221 = vmul.f32 %v185, %v205
      %v222 = vmul.f32 %v186, %v205
      %v223 = vmul.f32 %v187, %v205
      %v224 = vmul.f32 %v188, %v205
      %v225 = vmul.f32 %v189, %v205
      %v226 = vmul.f32 %v190, %v205
      %v227 = vmul.f32 %v191, %v205
      %v228 = vmul.f32 %v192, %v205
      %v229 = vmul.f32 %v193, %v205
      %v230 = vmul.f32 %v194, %v205
      %v231 = vmul.f32 %v195, %v205
      %v232 = vmul.f32 %v196, %v205
      %v233 = vmul.f32 %v197, %v205
      %v234 = vmul.f32 %v198, %v205
      %v235 = vmul.f32 %v199, %v205
      %v236 = vmul.f32 %v200, %v205
      %v237 = vmul.f32 %v201, %v205
      %v238 = vmul.f32 %v202, %v205
      %v239 = vld [vmem:[%s2] sm:$0x1]
      %v241 = vperm.slane %v239, 0
      %v243 = vadd.f32 %v207, %v241
      %v244 = vadd.f32 %v208, %v241
      %v245 = vadd.f32 %v209, %v241
      %v246 = vadd.f32 %v210, %v241
      %v247 = vadd.f32 %v211, %v241
      %v248 = vadd.f32 %v212, %v241
      %v249 = vadd.f32 %v213, %v241
      %v250 = vadd.f32 %v214, %v241
      %v251 = vadd.f32 %v215, %v241
      %v252 = vadd.f32 %v216, %v241
      %v253 = vadd.f32 %v217, %v241
      %v254 = vadd.f32 %v218, %v241
      %v255 = vadd.f32 %v219, %v241
      %v256 = vadd.f32 %v220, %v241
      %v257 = vadd.f32 %v221, %v241
      %v258 = vadd.f32 %v222, %v241
      %v259 = vadd.f32 %v223, %v241
      %v260 = vadd.f32 %v224, %v241
      %v261 = vadd.f32 %v225, %v241
      %v262 = vadd.f32 %v226, %v241
      %v263 = vadd.f32 %v227, %v241
      %v264 = vadd.f32 %v228, %v241
      %v265 = vadd.f32 %v229, %v241
      %v266 = vadd.f32 %v230, %v241
      %v267 = vadd.f32 %v231, %v241
      %v268 = vadd.f32 %v232, %v241
      %v269 = vadd.f32 %v233, %v241
      %v270 = vadd.f32 %v234, %v241
      %v271 = vadd.f32 %v235, %v241
      %v272 = vadd.f32 %v236, %v241
      %v273 = vadd.f32 %v237, %v241
      %v274 = vadd.f32 %v238, %v241
      %v275 = vmax.f32 %v243, 0.0
      %v276 = vmax.f32 %v244, 0.0
      %v277 = vmax.f32 %v245, 0.0
      %v278 = vmax.f32 %v246, 0.0
      %v279 = vmax.f32 %v247, 0.0
      %v280 = vmax.f32 %v248, 0.0
      %v281 = vmax.f32 %v249, 0.0
      %v282 = vmax.f32 %v250, 0.0
      %v283 = vmax.f32 %v251, 0.0
      %v284 = vmax.f32 %v252, 0.0
      %v285 = vmax.f32 %v253, 0.0
      %v286 = vmax.f32 %v254, 0.0
      %v287 = vmax.f32 %v255, 0.0
      %v288 = vmax.f32 %v256, 0.0
      %v289 = vmax.f32 %v257, 0.0
      %v290 = vmax.f32 %v258, 0.0
      %v291 = vmax.f32 %v259, 0.0
      %v292 = vmax.f32 %v260, 0.0
      %v293 = vmax.f32 %v261, 0.0
      %v294 = vmax.f32 %v262, 0.0
      %v295 = vmax.f32 %v263, 0.0
      %v296 = vmax.f32 %v264, 0.0
      %v297 = vmax.f32 %v265, 0.0
      %v298 = vmax.f32 %v266, 0.0
      %v299 = vmax.f32 %v267, 0.0
      %v300 = vmax.f32 %v268, 0.0
      %v301 = vmax.f32 %v269, 0.0
      %v302 = vmax.f32 %v270, 0.0
      %v303 = vmax.f32 %v271, 0.0
      %v304 = vmax.f32 %v272, 0.0
      %v305 = vmax.f32 %v273, 0.0
      %v306 = vmax.f32 %v274, 0.0
      %vm307 = vcmask 64512
      %308 = vst.msk [vmem:[%s170] sm:$0xff] %vm307, %v275
      %309 = vst.msk [vmem:[%s170 + $0x8] sm:$0xff] %vm307, %v276
      %310 = vst.msk [vmem:[%s170 + $0x10] sm:$0xff] %vm307, %v277
      %311 = vst.msk [vmem:[%s170 + $0x18] sm:$0xff] %vm307, %v278
      %312 = vst.msk [vmem:[%s170 + $0x20] sm:$0xff] %vm307, %v279
      %313 = vst.msk [vmem:[%s170 + $0x28] sm:$0xff] %vm307, %v280
      %314 = vst.msk [vmem:[%s170 + $0x30] sm:$0xff] %vm307, %v281
      %315 = vst.msk [vmem:[%s170 + $0x38] sm:$0xff] %vm307, %v282
      %316 = vst.msk [vmem:[%s170 + $0x40] sm:$0xff] %vm307, %v283
      %317 = vst.msk [vmem:[%s170 + $0x48] sm:$0xff] %vm307, %v284
      %318 = vst.msk [vmem:[%s170 + $0x50] sm:$0xff] %vm307, %v285
      %319 = vst.msk [vmem:[%s170 + $0x58] sm:$0xff] %vm307, %v286
      %320 = vst.msk [vmem:[%s170 + $0x60] sm:$0xff] %vm307, %v287
      %321 = vst.msk [vmem:[%s170 + $0x68] sm:$0xff] %vm307, %v288
      %322 = vst.msk [vmem:[%s170 + $0x70] sm:$0xff] %vm307, %v289
      %323 = vst.msk [vmem:[%s170 + $0x78] sm:$0xff] %vm307, %v290
      %324 = vst.msk [vmem:[%s170 + $0x80] sm:$0xff] %vm307, %v291
      %325 = vst.msk [vmem:[%s170 + $0x88] sm:$0xff] %vm307, %v292
      %326 = vst.msk [vmem:[%s170 + $0x90] sm:$0xff] %vm307, %v293
      %327 = vst.msk [vmem:[%s170 + $0x98] sm:$0xff] %vm307, %v294
      %328 = vst.msk [vmem:[%s170 + $0xa0] sm:$0xff] %vm307, %v295
      %329 = vst.msk [vmem:[%s170 + $0xa8] sm:$0xff] %vm307, %v296
      %330 = vst.msk [vmem:[%s170 + $0xb0] sm:$0xff] %vm307, %v297
      %331 = vst.msk [vmem:[%s170 + $0xb8] sm:$0xff] %vm307, %v298
      %332 = vst.msk [vmem:[%s170 + $0xc0] sm:$0xff] %vm307, %v299
      %333 = vst.msk [vmem:[%s170 + $0xc8] sm:$0xff] %vm307, %v300
      %334 = vst.msk [vmem:[%s170 + $0xd0] sm:$0xff] %vm307, %v301
      %335 = vst.msk [vmem:[%s170 + $0xd8] sm:$0xff] %vm307, %v302
      %336 = vst.msk [vmem:[%s170 + $0xe0] sm:$0xff] %vm307, %v303
      %337 = vst.msk [vmem:[%s170 + $0xe8] sm:$0xff] %vm307, %v304
      %338 = vst.msk [vmem:[%s170 + $0xf0] sm:$0xff] %vm307, %v305
      %339 = vst.msk [vmem:[%s170 + $0xf8] sm:$0xff] %vm307, %v306
      %p340 = scmp.lt.s32.totalorder %s14, 1
      %s341 = scalar_select %p340, %s14, 1
      %s342 = smul.addr %s341, 32
      %s343 = smul.addr %s342, 8
      %s344 = scalar_lea.vmem %s3, %s343
      // Predicated region
      $region33: #{vgg_block_forward.5} parent=31 // pred_check
        %p345 = pneg %p100
      $region34: #{vgg_block_forward.5} parent=31 // pred_check_branch
        %347 = sbr.rel (%p345) target = $region36
      $region35: #{vgg_block_forward.5} parent=31 // pred_region
        _
      $region36: #{vgg_block_forward.5} parent=31 // pred_fallthru
        _
    $region32: #{vgg_block_forward.5} parent=5 // pred_fallthru
      _
    %p348 = scmp.le.s32.totalorder 2, %s9
    // Predicated region
    $region37: #{vgg_block_forward.5} parent=5 // pred_check
      %p349 = pneg %p348
    $region38: #{vgg_block_forward.5} parent=5 // pred_check_branch
      %351 = sbr.rel (%p349) target = $region40
    $region39: #{vgg_block_forward.5} parent=5 // pred_region
      %s352 = ssub.s32 %s9, 2
      // Predicated region
      $region41: #{vgg_block_forward.5} parent=39 // pred_check
        %p353 = pneg %p106
      $region42: #{vgg_block_forward.5} parent=39 // pred_check_branch
        %355 = sbr.rel (%p353) target = $region44
      $region43: #{vgg_block_forward.5} parent=39 // pred_region
        %p356 = scmp.lt.s32.totalorder %s15, 1
        %s357 = scalar_select %p356, %s15, 1
        %s358 = smul.addr %s357, 32
        %s359 = smul.addr %s358, 8
        %s360 = scalar_lea.vmem %s3, %s359
      $region44: #{vgg_block_forward.5} parent=39 // pred_fallthru
        _
    $region40: #{vgg_block_forward.5} parent=5 // pred_fallthru
      _
  $region6: #{vgg_block_forward.5} parent=0 // loop_footer
    %s13 = sadd.s32 1, %s9
  $region7: #{vgg_block_forward.5} parent=0 // loop_footer_branch
    %8 = sbr.rel target = $region3
  $region8: #{vgg_block_forward.5} parent=0 // loop_exit
    _

// kernel: vgg_block_forward.3
$region0: #{vgg_block_forward.3}
  #allocation0 [shape = 'u32[]', space=smem, size = 0x4, offset = 0x4, fixed_abs, tag = 'smem constant byte address 0x4 - core index']
  #allocation1 [shape = 'u32[72,128]{1,0:T(1,128)}', space=vmem, size = 0x9000, scoped, tag = 'internal scratch']
  #allocation2 [shape = 'f32[18,18,4]{2,1,0:T(8,128)}', space=vmem, size = 0x36000, scoped, tag = 'scratch operand']
  %s0 = inlined_call_operand.vmem [shape: f32[2,16,16,4], index: 0, kind: input, shape index: {}]
  %s1 = inlined_call_operand.vmem [shape: f32[36,8], index: 1, kind: input, shape index: {}]
  %s2 = inlined_call_operand.vmem [shape: f32[1,8], index: 2, kind: input, shape index: {}]
  %s3 = inlined_call_operand.vmem [shape: f32[2,16,16,8], index: 3, kind: output, shape index: {0}]
  %s4 = inlined_call_operand.vmem [shape: f32[2,1,8], index: 4, kind: output, shape index: {1}]
  %s5 = inlined_call_operand.vmem [shape: f32[2,1,8], index: 5, kind: output, shape index: {2}]
  %6 = xla_tuple %s3, %s4, %s5
  %s7 = sld [smem:[#allocation0]]
  $region61: #{vgg_block_forward.3} parent=0
    _
  %s9 = ssub.s32 1, %s7
  %s10 = scalar_select 0, %s9, %s7
  loop: start=0, step=1, limit=4
  $region2: #{vgg_block_forward.3} parent=0 // loop_pre_header
    _
  $region3: #{vgg_block_forward.3} parent=0 // loop_header
    %s12 = sphi 0, %s16
    %p13 = scmp.ge.s32.totalorder %s12, 4
    %s22 = sphi 0, %s24
    %s25 = sphi 0, %s22
    %s26 = sphi 0, %s25
    %s42 = sphi 0, %s26
    %s46 = sphi 0, %s46
    %s48 = sphi 0, %s46
    %s49 = sphi 0, %s48
    %s63 = sphi 0, %s49
    %s67 = sphi 0, %s67
    %s69 = sphi 0, %s67
    %s70 = sphi 0, %s69
    %s84 = sphi 0, %s70
    %s90 = sphi 0, %s92
    %s93 = sphi 0, %s90
    %s94 = sphi 0, %s93
    %s110 = sphi 0, %s94
    %s116 = sphi 0, %s118
    %s119 = sphi 0, %s116
    %s120 = sphi 0, %s119
    %s136 = sphi 0, %s120
    %s142 = sphi 0, %s144
    %s145 = sphi 0, %s142
    %s146 = sphi 0, %s145
    %s162 = sphi 0, %s146
  $region4: #{vgg_block_forward.3} parent=0 // loop_header_branch
    %15 = sbr.rel (%p13) target = $region8
  $region5: #{vgg_block_forward.3} parent=0 // loop_body
    %s17 = ssub.s32 %s12, 1
    %s18 = ssub.s32 %s12, 2
    %s19 = sadd.s32 %s12, 1
    %s20 = ssub.s32 %s12, %s19
    %p21 = scmp.eq.s32.totalorder %s20, 0
    %s23 = sadd.s32 %s22, 1
    %s24 = scalar_select %p21, %s22, %s23
    %p27 = pneg %p21
    %p28 = scmp.eq.s32.totalorder %s12, 1
    %p29 = por %p27, %p28
    %p30 = scmp.ne.s32.totalorder %s22, %s25
    %p31 = scmp.eq.s32.totalorder %s12, 0
    %p32 = por %p30, %p31
    %p33 = scmp.ne.s32.totalorder %s22, %s25
    %p34 = scmp.eq.s32.totalorder %s17, 1
    %p35 = por %p33, %p34
    %p36 = scmp.ne.s32.totalorder %s25, %s26
    %p37 = scmp.eq.s32.totalorder %s17, 0
    %p38 = por %p36, %p37
    %p39 = scmp.ne.s32.totalorder %s25, %s26
    %p40 = scmp.eq.s32.totalorder %s18, 1
    %p41 = por %p39, %p40
    %p43 = scmp.ne.s32.totalorder %s26, %s42
    %p44 = scmp.eq.s32.totalorder %s18, 0
    %p45 = por %p43, %p44
    %s47 = sadd.s32 %s46, 1
    %p50 = scmp.eq.s32.totalorder %s12, 1
    %p51 = scmp.ne.s32.totalorder %s46, %s48
    %p52 = scmp.eq.s32.totalorder %s12, 0
    %p53 = por %p51, %p52
    %p54 = scmp.ne.s32.totalorder %s46, %s48
    %p55 = scmp.eq.s32.totalorder %s17, 1
    %p56 = por %p54, %p55
    %p57 = scmp.ne.s32.totalorder %s48, %s49
    %p58 = scmp.eq.s32.totalorder %s17, 0
    %p59 = por %p57, %p58
    %p60 = scmp.ne.s32.totalorder %s48, %s49
    %p61 = scmp.eq.s32.totalorder %s18, 1
    %p62 = por %p60, %p61
    %p64 = scmp.ne.s32.totalorder %s49, %s63
    %p65 = scmp.eq.s32.totalorder %s18, 0
    %p66 = por %p64, %p65
    %s68 = sadd.s32 %s67, 1
    %p71 = scmp.eq.s32.totalorder %s12, 1
    %p72 = scmp.ne.s32.totalorder %s67, %s69
    %p73 = scmp.eq.s32.totalorder %s12, 0
    %p74 = por %p72, %p73
    %p75 = scmp.ne.s32.totalorder %s67, %s69
    %p76 = scmp.eq.s32.totalorder %s17, 1
    %p77 = por %p75, %p76
    %p78 = scmp.ne.s32.totalorder %s69, %s70
    %p79 = scmp.eq.s32.totalorder %s17, 0
    %p80 = por %p78, %p79
    %p81 = scmp.ne.s32.totalorder %s69, %s70
    %p82 = scmp.eq.s32.totalorder %s18, 1
    %p83 = por %p81, %p82
    %p85 = scmp.ne.s32.totalorder %s70, %s84
    %p86 = scmp.eq.s32.totalorder %s18, 0
    %p87 = por %p85, %p86
    %s88 = ssub.s32 %s12, %s19
    %p89 = scmp.eq.s32.totalorder %s88, 0
    %s91 = sadd.s32 %s90, 1
    %s92 = scalar_select %p89, %s90, %s91
    %p95 = pneg %p89
    %p96 = scmp.eq.s32.totalorder %s12, 1
    %p97 = por %p95, %p96
    %p98 = scmp.ne.s32.totalorder %s90, %s93
    %p99 = scmp.eq.s32.totalorder %s12, 0
    %p100 = por %p98, %p99
    %p101 = scmp.ne.s32.totalorder %s90, %s93
    %p102 = scmp.eq.s32.totalorder %s17, 1
    %p103 = por %p101, %p102
    %p104 = scmp.ne.s32.totalorder %s93, %s94
    %p105 = scmp.eq.s32.totalorder %s17, 0
    %p106 = por %p104, %p105
    %p107 = scmp.ne.s32.totalorder %s93, %s94
    %p108 = scmp.eq.s32.totalorder %s18, 1
    %p109 = por %p107, %p108
    %p111 = scmp.ne.s32.totalorder %s94, %s110
    %p112 = scmp.eq.s32.totalorder %s18, 0
    %p113 = por %p111, %p112
    %s114 = ssub.s32 %s12, %s19
    %p115 = scmp.eq.s32.totalorder %s114, 0
    %s117 = sadd.s32 %s116, 1
    %s118 = scalar_select %p115, %s116, %s117
    %p121 = pneg %p115
    %p122 = scmp.eq.s32.totalorder %s12, 1
    %p123 = por %p121, %p122
    %p124 = scmp.ne.s32.totalorder %s116, %s119
    %p125 = scmp.eq.s32.totalorder %s12, 0
    %p126 = por %p124, %p125
    %p127 = scmp.ne.s32.totalorder %s116, %s119
    %p128 = scmp.eq.s32.totalorder %s17, 1
    %p129 = por %p127, %p128
    %p130 = scmp.ne.s32.totalorder %s119, %s120
    %p131 = scmp.eq.s32.totalorder %s17, 0
    %p132 = por %p130, %p131
    %p133 = scmp.ne.s32.totalorder %s119, %s120
    %p134 = scmp.eq.s32.totalorder %s18, 1
    %p135 = por %p133, %p134
    %p137 = scmp.ne.s32.totalorder %s120, %s136
    %p138 = scmp.eq.s32.totalorder %s18, 0
    %p139 = por %p137, %p138
    %s140 = ssub.s32 %s12, %s19
    %p141 = scmp.eq.s32.totalorder %s140, 0
    %s143 = sadd.s32 %s142, 1
    %s144 = scalar_select %p141, %s142, %s143
    %p147 = pneg %p141
    %p148 = scmp.eq.s32.totalorder %s12, 1
    %p149 = por %p147, %p148
    %p150 = scmp.ne.s32.totalorder %s142, %s145
    %p151 = scmp.eq.s32.totalorder %s12, 0
    %p152 = por %p150, %p151
    %p153 = scmp.ne.s32.totalorder %s142, %s145
    %p154 = scmp.eq.s32.totalorder %s17, 1
    %p155 = por %p153, %p154
    %p156 = scmp.ne.s32.totalorder %s145, %s146
    %p157 = scmp.eq.s32.totalorder %s17, 0
    %p158 = por %p156, %p157
    %p159 = scmp.ne.s32.totalorder %s145, %s146
    %p160 = scmp.eq.s32.totalorder %s18, 1
    %p161 = por %p159, %p160
    %p163 = scmp.ne.s32.totalorder %s146, %s162
    %p164 = scmp.eq.s32.totalorder %s18, 0
    %p165 = por %p163, %p164
    %p166 = scmp.le.s32.totalorder 1, %s12
    %p167 = scmp.lt.s32.totalorder %s12, 3
    %p168 = pnand %p166, %p167
    %p169 = pneg %p168
    // Predicated region
    $region9: #{vgg_block_forward.3} parent=5 // pred_check
      _
    $region10: #{vgg_block_forward.3} parent=5 // pred_check_branch
      %171 = sbr.rel (%p168) target = $region12
    $region11: #{vgg_block_forward.3} parent=5 // pred_region
      %s172 = ssub.s32 %s12, 1
      // Predicated region
      $region13: #{vgg_block_forward.3} parent=11 // pred_check
        %p173 = pneg %p59
      $region14: #{vgg_block_forward.3} parent=11 // pred_check_branch
        %175 = sbr.rel (%p173) target = $region16
      $region15: #{vgg_block_forward.3} parent=11 // pred_region
        _
      $region16: #{vgg_block_forward.3} parent=11 // pred_fallthru
        _
      // Predicated region
      $region17: #{vgg_block_forward.3} parent=11 // pred_check
        %p176 = pneg %p80
      $region18: #{vgg_block_forward.3} parent=11 // pred_check_branch
        %178 = sbr.rel (%p176) target = $region20
      $region19: #{vgg_block_forward.3} parent=11 // pred_region
        _
      $region20: #{vgg_block_forward.3} parent=11 // pred_fallthru
        _
    $region12: #{vgg_block_forward.3} parent=5 // pred_fallthru
      _
    %p179 = scmp.lt.s32.totalorder %s12, 2
    // Predicated region
    $region21: #{vgg_block_forward.3} parent=5 // pred_check
      %p180 = pneg %p179
    $region22: #{vgg_block_forward.3} parent=5 // pred_check_branch
      %182 = sbr.rel (%p180) target = $region24
    $region23: #{vgg_block_forward.3} parent=5 // pred_region
      // Predicated region
      $region25: #{vgg_block_forward.3} parent=23 // pred_check
        %p183 = pneg %p32
      $region26: #{vgg_block_forward.3} parent=23 // pred_check_branch
        %185 = sbr.rel (%p183) target = $region28
      $region27: #{vgg_block_forward.3} parent=23 // pred_region
        %p186 = scmp.lt.s32.totalorder %s12, 1
        %s187 = scalar_select %p186, %s12, 1
        %s188 = smul.addr %s187, 32
        %s189 = smul.addr %s188, 8
        %s190 = scalar_lea.vmem %s0, %s189
      $region28: #{vgg_block_forward.3} parent=23 // pred_fallthru
        _
    $region24: #{vgg_block_forward.3} parent=5 // pred_fallthru
      _
    %p191 = scmp.le.s32.totalorder 1, %s12
    %p192 = scmp.lt.s32.totalorder %s12, 3
    %p193 = pnand %p191, %p192
    %p194 = pneg %p193
    // Predicated region
    $region29: #{vgg_block_forward.3} parent=5 // pred_check
      _
    $region30: #{vgg_block_forward.3} parent=5 // pred_check_branch
      %196 = sbr.rel (%p193) target = $region32
    $region31: #{vgg_block_forward.3} parent=5 // pred_region
      %s197 = ssub.s32 %s12, 1
      %p198 = scmp.lt.s32.totalorder %s17, 1
      %s199 = scalar_select %p198, %s17, 1
      %s200 = smul.addr %s199, 32
      %s201 = smul.addr %s200, 8
      %s202 = scalar_lea.vmem %s0, %s201
      %p203 = pneg %p38
      %p204 = pneg %p35
      %p205 = pneg %p59
      %p206 = pneg %p56
      %p207 = pneg %p80
      %p208 = pneg %p77
      %p209 = pneg %p106
      %p210 = pneg %p103
      %p211 = scmp.lt.s32.totalorder %s17, 1
      %s212 = scalar_select %p211, %s17, 1
      %s213 = smul.addr %s212, 32
      %s214 = smul.addr %s213, 8
      %s215 = scalar_lea.vmem %s3, %s214
      %p216 = pneg %p132
      %p217 = pneg %p129
      %p218 = scmp.lt.s32.totalorder %s17, 1
      %s219 = scalar_select %p218, %s17, 1
      %s220 = scalar_lea.vmem %s4, %s219
      %p221 = pneg %p158
      %p222 = pneg %p155
      %p223 = scmp.lt.s32.totalorder %s17, 1
      %s224 = scalar_select %p223, %s17, 1
      %s225 = scalar_lea.vmem %s5, %s224
      %p226 = scmp.lt.s32.totalorder %s17, 1
      %s227 = scalar_select %p226, %s17, 1
      %s228 = smul.addr %s227, 32
      %s229 = smul.addr %s228, 8
      %s230 = scalar_lea.vmem %s0, %s229
      %p231 = scmp.lt.s32.totalorder %s17, 1
      %s232 = scalar_select %p231, %s17, 1
      %s233 = smul.addr %s232, 32
      %s234 = smul.addr %s233, 8
      %s235 = scalar_lea.vmem %s3, %s234
      %p236 = scmp.lt.s32.totalorder %s17, 1
      %s237 = scalar_select %p236, %s17, 1
      %s238 = scalar_lea.vmem %s4, %s237
      %p239 = scmp.lt.s32.totalorder %s17, 1
      %s240 = scalar_select %p239, %s17, 1
      %s241 = scalar_lea.vmem %s5, %s240
      %v242 = vld [vmem:[%s230] sm:$0xff]
      %v243 = vld [vmem:[%s230 + $0x8] sm:$0xff]
      %v244 = vld [vmem:[%s230 + $0x10] sm:$0xff]
      %v245 = vld [vmem:[%s230 + $0x18] sm:$0xff]
      %v246 = vld [vmem:[%s230 + $0x20] sm:$0xff]
      %v247 = vld [vmem:[%s230 + $0x28] sm:$0xff]
      %v248 = vld [vmem:[%s230 + $0x30] sm:$0xff]
      %v249 = vld [vmem:[%s230 + $0x38] sm:$0xff]
      %v250 = vld [vmem:[%s230 + $0x40] sm:$0xff]
      %v251 = vld [vmem:[%s230 + $0x48] sm:$0xff]
      %v252 = vld [vmem:[%s230 + $0x50] sm:$0xff]
      %v253 = vld [vmem:[%s230 + $0x58] sm:$0xff]
      %v254 = vld [vmem:[%s230 + $0x60] sm:$0xff]
      %v255 = vld [vmem:[%s230 + $0x68] sm:$0xff]
      %v256 = vld [vmem:[%s230 + $0x70] sm:$0xff]
      %v257 = vld [vmem:[%s230 + $0x78] sm:$0xff]
      %v258 = vld [vmem:[%s230 + $0x80] sm:$0xff]
      %v259 = vld [vmem:[%s230 + $0x88] sm:$0xff]
      %v260 = vld [vmem:[%s230 + $0x90] sm:$0xff]
      %v261 = vld [vmem:[%s230 + $0x98] sm:$0xff]
      %v262 = vld [vmem:[%s230 + $0xa0] sm:$0xff]
      %v263 = vld [vmem:[%s230 + $0xa8] sm:$0xff]
      %v264 = vld [vmem:[%s230 + $0xb0] sm:$0xff]
      %v265 = vld [vmem:[%s230 + $0xb8] sm:$0xff]
      %v266 = vld [vmem:[%s230 + $0xc0] sm:$0xff]
      %v267 = vld [vmem:[%s230 + $0xc8] sm:$0xff]
      %v268 = vld [vmem:[%s230 + $0xd0] sm:$0xff]
      %v269 = vld [vmem:[%s230 + $0xd8] sm:$0xff]
      %v270 = vld [vmem:[%s230 + $0xe0] sm:$0xff]
      %v271 = vld [vmem:[%s230 + $0xe8] sm:$0xff]
      %v272 = vld [vmem:[%s230 + $0xf0] sm:$0xff]
      %v273 = vld [vmem:[%s230 + $0xf8] sm:$0xff]
      %vm274 = vcmask 31744
      %275 = vst.msk [vmem:[#allocation2] sm:$0xff] %vm274, 0.0
      %276 = vst.msk [vmem:[#allocation2 + $0x8] sm:$0xff] %vm274, 0.0
      %vm277 = vcmask 25600
      %278 = vst.msk [vmem:[#allocation2 + $0x10] sm:$0x3] %vm277, 0.0
      %s279 = scalar_lea.vmem [#allocation2], 408
      %280 = vst.msk [vmem:[%s279] sm:$0xff] %vm274, 0.0
      %281 = vst.msk [vmem:[%s279 + $0x8] sm:$0xff] %vm274, 0.0
      %282 = vst.msk [vmem:[%s279 + $0x10] sm:$0x3] %vm277, 0.0
      %vm283 = vcmask 24576
      %284 = vst.msk [vmem:[#allocation2] sm:$0x1] %vm283, 0.0
      %285 = vst.msk [vmem:[#allocation2 + $0x18] sm:$0x1] %vm283, 0.0
      %286 = vst.msk [vmem:[#allocation2 + $0x30] sm:$0x1] %vm283, 0.0
      %287 = vst.msk [vmem:[#allocation2 + $0x48] sm:$0x1] %vm283, 0.0
      %288 = vst.msk [vmem:[#allocation2 + $0x60] sm:$0x1] %vm283, 0.0
      %289 = vst.msk [vmem:[#allocation2 + $0x78] sm:$0x1] %vm283, 0.0
      %290 = vst.msk [vmem:[#allocation2 + $0x90] sm:$0x1] %vm283, 0.0
      %291 = vst.msk [vmem:[#allocation2 + $0xa8] sm:$0x1] %vm283, 0.0
      %292 = vst.msk [vmem:[#allocation2 + $0xc0] sm:$0x1] %vm283, 0.0
      %293 = vst.msk [vmem:[#allocation2 + $0xd8] sm:$0x1] %vm283, 0.0
      %294 = vst.msk [vmem:[#allocation2 + $0xf0] sm:$0x1] %vm283, 0.0
      %295 = vst.msk [vmem:[#allocation2 + $0x108] sm:$0x1] %vm283, 0.0
      %296 = vst.msk [vmem:[#allocation2 + $0x120] sm:$0x1] %vm283, 0.0
      %297 = vst.msk [vmem:[#allocation2 + $0x138] sm:$0x1] %vm283, 0.0
      %298 = vst.msk [vmem:[#allocation2 + $0x150] sm:$0x1] %vm283, 0.0
      %299 = vst.msk [vmem:[#allocation2 + $0x168] sm:$0x1] %vm283, 0.0
      %300 = vst.msk [vmem:[#allocation2 + $0x180] sm:$0x1] %vm283, 0.0
      %301 = vst.msk [vmem:[#allocation2 + $0x198] sm:$0x1] %vm283, 0.0
      %302 = vst.msk [vmem:[#allocation2 + $0x11] sm:$0x1] %vm283, 0.0
      %303 = vst.msk [vmem:[#allocation2 + $0x29] sm:$0x1] %vm283, 0.0
      %304 = vst.msk [vmem:[#allocation2 + $0x41] sm:$0x1] %vm283, 0.0
      %305 = vst.msk [vmem:[#allocation2 + $0x59] sm:$0x1] %vm283, 0.0
      %306 = vst.msk [vmem:[#allocation2 + $0x71] sm:$0x1] %vm283, 0.0
      %307 = vst.msk [vmem:[#allocation2 + $0x89] sm:$0x1] %vm283, 0.0
      %308 = vst.msk [vmem:[#allocation2 + $0xa1] sm:$0x1] %vm283, 0.0
      %309 = vst.msk [vmem:[#allocation2 + $0xb9] sm:$0x1] %vm283, 0.0
      %310 = vst.msk [vmem:[#allocation2 + $0xd1] sm:$0x1] %vm283, 0.0
      %311 = vst.msk [vmem:[#allocation2 + $0xe9] sm:$0x1] %vm283, 0.0
      %312 = vst.msk [vmem:[#allocation2 + $0x101] sm:$0x1] %vm283, 0.0
      %313 = vst.msk [vmem:[#allocation2 + $0x119] sm:$0x1] %vm283, 0.0
      %314 = vst.msk [vmem:[#allocation2 + $0x131] sm:$0x1] %vm283, 0.0
      %315 = vst.msk [vmem:[#allocation2 + $0x149] sm:$0x1] %vm283, 0.0
      %316 = vst.msk [vmem:[#allocation2 + $0x161] sm:$0x1] %vm283, 0.0
      %317 = vst.msk [vmem:[#allocation2 + $0x179] sm:$0x1] %vm283, 0.0
      %318 = vst.msk [vmem:[#allocation2 + $0x191] sm:$0x1] %vm283, 0.0
      %319 = vst.msk [vmem:[#allocation2 + $0x1a9] sm:$0x1] %vm283, 0.0
      %s320 = scalar_lea.vmem [#allocation2], 24
      %321 = vst.msk [vmem:[%s320 + $0x1] sm:$0xff] %vm274, %v242
      %322 = vst.msk [vmem:[%s320 + $0x9] sm:$0xff] %vm274, %v243
      %323 = vst.msk [vmem:[%s320 + $0x19] sm:$0xff] %vm274, %v244
      %324 = vst.msk [vmem:[%s320 + $0x21] sm:$0xff] %vm274, %v245
      %325 = vst.msk [vmem:[%s320 + $0x31] sm:$0xff] %vm274, %v246
      %326 = vst.msk [vmem:[%s320 + $0x39] sm:$0xff] %vm274, %v247
      %327 = vst.msk [vmem:[%s320 + $0x49] sm:$0xff] %vm274, %v248
      %328 = vst.msk [vmem:[%s320 + $0x51] sm:$0xff] %vm274, %v249
      %329 = vst.msk [vmem:[%s320 + $0x61] sm:$0xff] %vm274, %v250
      %330 = vst.msk [vmem:[%s320 + $0x69] sm:$0xff] %vm274, %v251
      %331 = vst.msk [vmem:[%s320 + $0x79] sm:$0xff] %vm274, %v252
      %332 = vst.msk [vmem:[%s320 + $0x81] sm:$0xff] %vm274, %v253
      %333 = vst.msk [vmem:[%s320 + $0x91] sm:$0xff] %vm274, %v254
      %334 = vst.msk [vmem:[%s320 + $0x99] sm:$0xff] %vm274, %v255
      %335 = vst.msk [vmem:[%s320 + $0xa9] sm:$0xff] %vm274, %v256
      %336 = vst.msk [vmem:[%s320 + $0xb1] sm:$0xff] %vm274, %v257
      %337 = vst.msk [vmem:[%s320 + $0xc1] sm:$0xff] %vm274, %v258
      %338 = vst.msk [vmem:[%s320 + $0xc9] sm:$0xff] %vm274, %v259
      %339 = vst.msk [vmem:[%s320 + $0xd9] sm:$0xff] %vm274, %v260
      %340 = vst.msk [vmem:[%s320 + $0xe1] sm:$0xff] %vm274, %v261
      %341 = vst.msk [vmem:[%s320 + $0xf1] sm:$0xff] %vm274, %v262
      %342 = vst.msk [vmem:[%s320 + $0xf9] sm:$0xff] %vm274, %v263
      %343 = vst.msk [vmem:[%s320 + $0x109] sm:$0xff] %vm274, %v264
      %344 = vst.msk [vmem:[%s320 + $0x111] sm:$0xff] %vm274, %v265
      %345 = vst.msk [vmem:[%s320 + $0x121] sm:$0xff] %vm274, %v266
      %346 = vst.msk [vmem:[%s320 + $0x129] sm:$0xff] %vm274, %v267
      %347 = vst.msk [vmem:[%s320 + $0x139] sm:$0xff] %vm274, %v268
      %348 = vst.msk [vmem:[%s320 + $0x141] sm:$0xff] %vm274, %v269
      %349 = vst.msk [vmem:[%s320 + $0x151] sm:$0xff] %vm274, %v270
      %350 = vst.msk [vmem:[%s320 + $0x159] sm:$0xff] %vm274, %v271
      %351 = vst.msk [vmem:[%s320 + $0x169] sm:$0xff] %vm274, %v272
      %352 = vst.msk [vmem:[%s320 + $0x171] sm:$0xff] %vm274, %v273
      %v353 = vld [vmem:[#allocation2] sm:$0xff]
      %v354 = vld [vmem:[#allocation2 + $0x8] sm:$0xff]
      %v355 = vld [vmem:[#allocation2 + $0x18] sm:$0xff]
      %v356 = vld [vmem:[#allocation2 + $0x20] sm:$0xff]
      %v357 = vld [vmem:[#allocation2 + $0x30] sm:$0xff]
      %v358 = vld [vmem:[#allocation2 + $0x38] sm:$0xff]
      %v359 = vld [vmem:[#allocation2 + $0x48] sm:$0xff]
      %v360 = vld [vmem:[#allocation2 + $0x50] sm:$0xff]
      %v361 = vld [vmem:[#allocation2 + $0x60] sm:$0xff]
      %v362 = vld [vmem:[#allocation2 + $0x68] sm:$0xff]
      %v363 = vld [vmem:[#allocation2 + $0x78] sm:$0xff]
      %v364 = vld [vmem:[#allocation2 + $0x80] sm:$0xff]
      %v365 = vld [vmem:[#allocation2 + $0x90] sm:$0xff]
      %v366 = vld [vmem:[#allocation2 + $0x98] sm:$0xff]
      %v367 = vld [vmem:[#allocation2 + $0xa8] sm:$0xff]
      %v368 = vld [vmem:[#allocation2 + $0xb0] sm:$0xff]
      %v369 = vld [vmem:[#allocation2 + $0xc0] sm:$0xff]
      %v370 = vld [vmem:[#allocation2 + $0xc8] sm:$0xff]
      %v371 = vld [vmem:[#allocation2 + $0xd8] sm:$0xff]
      %v372 = vld [vmem:[#allocation2 + $0xe0] sm:$0xff]
      %v373 = vld [vmem:[#allocation2 + $0xf0] sm:$0xff]
      %v374 = vld [vmem:[#allocation2 + $0xf8] sm:$0xff]
      %v375 = vld [vmem:[#allocation2 + $0x108] sm:$0xff]
      %v376 = vld [vmem:[#allocation2 + $0x110] sm:$0xff]
      %v377 = vld [vmem:[#allocation2 + $0x120] sm:$0xff]
      %v378 = vld [vmem:[#allocation2 + $0x128] sm:$0xff]
      %v379 = vld [vmem:[#allocation2 + $0x138] sm:$0xff]
      %v380 = vld [vmem:[#allocation2 + $0x140] sm:$0xff]
      %v381 = vld [vmem:[#allocation2 + $0x150] sm:$0xff]
      %v382 = vld [vmem:[#allocation2 + $0x158] sm:$0xff]
      %v383 = vld [vmem:[#allocation2 + $0x168] sm:$0xff]
      %v384 = vld [vmem:[#allocation2 + $0x170] sm:$0xff]
      %v385 = vld [vmem:[#allocation2 + $0x1] sm:$0xff]
      %v386 = vld [vmem:[#allocation2 + $0x9] sm:$0xff]
      %v387 = vld [vmem:[#allocation2 + $0x19] sm:$0xff]
      %v388 = vld [vmem:[#allocation2 + $0x21] sm:$0xff]
      %v389 = vld [vmem:[#allocation2 + $0x31] sm:$0xff]
      %v390 = vld [vmem:[#allocation2 + $0x39] sm:$0xff]
      %v391 = vld [vmem:[#allocation2 + $0x49] sm:$0xff]
      %v392 = vld [vmem:[#allocation2 + $0x51] sm:$0xff]
      %v393 = vld [vmem:[#allocation2 + $0x61] sm:$0xff]
      %v394 = vld [vmem:[#allocation2 + $0x69] sm:$0xff]
      %v395 = vld [vmem:[#allocation2 + $0x79] sm:$0xff]
      %v396 = vld [vmem:[#allocation2 + $0x81] sm:$0xff]
      %v397 = vld [vmem:[#allocation2 + $0x91] sm:$0xff]
      %v398 = vld [vmem:[#allocation2 + $0x99] sm:$0xff]
      %v399 = vld [vmem:[#allocation2 + $0xa9] sm:$0xff]
      %v400 = vld [vmem:[#allocation2 + $0xb1] sm:$0xff]
      %v401 = vld [vmem:[#allocation2 + $0xc1] sm:$0xff]
      %v402 = vld [vmem:[#allocation2 + $0xc9] sm:$0xff]
      %v403 = vld [vmem:[#allocation2 + $0xd9] sm:$0xff]
      %v404 = vld [vmem:[#allocation2 + $0xe1] sm:$0xff]
      %v405 = vld [vmem:[#allocation2 + $0xf1] sm:$0xff]
      %v406 = vld [vmem:[#allocation2 + $0xf9] sm:$0xff]
      %v407 = vld [vmem:[#allocation2 + $0x109] sm:$0xff]
      %v408 = vld [vmem:[#allocation2 + $0x111] sm:$0xff]
      %v409 = vld [vmem:[#allocation2 + $0x121] sm:$0xff]
      %v410 = vld [vmem:[#allocation2 + $0x129] sm:$0xff]
      %v411 = vld [vmem:[#allocation2 + $0x139] sm:$0xff]
      %v412 = vld [vmem:[#allocation2 + $0x141] sm:$0xff]
      %v413 = vld [vmem:[#allocation2 + $0x151] sm:$0xff]
      %v414 = vld [vmem:[#allocation2 + $0x159] sm:$0xff]
      %v415 = vld [vmem:[#allocation2 + $0x169] sm:$0xff]
      %v416 = vld [vmem:[#allocation2 + $0x171] sm:$0xff]
      %v417 = vld [vmem:[#allocation2 + $0x2] sm:$0xff]
      %v418 = vld [vmem:[#allocation2 + $0xa] sm:$0xff]
      %v419 = vld [vmem:[#allocation2 + $0x1a] sm:$0xff]
      %v420 = vld [vmem:[#allocation2 + $0x22] sm:$0xff]
      %v421 = vld [vmem:[#allocation2 + $0x32] sm:$0xff]
      %v422 = vld [vmem:[#allocation2 + $0x3a] sm:$0xff]
      %v423 = vld [vmem:[#allocation2 + $0x4a] sm:$0xff]
      %v424 = vld [vmem:[#allocation2 + $0x52] sm:$0xff]
      %v425 = vld [vmem:[#allocation2 + $0x62] sm:$0xff]
      %v426 = vld [vmem:[#allocation2 + $0x6a] sm:$0xff]
      %v427 = vld [vmem:[#allocation2 + $0x7a] sm:$0xff]
      %v428 = vld [vmem:[#allocation2 + $0x82] sm:$0xff]
      %v429 = vld [vmem:[#allocation2 + $0x92] sm:$0xff]
      %v430 = vld [vmem:[#allocation2 + $0x9a] sm:$0xff]
      %v431 = vld [vmem:[#allocation2 + $0xaa] sm:$0xff]
      %v432 = vld [vmem:[#allocation2 + $0xb2] sm:$0xff]
      %v433 = vld [vmem:[#allocation2 + $0xc2] sm:$0xff]
      %v434 = vld [vmem:[#allocation2 + $0xca] sm:$0xff]
      %v435 = vld [vmem:[#allocation2 + $0xda] sm:$0xff]
      %v436 = vld [vmem:[#allocation2 + $0xe2] sm:$0xff]
      %v437 = vld [vmem:[#allocation2 + $0xf2] sm:$0xff]
      %v438 = vld [vmem:[#allocation2 + $0xfa] sm:$0xff]
      %v439 = vld [vmem:[#allocation2 + $0x10a] sm:$0xff]
      %v440 = vld [vmem:[#allocation2 + $0x112] sm:$0xff]
      %v441 = vld [vmem:[#allocation2 + $0x122] sm:$0xff]
      %v442 = vld [vmem:[#allocation2 + $0x12a] sm:$0xff]
      %v443 = vld [vmem:[#allocation2 + $0x13a] sm:$0xff]
      %v444 = vld [vmem:[#allocation2 + $0x142] sm:$0xff]
      %v445 = vld [vmem:[#allocation2 + $0x152] sm:$0xff]
      %v446 = vld [vmem:[#allocation2 + $0x15a] sm:$0xff]
      %v447 = vld [vmem:[#allocation2 + $0x16a] sm:$0xff]
      %v448 = vld [vmem:[#allocation2 + $0x172] sm:$0xff]
      %v449 = vld [vmem:[%s320] sm:$0xff]
      %v450 = vld [vmem:[%s320 + $0x8] sm:$0xff]
      %v451 = vld [vmem:[%s320 + $0x18] sm:$0xff]
      %v452 = vld [vmem:[%s320 + $0x20] sm:$0xff]
      %v453 = vld [vmem:[%s320 + $0x30] sm:$0xff]
      %v454 = vld [vmem:[%s320 + $0x38] sm:$0xff]
      %v455 = vld [vmem:[%s320 + $0x48] sm:$0xff]
      %v456 = vld [vmem:[%s320 + $0x50] sm:$0xff]
      %v457 = vld [vmem:[%s320 + $0x60] sm:$0xff]
      %v458 = vld [vmem:[%s320 + $0x68] sm:$0xff]
      %v459 = vld [vmem:[%s320 + $0x78] sm:$0xff]
      %v460 = vld [vmem:[%s320 + $0x80] sm:$0xff]
      %v461 = vld [vmem:[%s320 + $0x90] sm:$0xff]
      %v462 = vld [vmem:[%s320 + $0x98] sm:$0xff]
      %v463 = vld [vmem:[%s320 + $0xa8] sm:$0xff]
      %v464 = vld [vmem:[%s320 + $0xb0] sm:$0xff]
      %v465 = vld [vmem:[%s320 + $0xc0] sm:$0xff]
      %v466 = vld [vmem:[%s320 + $0xc8] sm:$0xff]
      %v467 = vld [vmem:[%s320 + $0xd8] sm:$0xff]
      %v468 = vld [vmem:[%s320 + $0xe0] sm:$0xff]
      %v469 = vld [vmem:[%s320 + $0xf0] sm:$0xff]
      %v470 = vld [vmem:[%s320 + $0xf8] sm:$0xff]
      %v471 = vld [vmem:[%s320 + $0x108] sm:$0xff]
      %v472 = vld [vmem:[%s320 + $0x110] sm:$0xff]
      %v473 = vld [vmem:[%s320 + $0x120] sm:$0xff]
      %v474 = vld [vmem:[%s320 + $0x128] sm:$0xff]
      %v475 = vld [vmem:[%s320 + $0x138] sm:$0xff]
      %v476 = vld [vmem:[%s320 + $0x140] sm:$0xff]
      %v477 = vld [vmem:[%s320 + $0x150] sm:$0xff]
      %v478 = vld [vmem:[%s320 + $0x158] sm:$0xff]
      %v479 = vld [vmem:[%s320 + $0x168] sm:$0xff]
      %v480 = vld [vmem:[%s320 + $0x170] sm:$0xff]
      %v481 = vld [vmem:[%s320 + $0x1] sm:$0xff]
      %v482 = vld [vmem:[%s320 + $0x9] sm:$0xff]
      %v483 = vld [vmem:[%s320 + $0x19] sm:$0xff]
      %v484 = vld [vmem:[%s320 + $0x21] sm:$0xff]
      %v485 = vld [vmem:[%s320 + $0x31] sm:$0xff]
      %v486 = vld [vmem:[%s320 + $0x39] sm:$0xff]
      %v487 = vld [vmem:[%s320 + $0x49] sm:$0xff]
      %v488 = vld [vmem:[%s320 + $0x51] sm:$0xff]
      %v489 = vld [vmem:[%s320 + $0x61] sm:$0xff]
      %v490 = vld [vmem:[%s320 + $0x69] sm:$0xff]
      %v491 = vld [vmem:[%s320 + $0x79] sm:$0xff]
      %v492 = vld [vmem:[%s320 + $0x81] sm:$0xff]
      %v493 = vld [vmem:[%s320 + $0x91] sm:$0xff]
      %v494 = vld [vmem:[%s320 + $0x99] sm:$0xff]
      %v495 = vld [vmem:[%s320 + $0xa9] sm:$0xff]
      %v496 = vld [vmem:[%s320 + $0xb1] sm:$0xff]
      %v497 = vld [vmem:[%s320 + $0xc1] sm:$0xff]
      %v498 = vld [vmem:[%s320 + $0xc9] sm:$0xff]
      %v499 = vld [vmem:[%s320 + $0xd9] sm:$0xff]
      %v500 = vld [vmem:[%s320 + $0xe1] sm:$0xff]
      %v501 = vld [vmem:[%s320 + $0xf1] sm:$0xff]
      %v502 = vld [vmem:[%s320 + $0xf9] sm:$0xff]
      %v503 = vld [vmem:[%s320 + $0x109] sm:$0xff]
      %v504 = vld [vmem:[%s320 + $0x111] sm:$0xff]
      %v505 = vld [vmem:[%s320 + $0x121] sm:$0xff]
      %v506 = vld [vmem:[%s320 + $0x129] sm:$0xff]
      %v507 = vld [vmem:[%s320 + $0x139] sm:$0xff]
      %v508 = vld [vmem:[%s320 + $0x141] sm:$0xff]
      %v509 = vld [vmem:[%s320 + $0x151] sm:$0xff]
      %v510 = vld [vmem:[%s320 + $0x159] sm:$0xff]
      %v511 = vld [vmem:[%s320 + $0x169] sm:$0xff]
      %v512 = vld [vmem:[%s320 + $0x171] sm:$0xff]
      %v513 = vld [vmem:[%s320 + $0x2] sm:$0xff]
      %v514 = vld [vmem:[%s320 + $0xa] sm:$0xff]
      %v515 = vld [vmem:[%s320 + $0x1a] sm:$0xff]
      %v516 = vld [vmem:[%s320 + $0x22] sm:$0xff]
      %v517 = vld [vmem:[%s320 + $0x32] sm:$0xff]
      %v518 = vld [vmem:[%s320 + $0x3a] sm:$0xff]
      %v519 = vld [vmem:[%s320 + $0x4a] sm:$0xff]
      %v520 = vld [vmem:[%s320 + $0x52] sm:$0xff]
      %v521 = vld [vmem:[%s320 + $0x62] sm:$0xff]
      %v522 = vld [vmem:[%s320 + $0x6a] sm:$0xff]
      %v523 = vld [vmem:[%s320 + $0x7a] sm:$0xff]
      %v524 = vld [vmem:[%s320 + $0x82] sm:$0xff]
      %v525 = vld [vmem:[%s320 + $0x92] sm:$0xff]
      %v526 = vld [vmem:[%s320 + $0x9a] sm:$0xff]
      %v527 = vld [vmem:[%s320 + $0xaa] sm:$0xff]
      %v528 = vld [vmem:[%s320 + $0xb2] sm:$0xff]
      %v529 = vld [vmem:[%s320 + $0xc2] sm:$0xff]
      %v530 = vld [vmem:[%s320 + $0xca] sm:$0xff]
      %v531 = vld [vmem:[%s320 + $0xda] sm:$0xff]
      %v532 = vld [vmem:[%s320 + $0xe2] sm:$0xff]
      %v533 = vld [vmem:[%s320 + $0xf2] sm:$0xff]
      %v534 = vld [vmem:[%s320 + $0xfa] sm:$0xff]
      %v535 = vld [vmem:[%s320 + $0x10a] sm:$0xff]
      %v536 = vld [vmem:[%s320 + $0x112] sm:$0xff]
      %v537 = vld [vmem:[%s320 + $0x122] sm:$0xff]
      %v538 = vld [vmem:[%s320 + $0x12a] sm:$0xff]
      %v539 = vld [vmem:[%s320 + $0x13a] sm:$0xff]
      %v540 = vld [vmem:[%s320 + $0x142] sm:$0xff]
      %v541 = vld [vmem:[%s320 + $0x152] sm:$0xff]
      %v542 = vld [vmem:[%s320 + $0x15a] sm:$0xff]
      %v543 = vld [vmem:[%s320 + $0x16a] sm:$0xff]
      %v544 = vld [vmem:[%s320 + $0x172] sm:$0xff]
      %s545 = scalar_lea.vmem [#allocation2], 48
      %v546 = vld [vmem:[%s545] sm:$0xff]
      %v547 = vld [vmem:[%s545 + $0x8] sm:$0xff]
      %v548 = vld [vmem:[%s545 + $0x18] sm:$0xff]
      %v549 = vld [vmem:[%s545 + $0x20] sm:$0xff]
      %v550 = vld [vmem:[%s545 + $0x30] sm:$0xff]
      %v551 = vld [vmem:[%s545 + $0x38] sm:$0xff]
      %v552 = vld [vmem:[%s545 + $0x48] sm:$0xff]
      %v553 = vld [vmem:[%s545 + $0x50] sm:$0xff]
      %v554 = vld [vmem:[%s545 + $0x60] sm:$0xff]
      %v555 = vld [vmem:[%s545 + $0x68] sm:$0xff]
      %v556 = vld [vmem:[%s545 + $0x78] sm:$0xff]
      %v557 = vld [vmem:[%s545 + $0x80] sm:$0xff]
      %v558 = vld [vmem:[%s545 + $0x90] sm:$0xff]
      %v559 = vld [vmem:[%s545 + $0x98] sm:$0xff]
      %v560 = vld [vmem:[%s545 + $0xa8] sm:$0xff]
      %v561 = vld [vmem:[%s545 + $0xb0] sm:$0xff]
      %v562 = vld [vmem:[%s545 + $0xc0] sm:$0xff]
      %v563 = vld [vmem:[%s545 + $0xc8] sm:$0xff]
      %v564 = vld [vmem:[%s545 + $0xd8] sm:$0xff]
      %v565 = vld [vmem:[%s545 + $0xe0] sm:$0xff]
      %v566 = vld [vmem:[%s545 + $0xf0] sm:$0xff]
      %v567 = vld [vmem:[%s545 + $0xf8] sm:$0xff]
      %v568 = vld [vmem:[%s545 + $0x108] sm:$0xff]
      %v569 = vld [vmem:[%s545 + $0x110] sm:$0xff]
      %v570 = vld [vmem:[%s545 + $0x120] sm:$0xff]
      %v571 = vld [vmem:[%s545 + $0x128] sm:$0xff]
      %v572 = vld [vmem:[%s545 + $0x138] sm:$0xff]
      %v573 = vld [vmem:[%s545 + $0x140] sm:$0xff]
      %v574 = vld [vmem:[%s545 + $0x150] sm:$0xff]
      %v575 = vld [vmem:[%s545 + $0x158] sm:$0xff]
      %v576 = vld [vmem:[%s545 + $0x168] sm:$0xff]
      %v577 = vld [vmem:[%s545 + $0x170] sm:$0xff]
      %v578 = vld [vmem:[%s545 + $0x1] sm:$0xff]
      %v579 = vld [vmem:[%s545 + $0x9] sm:$0xff]
      %v580 = vld [vmem:[%s545 + $0x19] sm:$0xff]
      %v581 = vld [vmem:[%s545 + $0x21] sm:$0xff]
      %v582 = vld [vmem:[%s545 + $0x31] sm:$0xff]
      %v583 = vld [vmem:[%s545 + $0x39] sm:$0xff]
      %v584 = vld [vmem:[%s545 + $0x49] sm:$0xff]
      %v585 = vld [vmem:[%s545 + $0x51] sm:$0xff]
      %v586 = vld [vmem:[%s545 + $0x61] sm:$0xff]
      %v587 = vld [vmem:[%s545 + $0x69] sm:$0xff]
      %v588 = vld [vmem:[%s545 + $0x79] sm:$0xff]
      %v589 = vld [vmem:[%s545 + $0x81] sm:$0xff]
      %v590 = vld [vmem:[%s545 + $0x91] sm:$0xff]
      %v591 = vld [vmem:[%s545 + $0x99] sm:$0xff]
      %v592 = vld [vmem:[%s545 + $0xa9] sm:$0xff]
      %v593 = vld [vmem:[%s545 + $0xb1] sm:$0xff]
      %v594 = vld [vmem:[%s545 + $0xc1] sm:$0xff]
      %v595 = vld [vmem:[%s545 + $0xc9] sm:$0xff]
      %v596 = vld [vmem:[%s545 + $0xd9] sm:$0xff]
      %v597 = vld [vmem:[%s545 + $0xe1] sm:$0xff]
      %v598 = vld [vmem:[%s545 + $0xf1] sm:$0xff]
      %v599 = vld [vmem:[%s545 + $0xf9] sm:$0xff]
      %v600 = vld [vmem:[%s545 + $0x109] sm:$0xff]
      %v601 = vld [vmem:[%s545 + $0x111] sm:$0xff]
      %v602 = vld [vmem:[%s545 + $0x121] sm:$0xff]
      %v603 = vld [vmem:[%s545 + $0x129] sm:$0xff]
      %v604 = vld [vmem:[%s545 + $0x139] sm:$0xff]
      %v605 = vld [vmem:[%s545 + $0x141] sm:$0xff]
      %v606 = vld [vmem:[%s545 + $0x151] sm:$0xff]
      %v607 = vld [vmem:[%s545 + $0x159] sm:$0xff]
      %v608 = vld [vmem:[%s545 + $0x169] sm:$0xff]
      %v609 = vld [vmem:[%s545 + $0x171] sm:$0xff]
      %v610 = vld [vmem:[%s545 + $0x2] sm:$0xff]
      %v611 = vld [vmem:[%s545 + $0xa] sm:$0xff]
      %v612 = vld [vmem:[%s545 + $0x1a] sm:$0xff]
      %v613 = vld [vmem:[%s545 + $0x22] sm:$0xff]
      %v614 = vld [vmem:[%s545 + $0x32] sm:$0xff]
      %v615 = vld [vmem:[%s545 + $0x3a] sm:$0xff]
      %v616 = vld [vmem:[%s545 + $0x4a] sm:$0xff]
      %v617 = vld [vmem:[%s545 + $0x52] sm:$0xff]
      %v618 = vld [vmem:[%s545 + $0x62] sm:$0xff]
      %v619 = vld [vmem:[%s545 + $0x6a] sm:$0xff]
      %v620 = vld [vmem:[%s545 + $0x7a] sm:$0xff]
      %v621 = vld [vmem:[%s545 + $0x82] sm:$0xff]
      %v622 = vld [vmem:[%s545 + $0x92] sm:$0xff]
      %v623 = vld [vmem:[%s545 + $0x9a] sm:$0xff]
      %v624 = vld [vmem:[%s545 + $0xaa] sm:$0xff]
      %v625 = vld [vmem:[%s545 + $0xb2] sm:$0xff]
      %v626 = vld [vmem:[%s545 + $0xc2] sm:$0xff]
      %v627 = vld [vmem:[%s545 + $0xca] sm:$0xff]
      %v628 = vld [vmem:[%s545 + $0xda] sm:$0xff]
      %v629 = vld [vmem:[%s545 + $0xe2] sm:$0xff]
      %v630 = vld [vmem:[%s545 + $0xf2] sm:$0xff]
      %v631 = vld [vmem:[%s545 + $0xfa] sm:$0xff]
      %v632 = vld [vmem:[%s545 + $0x10a] sm:$0xff]
      %v633 = vld [vmem:[%s545 + $0x112] sm:$0xff]
      %v634 = vld [vmem:[%s545 + $0x122] sm:$0xff]
      %v635 = vld [vmem:[%s545 + $0x12a] sm:$0xff]
      %v636 = vld [vmem:[%s545 + $0x13a] sm:$0xff]
      %v637 = vld [vmem:[%s545 + $0x142] sm:$0xff]
      %v638 = vld [vmem:[%s545 + $0x152] sm:$0xff]
      %v639 = vld [vmem:[%s545 + $0x15a] sm:$0xff]
      %v640 = vld [vmem:[%s545 + $0x16a] sm:$0xff]
      %v641 = vld [vmem:[%s545 + $0x172] sm:$0xff]
      %674 = vrot.lane.b32.xlu0 %v385, 4
      %v675 = vpop.permute.xlu0 %674
      %676 = vrot.lane.b32.xlu0 %v386, 4
      %v677 = vpop.permute.xlu0 %676
      %678 = vrot.lane.b32.xlu0 %v387, 4
      %v679 = vpop.permute.xlu0 %678
      %680 = vrot.lane.b32.xlu0 %v388, 4
      %v681 = vpop.permute.xlu0 %680
      %682 = vrot.lane.b32.xlu0 %v389, 4
      %v683 = vpop.permute.xlu0 %682
      %684 = vrot.lane.b32.xlu0 %v390, 4
      %v685 = vpop.permute.xlu0 %684
      %686 = vrot.lane.b32.xlu0 %v391, 4
      %v687 = vpop.permute.xlu0 %686
      %688 = vrot.lane.b32.xlu0 %v392, 4
      %v689 = vpop.permute.xlu0 %688
      %690 = vrot.lane.b32.xlu0 %v393, 4
      %v691 = vpop.permute.xlu0 %690
      %692 = vrot.lane.b32.xlu0 %v394, 4
      %v693 = vpop.permute.xlu0 %692
      %694 = vrot.lane.b32.xlu0 %v395, 4
      %v695 = vpop.permute.xlu0 %694
      %696 = vrot.lane.b32.xlu0 %v396, 4
      %v697 = vpop.permute.xlu0 %696
      %698 = vrot.lane.b32.xlu0 %v397, 4
      %v699 = vpop.permute.xlu0 %698
      %700 = vrot.lane.b32.xlu0 %v398, 4
      %v701 = vpop.permute.xlu0 %700
      %702 = vrot.lane.b32.xlu0 %v399, 4
      %v703 = vpop.permute.xlu0 %702
      %704 = vrot.lane.b32.xlu0 %v400, 4
      %v705 = vpop.permute.xlu0 %704
      %706 = vrot.lane.b32.xlu0 %v401, 4
      %v707 = vpop.permute.xlu0 %706
      %708 = vrot.lane.b32.xlu0 %v402, 4
      %v709 = vpop.permute.xlu0 %708
      %710 = vrot.lane.b32.xlu0 %v403, 4
      %v711 = vpop.permute.xlu0 %710
      %712 = vrot.lane.b32.xlu0 %v404, 4
      %v713 = vpop.permute.xlu0 %712
      %714 = vrot.lane.b32.xlu0 %v405, 4
      %v715 = vpop.permute.xlu0 %714
      %716 = vrot.lane.b32.xlu0 %v406, 4
      %v717 = vpop.permute.xlu0 %716
      %718 = vrot.lane.b32.xlu0 %v407, 4
      %v719 = vpop.permute.xlu0 %718
      %720 = vrot.lane.b32.xlu0 %v408, 4
      %v721 = vpop.permute.xlu0 %720
      %722 = vrot.lane.b32.xlu0 %v409, 4
      %v723 = vpop.permute.xlu0 %722
      %724 = vrot.lane.b32.xlu0 %v410, 4
      %v725 = vpop.permute.xlu0 %724
      %726 = vrot.lane.b32.xlu0 %v411, 4
      %v727 = vpop.permute.xlu0 %726
      %728 = vrot.lane.b32.xlu0 %v412, 4
      %v729 = vpop.permute.xlu0 %728
      %730 = vrot.lane.b32.xlu0 %v413, 4
      %v731 = vpop.permute.xlu0 %730
      %732 = vrot.lane.b32.xlu0 %v414, 4
      %v733 = vpop.permute.xlu0 %732
      %734 = vrot.lane.b32.xlu0 %v415, 4
      %v735 = vpop.permute.xlu0 %734
      %736 = vrot.lane.b32.xlu0 %v416, 4
      %v737 = vpop.permute.xlu0 %736
      %802 = vrot.lane.b32.xlu0 %v417, 8
      %v803 = vpop.permute.xlu0 %802
      %804 = vrot.lane.b32.xlu0 %v418, 8
      %v805 = vpop.permute.xlu0 %804
      %806 = vrot.lane.b32.xlu0 %v419, 8
      %v807 = vpop.permute.xlu0 %806
      %808 = vrot.lane.b32.xlu0 %v420, 8
      %v809 = vpop.permute.xlu0 %808
      %810 = vrot.lane.b32.xlu0 %v421, 8
      %v811 = vpop.permute.xlu0 %810
      %812 = vrot.lane.b32.xlu0 %v422, 8
      %v813 = vpop.permute.xlu0 %812
      %814 = vrot.lane.b32.xlu0 %v423, 8
      %v815 = vpop.permute.xlu0 %814
      %816 = vrot.lane.b32.xlu0 %v424, 8
      %v817 = vpop.permute.xlu0 %816
      %818 = vrot.lane.b32.xlu0 %v425, 8
      %v819 = vpop.permute.xlu0 %818
      %820 = vrot.lane.b32.xlu0 %v426, 8
      %v821 = vpop.permute.xlu0 %820
      %822 = vrot.lane.b32.xlu0 %v427, 8
      %v823 = vpop.permute.xlu0 %822
      %824 = vrot.lane.b32.xlu0 %v428, 8
      %v825 = vpop.permute.xlu0 %824
      %826 = vrot.lane.b32.xlu0 %v429, 8
      %v827 = vpop.permute.xlu0 %826
      %828 = vrot.lane.b32.xlu0 %v430, 8
      %v829 = vpop.permute.xlu0 %828
      %830 = vrot.lane.b32.xlu0 %v431, 8
      %v831 = vpop.permute.xlu0 %830
      %832 = vrot.lane.b32.xlu0 %v432, 8
      %v833 = vpop.permute.xlu0 %832
      %834 = vrot.lane.b32.xlu0 %v433, 8
      %v835 = vpop.permute.xlu0 %834
      %836 = vrot.lane.b32.xlu0 %v434, 8
      %v837 = vpop.permute.xlu0 %836
      %838 = vrot.lane.b32.xlu0 %v435, 8
      %v839 = vpop.permute.xlu0 %838
      %840 = vrot.lane.b32.xlu0 %v436, 8
      %v841 = vpop.permute.xlu0 %840
      %842 = vrot.lane.b32.xlu0 %v437, 8
      %v843 = vpop.permute.xlu0 %842
      %844 = vrot.lane.b32.xlu0 %v438, 8
      %v845 = vpop.permute.xlu0 %844
      %846 = vrot.lane.b32.xlu0 %v439, 8
      %v847 = vpop.permute.xlu0 %846
      %848 = vrot.lane.b32.xlu0 %v440, 8
      %v849 = vpop.permute.xlu0 %848
      %850 = vrot.lane.b32.xlu0 %v441, 8
      %v851 = vpop.permute.xlu0 %850
      %852 = vrot.lane.b32.xlu0 %v442, 8
      %v853 = vpop.permute.xlu0 %852
      %854 = vrot.lane.b32.xlu0 %v443, 8
      %v855 = vpop.permute.xlu0 %854
      %856 = vrot.lane.b32.xlu0 %v444, 8
      %v857 = vpop.permute.xlu0 %856
      %858 = vrot.lane.b32.xlu0 %v445, 8
      %v859 = vpop.permute.xlu0 %858
      %860 = vrot.lane.b32.xlu0 %v446, 8
      %v861 = vpop.permute.xlu0 %860
      %862 = vrot.lane.b32.xlu0 %v447, 8
      %v863 = vpop.permute.xlu0 %862
      %864 = vrot.lane.b32.xlu0 %v448, 8
      %v865 = vpop.permute.xlu0 %864
      %930 = vrot.lane.b32.xlu0 %v449, 12
      %v931 = vpop.permute.xlu0 %930
      %932 = vrot.lane.b32.xlu0 %v450, 12
      %v933 = vpop.permute.xlu0 %932
      %934 = vrot.lane.b32.xlu0 %v451, 12
      %v935 = vpop.permute.xlu0 %934
      %936 = vrot.lane.b32.xlu0 %v452, 12
      %v937 = vpop.permute.xlu0 %936
      %938 = vrot.lane.b32.xlu0 %v453, 12
      %v939 = vpop.permute.xlu0 %938
      %940 = vrot.lane.b32.xlu0 %v454, 12
      %v941 = vpop.permute.xlu0 %940
      %942 = vrot.lane.b32.xlu0 %v455, 12
      %v943 = vpop.permute.xlu0 %942
      %944 = vrot.lane.b32.xlu0 %v456, 12
      %v945 = vpop.permute.xlu0 %944
      %946 = vrot.lane.b32.xlu0 %v457, 12
      %v947 = vpop.permute.xlu0 %946
      %948 = vrot.lane.b32.xlu0 %v458, 12
      %v949 = vpop.permute.xlu0 %948
      %950 = vrot.lane.b32.xlu0 %v459, 12
      %v951 = vpop.permute.xlu0 %950
      %952 = vrot.lane.b32.xlu0 %v460, 12
      %v953 = vpop.permute.xlu0 %952
      %954 = vrot.lane.b32.xlu0 %v461, 12
      %v955 = vpop.permute.xlu0 %954
      %956 = vrot.lane.b32.xlu0 %v462, 12
      %v957 = vpop.permute.xlu0 %956
      %958 = vrot.lane.b32.xlu0 %v463, 12
      %v959 = vpop.permute.xlu0 %958
      %960 = vrot.lane.b32.xlu0 %v464, 12
      %v961 = vpop.permute.xlu0 %960
      %962 = vrot.lane.b32.xlu0 %v465, 12
      %v963 = vpop.permute.xlu0 %962
      %964 = vrot.lane.b32.xlu0 %v466, 12
      %v965 = vpop.permute.xlu0 %964
      %966 = vrot.lane.b32.xlu0 %v467, 12
      %v967 = vpop.permute.xlu0 %966
      %968 = vrot.lane.b32.xlu0 %v468, 12
      %v969 = vpop.permute.xlu0 %968
      %970 = vrot.lane.b32.xlu0 %v469, 12
      %v971 = vpop.permute.xlu0 %970
      %972 = vrot.lane.b32.xlu0 %v470, 12
      %v973 = vpop.permute.xlu0 %972
      %974 = vrot.lane.b32.xlu0 %v471, 12
      %v975 = vpop.permute.xlu0 %974
      %976 = vrot.lane.b32.xlu0 %v472, 12
      %v977 = vpop.permute.xlu0 %976
      %978 = vrot.lane.b32.xlu0 %v473, 12
      %v979 = vpop.permute.xlu0 %978
      %980 = vrot.lane.b32.xlu0 %v474, 12
      %v981 = vpop.permute.xlu0 %980
      %982 = vrot.lane.b32.xlu0 %v475, 12
      %v983 = vpop.permute.xlu0 %982
      %984 = vrot.lane.b32.xlu0 %v476, 12
      %v985 = vpop.permute.xlu0 %984
      %986 = vrot.lane.b32.xlu0 %v477, 12
      %v987 = vpop.permute.xlu0 %986
      %988 = vrot.lane.b32.xlu0 %v478, 12
      %v989 = vpop.permute.xlu0 %988
      %990 = vrot.lane.b32.xlu0 %v479, 12
      %v991 = vpop.permute.xlu0 %990
      %992 = vrot.lane.b32.xlu0 %v480, 12
      %v993 = vpop.permute.xlu0 %992
      %1058 = vrot.lane.b32.xlu0 %v481, 16
      %v1059 = vpop.permute.xlu0 %1058
      %1060 = vrot.lane.b32.xlu0 %v482, 16
      %v1061 = vpop.permute.xlu0 %1060
      %1062 = vrot.lane.b32.xlu0 %v483, 16
      %v1063 = vpop.permute.xlu0 %1062
      %1064 = vrot.lane.b32.xlu0 %v484, 16
      %v1065 = vpop.permute.xlu0 %1064
      %1066 = vrot.lane.b32.xlu0 %v485, 16
      %v1067 = vpop.permute.xlu0 %1066
      %1068 = vrot.lane.b32.xlu0 %v486, 16
      %v1069 = vpop.permute.xlu0 %1068
      %1070 = vrot.lane.b32.xlu0 %v487, 16
      %v1071 = vpop.permute.xlu0 %1070
      %1072 = vrot.lane.b32.xlu0 %v488, 16
      %v1073 = vpop.permute.xlu0 %1072
      %1074 = vrot.lane.b32.xlu0 %v489, 16
      %v1075 = vpop.permute.xlu0 %1074
      %1076 = vrot.lane.b32.xlu0 %v490, 16
      %v1077 = vpop.permute.xlu0 %1076
      %1078 = vrot.lane.b32.xlu0 %v491, 16
      %v1079 = vpop.permute.xlu0 %1078
      %1080 = vrot.lane.b32.xlu0 %v492, 16
      %v1081 = vpop.permute.xlu0 %1080
      %1082 = vrot.lane.b32.xlu0 %v493, 16
      %v1083 = vpop.permute.xlu0 %1082
      %1084 = vrot.lane.b32.xlu0 %v494, 16
      %v1085 = vpop.permute.xlu0 %1084
      %1086 = vrot.lane.b32.xlu0 %v495, 16
      %v1087 = vpop.permute.xlu0 %1086
      %1088 = vrot.lane.b32.xlu0 %v496, 16
      %v1089 = vpop.permute.xlu0 %1088
      %1090 = vrot.lane.b32.xlu0 %v497, 16
      %v1091 = vpop.permute.xlu0 %1090
      %1092 = vrot.lane.b32.xlu0 %v498, 16
      %v1093 = vpop.permute.xlu0 %1092
      %1094 = vrot.lane.b32.xlu0 %v499, 16
      %v1095 = vpop.permute.xlu0 %1094
      %1096 = vrot.lane.b32.xlu0 %v500, 16
      %v1097 = vpop.permute.xlu0 %1096
      %1098 = vrot.lane.b32.xlu0 %v501, 16
      %v1099 = vpop.permute.xlu0 %1098
      %1100 = vrot.lane.b32.xlu0 %v502, 16
      %v1101 = vpop.permute.xlu0 %1100
      %1102 = vrot.lane.b32.xlu0 %v503, 16
      %v1103 = vpop.permute.xlu0 %1102
      %1104 = vrot.lane.b32.xlu0 %v504, 16
      %v1105 = vpop.permute.xlu0 %1104
      %1106 = vrot.lane.b32.xlu0 %v505, 16
      %v1107 = vpop.permute.xlu0 %1106
      %1108 = vrot.lane.b32.xlu0 %v506, 16
      %v1109 = vpop.permute.xlu0 %1108
      %1110 = vrot.lane.b32.xlu0 %v507, 16
      %v1111 = vpop.permute.xlu0 %1110
      %1112 = vrot.lane.b32.xlu0 %v508, 16
      %v1113 = vpop.permute.xlu0 %1112
      %1114 = vrot.lane.b32.xlu0 %v509, 16
      %v1115 = vpop.permute.xlu0 %1114
      %1116 = vrot.lane.b32.xlu0 %v510, 16
      %v1117 = vpop.permute.xlu0 %1116
      %1118 = vrot.lane.b32.xlu0 %v511, 16
      %v1119 = vpop.permute.xlu0 %1118
      %1120 = vrot.lane.b32.xlu0 %v512, 16
      %v1121 = vpop.permute.xlu0 %1120
      %1186 = vrot.lane.b32.xlu0 %v513, 20
      %v1187 = vpop.permute.xlu0 %1186
      %1188 = vrot.lane.b32.xlu0 %v514, 20
      %v1189 = vpop.permute.xlu0 %1188
      %1190 = vrot.lane.b32.xlu0 %v515, 20
      %v1191 = vpop.permute.xlu0 %1190
      %1192 = vrot.lane.b32.xlu0 %v516, 20
      %v1193 = vpop.permute.xlu0 %1192
      %1194 = vrot.lane.b32.xlu0 %v517, 20
      %v1195 = vpop.permute.xlu0 %1194
      %1196 = vrot.lane.b32.xlu0 %v518, 20
      %v1197 = vpop.permute.xlu0 %1196
      %1198 = vrot.lane.b32.xlu0 %v519, 20
      %v1199 = vpop.permute.xlu0 %1198
      %1200 = vrot.lane.b32.xlu0 %v520, 20
      %v1201 = vpop.permute.xlu0 %1200
      %1202 = vrot.lane.b32.xlu0 %v521, 20
      %v1203 = vpop.permute.xlu0 %1202
      %1204 = vrot.lane.b32.xlu0 %v522, 20
      %v1205 = vpop.permute.xlu0 %1204
      %1206 = vrot.lane.b32.xlu0 %v523, 20
      %v1207 = vpop.permute.xlu0 %1206
      %1208 = vrot.lane.b32.xlu0 %v524, 20
      %v1209 = vpop.permute.xlu0 %1208
      %1210 = vrot.lane.b32.xlu0 %v525, 20
      %v1211 = vpop.permute.xlu0 %1210
      %1212 = vrot.lane.b32.xlu0 %v526, 20
      %v1213 = vpop.permute.xlu0 %1212
      %1214 = vrot.lane.b32.xlu0 %v527, 20
      %v1215 = vpop.permute.xlu0 %1214
      %1216 = vrot.lane.b32.xlu0 %v528, 20
      %v1217 = vpop.permute.xlu0 %1216
      %1218 = vrot.lane.b32.xlu0 %v529, 20
      %v1219 = vpop.permute.xlu0 %1218
      %1220 = vrot.lane.b32.xlu0 %v530, 20
      %v1221 = vpop.permute.xlu0 %1220
      %1222 = vrot.lane.b32.xlu0 %v531, 20
      %v1223 = vpop.permute.xlu0 %1222
      %1224 = vrot.lane.b32.xlu0 %v532, 20
      %v1225 = vpop.permute.xlu0 %1224
      %1226 = vrot.lane.b32.xlu0 %v533, 20
      %v1227 = vpop.permute.xlu0 %1226
      %1228 = vrot.lane.b32.xlu0 %v534, 20
      %v1229 = vpop.permute.xlu0 %1228
      %1230 = vrot.lane.b32.xlu0 %v535, 20
      %v1231 = vpop.permute.xlu0 %1230
      %1232 = vrot.lane.b32.xlu0 %v536, 20
      %v1233 = vpop.permute.xlu0 %1232
      %1234 = vrot.lane.b32.xlu0 %v537, 20
      %v1235 = vpop.permute.xlu0 %1234
      %1236 = vrot.lane.b32.xlu0 %v538, 20
      %v1237 = vpop.permute.xlu0 %1236
      %1238 = vrot.lane.b32.xlu0 %v539, 20
      %v1239 = vpop.permute.xlu0 %1238
      %1240 = vrot.lane.b32.xlu0 %v540, 20
      %v1241 = vpop.permute.xlu0 %1240
      %1242 = vrot.lane.b32.xlu0 %v541, 20
      %v1243 = vpop.permute.xlu0 %1242
      %1244 = vrot.lane.b32.xlu0 %v542, 20
      %v1245 = vpop.permute.xlu0 %1244
      %1246 = vrot.lane.b32.xlu0 %v543, 20
      %v1247 = vpop.permute.xlu0 %1246
      %1248 = vrot.lane.b32.xlu0 %v544, 20
      %v1249 = vpop.permute.xlu0 %1248
      %1314 = vrot.lane.b32.xlu0 %v546, 24
      %v1315 = vpop.permute.xlu0 %1314
      %1316 = vrot.lane.b32.xlu0 %v547, 24
      %v1317 = vpop.permute.xlu0 %1316
      %1318 = vrot.lane.b32.xlu0 %v548, 24
      %v1319 = vpop.permute.xlu0 %1318
      %1320 = vrot.lane.b32.xlu0 %v549, 24
      %v1321 = vpop.permute.xlu0 %1320
      %1322 = vrot.lane.b32.xlu0 %v550, 24
      %v1323 = vpop.permute.xlu0 %1322
      %1324 = vrot.lane.b32.xlu0 %v551, 24
      %v1325 = vpop.permute.xlu0 %1324
      %1326 = vrot.lane.b32.xlu0 %v552, 24
      %v1327 = vpop.permute.xlu0 %1326
      %1328 = vrot.lane.b32.xlu0 %v553, 24
      %v1329 = vpop.permute.xlu0 %1328
      %1330 = vrot.lane.b32.xlu0 %v554, 24
      %v1331 = vpop.permute.xlu0 %1330
      %1332 = vrot.lane.b32.xlu0 %v555, 24
      %v1333 = vpop.permute.xlu0 %1332
      %1334 = vrot.lane.b32.xlu0 %v556, 24
      %v1335 = vpop.permute.xlu0 %1334
      %1336 = vrot.lane.b32.xlu0 %v557, 24
      %v1337 = vpop.permute.xlu0 %1336
      %1338 = vrot.lane.b32.xlu0 %v558, 24
      %v1339 = vpop.permute.xlu0 %1338
      %1340 = vrot.lane.b32.xlu0 %v559, 24
      %v1341 = vpop.permute.xlu0 %1340
      %1342 = vrot.lane.b32.xlu0 %v560, 24
      %v1343 = vpop.permute.xlu0 %1342
      %1344 = vrot.lane.b32.xlu0 %v561, 24
      %v1345 = vpop.permute.xlu0 %1344
      %1346 = vrot.lane.b32.xlu0 %v562, 24
      %v1347 = vpop.permute.xlu0 %1346
      %1348 = vrot.lane.b32.xlu0 %v563, 24
      %v1349 = vpop.permute.xlu0 %1348
      %1350 = vrot.lane.b32.xlu0 %v564, 24
      %v1351 = vpop.permute.xlu0 %1350
      %1352 = vrot.lane.b32.xlu0 %v565, 24
      %v1353 = vpop.permute.xlu0 %1352
      %1354 = vrot.lane.b32.xlu0 %v566, 24
      %v1355 = vpop.permute.xlu0 %1354
      %1356 = vrot.lane.b32.xlu0 %v567, 24
      %v1357 = vpop.permute.xlu0 %1356
      %1358 = vrot.lane.b32.xlu0 %v568, 24
      %v1359 = vpop.permute.xlu0 %1358
      %1360 = vrot.lane.b32.xlu0 %v569, 24
      %v1361 = vpop.permute.xlu0 %1360
      %1362 = vrot.lane.b32.xlu0 %v570, 24
      %v1363 = vpop.permute.xlu0 %1362
      %1364 = vrot.lane.b32.xlu0 %v571, 24
      %v1365 = vpop.permute.xlu0 %1364
      %1366 = vrot.lane.b32.xlu0 %v572, 24
      %v1367 = vpop.permute.xlu0 %1366
      %1368 = vrot.lane.b32.xlu0 %v573, 24
      %v1369 = vpop.permute.xlu0 %1368
      %1370 = vrot.lane.b32.xlu0 %v574, 24
      %v1371 = vpop.permute.xlu0 %1370
      %1372 = vrot.lane.b32.xlu0 %v575, 24
      %v1373 = vpop.permute.xlu0 %1372
      %1374 = vrot.lane.b32.xlu0 %v576, 24
      %v1375 = vpop.permute.xlu0 %1374
      %1376 = vrot.lane.b32.xlu0 %v577, 24
      %v1377 = vpop.permute.xlu0 %1376
      %1442 = vrot.lane.b32.xlu0 %v578, 28
      %v1443 = vpop.permute.xlu0 %1442
      %1444 = vrot.lane.b32.xlu0 %v579, 28
      %v1445 = vpop.permute.xlu0 %1444
      %1446 = vrot.lane.b32.xlu0 %v580, 28
      %v1447 = vpop.permute.xlu0 %1446
      %1448 = vrot.lane.b32.xlu0 %v581, 28
      %v1449 = vpop.permute.xlu0 %1448
      %1450 = vrot.lane.b32.xlu0 %v582, 28
      %v1451 = vpop.permute.xlu0 %1450
      %1452 = vrot.lane.b32.xlu0 %v583, 28
      %v1453 = vpop.permute.xlu0 %1452
      %1454 = vrot.lane.b32.xlu0 %v584, 28
      %v1455 = vpop.permute.xlu0 %1454
      %1456 = vrot.lane.b32.xlu0 %v585, 28
      %v1457 = vpop.permute.xlu0 %1456
      %1458 = vrot.lane.b32.xlu0 %v586, 28
      %v1459 = vpop.permute.xlu0 %1458
      %1460 = vrot.lane.b32.xlu0 %v587, 28
      %v1461 = vpop.permute.xlu0 %1460
      %1462 = vrot.lane.b32.xlu0 %v588, 28
      %v1463 = vpop.permute.xlu0 %1462
      %1464 = vrot.lane.b32.xlu0 %v589, 28
      %v1465 = vpop.permute.xlu0 %1464
      %1466 = vrot.lane.b32.xlu0 %v590, 28
      %v1467 = vpop.permute.xlu0 %1466
      %1468 = vrot.lane.b32.xlu0 %v591, 28
      %v1469 = vpop.permute.xlu0 %1468
      %1470 = vrot.lane.b32.xlu0 %v592, 28
      %v1471 = vpop.permute.xlu0 %1470
      %1472 = vrot.lane.b32.xlu0 %v593, 28
      %v1473 = vpop.permute.xlu0 %1472
      %1474 = vrot.lane.b32.xlu0 %v594, 28
      %v1475 = vpop.permute.xlu0 %1474
      %1476 = vrot.lane.b32.xlu0 %v595, 28
      %v1477 = vpop.permute.xlu0 %1476
      %1478 = vrot.lane.b32.xlu0 %v596, 28
      %v1479 = vpop.permute.xlu0 %1478
      %1480 = vrot.lane.b32.xlu0 %v597, 28
      %v1481 = vpop.permute.xlu0 %1480
      %1482 = vrot.lane.b32.xlu0 %v598, 28
      %v1483 = vpop.permute.xlu0 %1482
      %1484 = vrot.lane.b32.xlu0 %v599, 28
      %v1485 = vpop.permute.xlu0 %1484
      %1486 = vrot.lane.b32.xlu0 %v600, 28
      %v1487 = vpop.permute.xlu0 %1486
      %1488 = vrot.lane.b32.xlu0 %v601, 28
      %v1489 = vpop.permute.xlu0 %1488
      %1490 = vrot.lane.b32.xlu0 %v602, 28
      %v1491 = vpop.permute.xlu0 %1490
      %1492 = vrot.lane.b32.xlu0 %v603, 28
      %v1493 = vpop.permute.xlu0 %1492
      %1494 = vrot.lane.b32.xlu0 %v604, 28
      %v1495 = vpop.permute.xlu0 %1494
      %1496 = vrot.lane.b32.xlu0 %v605, 28
      %v1497 = vpop.permute.xlu0 %1496
      %1498 = vrot.lane.b32.xlu0 %v606, 28
      %v1499 = vpop.permute.xlu0 %1498
      %1500 = vrot.lane.b32.xlu0 %v607, 28
      %v1501 = vpop.permute.xlu0 %1500
      %1502 = vrot.lane.b32.xlu0 %v608, 28
      %v1503 = vpop.permute.xlu0 %1502
      %1504 = vrot.lane.b32.xlu0 %v609, 28
      %v1505 = vpop.permute.xlu0 %1504
      %1570 = vrot.lane.b32.xlu0 %v610, 32
      %v1571 = vpop.permute.xlu0 %1570
      %1572 = vrot.lane.b32.xlu0 %v611, 32
      %v1573 = vpop.permute.xlu0 %1572
      %1574 = vrot.lane.b32.xlu0 %v612, 32
      %v1575 = vpop.permute.xlu0 %1574
      %1576 = vrot.lane.b32.xlu0 %v613, 32
      %v1577 = vpop.permute.xlu0 %1576
      %1578 = vrot.lane.b32.xlu0 %v614, 32
      %v1579 = vpop.permute.xlu0 %1578
      %1580 = vrot.lane.b32.xlu0 %v615, 32
      %v1581 = vpop.permute.xlu0 %1580
      %1582 = vrot.lane.b32.xlu0 %v616, 32
      %v1583 = vpop.permute.xlu0 %1582
      %1584 = vrot.lane.b32.xlu0 %v617, 32
      %v1585 = vpop.permute.xlu0 %1584
      %1586 = vrot.lane.b32.xlu0 %v618, 32
      %v1587 = vpop.permute.xlu0 %1586
      %1588 = vrot.lane.b32.xlu0 %v619, 32
      %v1589 = vpop.permute.xlu0 %1588
      %1590 = vrot.lane.b32.xlu0 %v620, 32
      %v1591 = vpop.permute.xlu0 %1590
      %1592 = vrot.lane.b32.xlu0 %v621, 32
      %v1593 = vpop.permute.xlu0 %1592
      %1594 = vrot.lane.b32.xlu0 %v622, 32
      %v1595 = vpop.permute.xlu0 %1594
      %1596 = vrot.lane.b32.xlu0 %v623, 32
      %v1597 = vpop.permute.xlu0 %1596
      %1598 = vrot.lane.b32.xlu0 %v624, 32
      %v1599 = vpop.permute.xlu0 %1598
      %1600 = vrot.lane.b32.xlu0 %v625, 32
      %v1601 = vpop.permute.xlu0 %1600
      %1602 = vrot.lane.b32.xlu0 %v626, 32
      %v1603 = vpop.permute.xlu0 %1602
      %1604 = vrot.lane.b32.xlu0 %v627, 32
      %v1605 = vpop.permute.xlu0 %1604
      %1606 = vrot.lane.b32.xlu0 %v628, 32
      %v1607 = vpop.permute.xlu0 %1606
      %1608 = vrot.lane.b32.xlu0 %v629, 32
      %v1609 = vpop.permute.xlu0 %1608
      %1610 = vrot.lane.b32.xlu0 %v630, 32
      %v1611 = vpop.permute.xlu0 %1610
      %1612 = vrot.lane.b32.xlu0 %v631, 32
      %v1613 = vpop.permute.xlu0 %1612
      %1614 = vrot.lane.b32.xlu0 %v632, 32
      %v1615 = vpop.permute.xlu0 %1614
      %1616 = vrot.lane.b32.xlu0 %v633, 32
      %v1617 = vpop.permute.xlu0 %1616
      %1618 = vrot.lane.b32.xlu0 %v634, 32
      %v1619 = vpop.permute.xlu0 %1618
      %1620 = vrot.lane.b32.xlu0 %v635, 32
      %v1621 = vpop.permute.xlu0 %1620
      %1622 = vrot.lane.b32.xlu0 %v636, 32
      %v1623 = vpop.permute.xlu0 %1622
      %1624 = vrot.lane.b32.xlu0 %v637, 32
      %v1625 = vpop.permute.xlu0 %1624
      %1626 = vrot.lane.b32.xlu0 %v638, 32
      %v1627 = vpop.permute.xlu0 %1626
      %1628 = vrot.lane.b32.xlu0 %v639, 32
      %v1629 = vpop.permute.xlu0 %1628
      %1630 = vrot.lane.b32.xlu0 %v640, 32
      %v1631 = vpop.permute.xlu0 %1630
      %1632 = vrot.lane.b32.xlu0 %v641, 32
      %v1633 = vpop.permute.xlu0 %1632
      %v1666 = vsel %vm274, %v353, %v675
      %v1667 = vsel %vm274, %v354, %v677
      %v1668 = vsel %vm274, %v355, %v679
      %v1669 = vsel %vm274, %v356, %v681
      %v1670 = vsel %vm274, %v357, %v683
      %v1671 = vsel %vm274, %v358, %v685
      %v1672 = vsel %vm274, %v359, %v687
      %v1673 = vsel %vm274, %v360, %v689
      %v1674 = vsel %vm274, %v361, %v691
      %v1675 = vsel %vm274, %v362, %v693
      %v1676 = vsel %vm274, %v363, %v695
      %v1677 = vsel %vm274, %v364, %v697
      %v1678 = vsel %vm274, %v365, %v699
      %v1679 = vsel %vm274, %v366, %v701
      %v1680 = vsel %vm274, %v367, %v703
      %v1681 = vsel %vm274, %v368, %v705
      %v1682 = vsel %vm274, %v369, %v707
      %v1683 = vsel %vm274, %v370, %v709
      %v1684 = vsel %vm274, %v371, %v711
      %v1685 = vsel %vm274, %v372, %v713
      %v1686 = vsel %vm274, %v373, %v715
      %v1687 = vsel %vm274, %v374, %v717
      %v1688 = vsel %vm274, %v375, %v719
      %v1689 = vsel %vm274, %v376, %v721
      %v1690 = vsel %vm274, %v377, %v723
      %v1691 = vsel %vm274, %v378, %v725
      %v1692 = vsel %vm274, %v379, %v727
      %v1693 = vsel %vm274, %v380, %v729
      %v1694 = vsel %vm274, %v381, %v731
      %v1695 = vsel %vm274, %v382, %v733
      %v1696 = vsel %vm274, %v383, %v735
      %v1697 = vsel %vm274, %v384, %v737
      %vm1698 = vcmask 64512
      %v1699 = vsel %vm1698, %v1666, %v803
      %v1700 = vsel %vm1698, %v1667, %v805
      %v1701 = vsel %vm1698, %v1668, %v807
      %v1702 = vsel %vm1698, %v1669, %v809
      %v1703 = vsel %vm1698, %v1670, %v811
      %v1704 = vsel %vm1698, %v1671, %v813
      %v1705 = vsel %vm1698, %v1672, %v815
      %v1706 = vsel %vm1698, %v1673, %v817
      %v1707 = vsel %vm1698, %v1674, %v819
      %v1708 = vsel %vm1698, %v1675, %v821
      %v1709 = vsel %vm1698, %v1676, %v823
      %v1710 = vsel %vm1698, %v1677, %v825
      %v1711 = vsel %vm1698, %v1678, %v827
      %v1712 = vsel %vm1698, %v1679, %v829
      %v1713 = vsel %vm1698, %v1680, %v831
      %v1714 = vsel %vm1698, %v1681, %v833
      %v1715 = vsel %vm1698, %v1682, %v835
      %v1716 = vsel %vm1698, %v1683, %v837
      %v1717 = vsel %vm1698, %v1684, %v839
      %v1718 = vsel %vm1698, %v1685, %v841
      %v1719 = vsel %vm1698, %v1686, %v843
      %v1720 = vsel %vm1698, %v1687, %v845
      %v1721 = vsel %vm1698, %v1688, %v847
      %v1722 = vsel %vm1698, %v1689, %v849
      %v1723 = vsel %vm1698, %v1690, %v851
      %v1724 = vsel %vm1698, %v1691, %v853
      %v1725 = vsel %vm1698, %v1692, %v855
      %v1726 = vsel %vm1698, %v1693, %v857
      %v1727 = vsel %vm1698, %v1694, %v859
      %v1728 = vsel %vm1698, %v1695, %v861
      %v1729 = vsel %vm1698, %v1696, %v863
      %v1730 = vsel %vm1698, %v1697, %v865
      %vm1731 = vcmask 97280
      %v1732 = vsel %vm1731, %v1699, %v931
      %v1733 = vsel %vm1731, %v1700, %v933
      %v1734 = vsel %vm1731, %v1701, %v935
      %v1735 = vsel %vm1731, %v1702, %v937
      %v1736 = vsel %vm1731, %v1703, %v939
      %v1737 = vsel %vm1731, %v1704, %v941
      %v1738 = vsel %vm1731, %v1705, %v943
      %v1739 = vsel %vm1731, %v1706, %v945
      %v1740 = vsel %vm1731, %v1707, %v947
      %v1741 = vsel %vm1731, %v1708, %v949
      %v1742 = vsel %vm1731, %v1709, %v951
      %v1743 = vsel %vm1731, %v1710, %v953
      %v1744 = vsel %vm1731, %v1711, %v955
      %v1745 = vsel %vm1731, %v1712, %v957
      %v1746 = vsel %vm1731, %v1713, %v959
      %v1747 = vsel %vm1731, %v1714, %v961
      %v1748 = vsel %vm1731, %v1715, %v963
      %v1749 = vsel %vm1731, %v1716, %v965
      %v1750 = vsel %vm1731, %v1717, %v967
      %v1751 = vsel %vm1731, %v1718, %v969
      %v1752 = vsel %vm1731, %v1719, %v971
      %v1753 = vsel %vm1731, %v1720, %v973
      %v1754 = vsel %vm1731, %v1721, %v975
      %v1755 = vsel %vm1731, %v1722, %v977
      %v1756 = vsel %vm1731, %v1723, %v979
      %v1757 = vsel %vm1731, %v1724, %v981
      %v1758 = vsel %vm1731, %v1725, %v983
      %v1759 = vsel %vm1731, %v1726, %v985
      %v1760 = vsel %vm1731, %v1727, %v987
      %v1761 = vsel %vm1731, %v1728, %v989
      %v1762 = vsel %vm1731, %v1729, %v991
      %v1763 = vsel %vm1731, %v1730, %v993
      %vm1764 = vcmask 130048
      %v1765 = vsel %vm1764, %v1732, %v1059
      %v1766 = vsel %vm1764, %v1733, %v1061
      %v1767 = vsel %vm1764, %v1734, %v1063
      %v1768 = vsel %vm1764, %v1735, %v1065
      %v1769 = vsel %vm1764, %v1736, %v1067
      %v1770 = vsel %vm1764, %v1737, %v1069
      %v1771 = vsel %vm1764, %v1738, %v1071
      %v1772 = vsel %vm1764, %v1739, %v1073
      %v1773 = vsel %vm1764, %v1740, %v1075
      %v1774 = vsel %vm1764, %v1741, %v1077
      %v1775 = vsel %vm1764, %v1742, %v1079
      %v1776 = vsel %vm1764, %v1743, %v1081
      %v1777 = vsel %vm1764, %v1744, %v1083
      %v1778 = vsel %vm1764, %v1745, %v1085
      %v1779 = vsel %vm1764, %v1746, %v1087
      %v1780 = vsel %vm1764, %v1747, %v1089
      %v1781 = vsel %vm1764, %v1748, %v1091
      %v1782 = vsel %vm1764, %v1749, %v1093
      %v1783 = vsel %vm1764, %v1750, %v1095
      %v1784 = vsel %vm1764, %v1751, %v1097
      %v1785 = vsel %vm1764, %v1752, %v1099
      %v1786 = vsel %vm1764, %v1753, %v1101
      %v1787 = vsel %vm1764, %v1754, %v1103
      %v1788 = vsel %vm1764, %v1755, %v1105
      %v1789 = vsel %vm1764, %v1756, %v1107
      %v1790 = vsel %vm1764, %v1757, %v1109
      %v1791 = vsel %vm1764, %v1758, %v1111
      %v1792 = vsel %vm1764, %v1759, %v1113
      %v1793 = vsel %vm1764, %v1760, %v1115
      %v1794 = vsel %vm1764, %v1761, %v1117
      %v1795 = vsel %vm1764, %v1762, %v1119
      %v1796 = vsel %vm1764, %v1763, %v1121
      %vm1797 = vcmask 162816
      %v1798 = vsel %vm1797, %v1765, %v1187
      %v1799 = vsel %vm1797, %v1766, %v1189
      %v1800 = vsel %vm1797, %v1767, %v1191
      %v1801 = vsel %vm1797, %v1768, %v1193
      %v1802 = vsel %vm1797, %v1769, %v1195
      %v1803 = vsel %vm1797, %v1770, %v1197
      %v1804 = vsel %vm1797, %v1771, %v1199
      %v1805 = vsel %vm1797, %v1772, %v1201
      %v1806 = vsel %vm1797, %v1773, %v1203
      %v1807 = vsel %vm1797, %v1774, %v1205
      %v1808 = vsel %vm1797, %v1775, %v1207
      %v1809 = vsel %vm1797, %v1776, %v1209
      %v1810 = vsel %vm1797, %v1777, %v1211
      %v1811 = vsel %vm1797, %v1778, %v1213
      %v1812 = vsel %vm1797, %v1779, %v1215
      %v1813 = vsel %vm1797, %v1780, %v1217
      %v1814 = vsel %vm1797, %v1781, %v1219
      %v1815 = vsel %vm1797, %v1782, %v1221
      %v1816 = vsel %vm1797, %v1783, %v1223
      %v1817 = vsel %vm1797, %v1784, %v1225
      %v1818 = vsel %vm1797, %v1785, %v1227
      %v1819 = vsel %vm1797, %v1786, %v1229
      %v1820 = vsel %vm1797, %v1787, %v1231
      %v1821 = vsel %vm1797, %v1788, %v1233
      %v1822 = vsel %vm1797, %v1789, %v1235
      %v1823 = vsel %vm1797, %v1790, %v1237
      %v1824 = vsel %vm1797, %v1791, %v1239
      %v1825 = vsel %vm1797, %v1792, %v1241
      %v1826 = vsel %vm1797, %v1793, %v1243
      %v1827 = vsel %vm1797, %v1794, %v1245
      %v1828 = vsel %vm1797, %v1795, %v1247
      %v1829 = vsel %vm1797, %v1796, %v1249
      %vm1830 = vcmask 195584
      %v1831 = vsel %vm1830, %v1798, %v1315
      %v1832 = vsel %vm1830, %v1799, %v1317
      %v1833 = vsel %vm1830, %v1800, %v1319
      %v1834 = vsel %vm1830, %v1801, %v1321
      %v1835 = vsel %vm1830, %v1802, %v1323
      %v1836 = vsel %vm1830, %v1803, %v1325
      %v1837 = vsel %vm1830, %v1804, %v1327
      %v1838 = vsel %vm1830, %v1805, %v1329
      %v1839 = vsel %vm1830, %v1806, %v1331
      %v1840 = vsel %vm1830, %v1807, %v1333
      %v1841 = vsel %vm1830, %v1808, %v1335
      %v1842 = vsel %vm1830, %v1809, %v1337
      %v1843 = vsel %vm1830, %v1810, %v1339
      %v1844 = vsel %vm1830, %v1811, %v1341
      %v1845 = vsel %vm1830, %v1812, %v1343
      %v1846 = vsel %vm1830, %v1813, %v1345
      %v1847 = vsel %vm1830, %v1814, %v1347
      %v1848 = vsel %vm1830, %v1815, %v1349
      %v1849 = vsel %vm1830, %v1816, %v1351
      %v1850 = vsel %vm1830, %v1817, %v1353
      %v1851 = vsel %vm1830, %v1818, %v1355
      %v1852 = vsel %vm1830, %v1819, %v1357
      %v1853 = vsel %vm1830, %v1820, %v1359
      %v1854 = vsel %vm1830, %v1821, %v1361
      %v1855 = vsel %vm1830, %v1822, %v1363
      %v1856 = vsel %vm1830, %v1823, %v1365
      %v1857 = vsel %vm1830, %v1824, %v1367
      %v1858 = vsel %vm1830, %v1825, %v1369
      %v1859 = vsel %vm1830, %v1826, %v1371
      %v1860 = vsel %vm1830, %v1827, %v1373
      %v1861 = vsel %vm1830, %v1828, %v1375
      %v1862 = vsel %vm1830, %v1829, %v1377
      %vm1863 = vcmask 228352
      %v1864 = vsel %vm1863, %v1831, %v1443
      %v1865 = vsel %vm1863, %v1832, %v1445
      %v1866 = vsel %vm1863, %v1833, %v1447
      %v1867 = vsel %vm1863, %v1834, %v1449
      %v1868 = vsel %vm1863, %v1835, %v1451
      %v1869 = vsel %vm1863, %v1836, %v1453
      %v1870 = vsel %vm1863, %v1837, %v1455
      %v1871 = vsel %vm1863, %v1838, %v1457
      %v1872 = vsel %vm1863, %v1839, %v1459
      %v1873 = vsel %vm1863, %v1840, %v1461
      %v1874 = vsel %vm1863, %v1841, %v1463
      %v1875 = vsel %vm1863, %v1842, %v1465
      %v1876 = vsel %vm1863, %v1843, %v1467
      %v1877 = vsel %vm1863, %v1844, %v1469
      %v1878 = vsel %vm1863, %v1845, %v1471
      %v1879 = vsel %vm1863, %v1846, %v1473
      %v1880 = vsel %vm1863, %v1847, %v1475
      %v1881 = vsel %vm1863, %v1848, %v1477
      %v1882 = vsel %vm1863, %v1849, %v1479
      %v1883 = vsel %vm1863, %v1850, %v1481
      %v1884 = vsel %vm1863, %v1851, %v1483
      %v1885 = vsel %vm1863, %v1852, %v1485
      %v1886 = vsel %vm1863, %v1853, %v1487
      %v1887 = vsel %vm1863, %v1854, %v1489
      %v1888 = vsel %vm1863, %v1855, %v1491
      %v1889 = vsel %vm1863, %v1856, %v1493
      %v1890 = vsel %vm1863, %v1857, %v1495
      %v1891 = vsel %vm1863, %v1858, %v1497
      %v1892 = vsel %vm1863, %v1859, %v1499
      %v1893 = vsel %vm1863, %v1860, %v1501
      %v1894 = vsel %vm1863, %v1861, %v1503
      %v1895 = vsel %vm1863, %v1862, %v1505
      %vm1896 = vcmask 261120
      %v1897 = vsel %vm1896, %v1864, %v1571
      %v1898 = vsel %vm1896, %v1865, %v1573
      %v1899 = vsel %vm1896, %v1866, %v1575
      %v1900 = vsel %vm1896, %v1867, %v1577
      %v1901 = vsel %vm1896, %v1868, %v1579
      %v1902 = vsel %vm1896, %v1869, %v1581
      %v1903 = vsel %vm1896, %v1870, %v1583
      %v1904 = vsel %vm1896, %v1871, %v1585
      %v1905 = vsel %vm1896, %v1872, %v1587
      %v1906 = vsel %vm1896, %v1873, %v1589
      %v1907 = vsel %vm1896, %v1874, %v1591
      %v1908 = vsel %vm1896, %v1875, %v1593
      %v1909 = vsel %vm1896, %v1876, %v1595
      %v1910 = vsel %vm1896, %v1877, %v1597
      %v1911 = vsel %vm1896, %v1878, %v1599
      %v1912 = vsel %vm1896, %v1879, %v1601
      %v1913 = vsel %vm1896, %v1880, %v1603
      %v1914 = vsel %vm1896, %v1881, %v1605
      %v1915 = vsel %vm1896, %v1882, %v1607
      %v1916 = vsel %vm1896, %v1883, %v1609
      %v1917 = vsel %vm1896, %v1884, %v1611
      %v1918 = vsel %vm1896, %v1885, %v1613
      %v1919 = vsel %vm1896, %v1886, %v1615
      %v1920 = vsel %vm1896, %v1887, %v1617
      %v1921 = vsel %vm1896, %v1888, %v1619
      %v1922 = vsel %vm1896, %v1889, %v1621
      %v1923 = vsel %vm1896, %v1890, %v1623
      %v1924 = vsel %vm1896, %v1891, %v1625
      %v1925 = vsel %vm1896, %v1892, %v1627
      %v1926 = vsel %vm1896, %v1893, %v1629
      %v1927 = vsel %vm1896, %v1894, %v1631
      %v1928 = vsel %vm1896, %v1895, %v1633
      %v1929 = vld [vmem:[%s1] sm:$0xff]
      %v1930 = vld [vmem:[%s1 + $0x8] sm:$0xff]
      %v1931 = vld [vmem:[%s1 + $0x10] sm:$0xff]
      %v1932 = vld [vmem:[%s1 + $0x18] sm:$0xff]
      %v1933 = vld [vmem:[%s1 + $0x20] sm:$0xf]
      %v1934 = vld [vmem:[%s2] sm:$0x1]
      %v1936 = vperm.slane %v1934, 0
      %vm1938 = vcmask 293888
      %v1940 = vsel %vm1938, %v1897, 0
      %v1943 = vsel %vm1938, %v1898, 0
      %v1946 = vsel %vm1938, %v1899, 0
      %v1949 = vsel %vm1938, %v1900, 0
      %v1952 = vsel %vm1938, %v1901, 0
      %v1955 = vsel %vm1938, %v1902, 0
      %v1958 = vsel %vm1938, %v1903, 0
      %v1961 = vsel %vm1938, %v1904, 0
      %v1964 = vsel %vm1938, %v1905, 0
      %v1967 = vsel %vm1938, %v1906, 0
      %v1970 = vsel %vm1938, %v1907, 0
      %v1973 = vsel %vm1938, %v1908, 0
      %v1976 = vsel %vm1938, %v1909, 0
      %v1979 = vsel %vm1938, %v1910, 0
      %v1982 = vsel %vm1938, %v1911, 0
      %v1985 = vsel %vm1938, %v1912, 0
      %v1988 = vsel %vm1938, %v1913, 0
      %v1991 = vsel %vm1938, %v1914, 0
      %v1994 = vsel %vm1938, %v1915, 0
      %v1997 = vsel %vm1938, %v1916, 0
      %v2000 = vsel %vm1938, %v1917, 0
      %v2003 = vsel %vm1938, %v1918, 0
      %v2006 = vsel %vm1938, %v1919, 0
      %v2009 = vsel %vm1938, %v1920, 0
      %v2012 = vsel %vm1938, %v1921, 0
      %v2015 = vsel %vm1938, %v1922, 0
      %v2018 = vsel %vm1938, %v1923, 0
      %v2021 = vsel %vm1938, %v1924, 0
      %v2024 = vsel %vm1938, %v1925, 0
      %v2027 = vsel %vm1938, %v1926, 0
      %v2030 = vsel %vm1938, %v1927, 0
      %v2033 = vsel %vm1938, %v1928, 0
      %vm2035 = vcmask 1043456
      %v2037 = vsel %vm2035, %v1933, 0
      %2039 = vmatpush.msra.mxu0 0.0
      %2040 = vmatpush.msra.mxu0 0.0
      %2041 = vmatpush.msra.mxu0 0.0
      %2042 = vmatpush.msra.mxu0 0.0
      %2043 = vmatpush.msra.mxu0 0.0
      %2044 = vmatpush.msra.mxu0 0.0
      %2045 = vmatpush.msra.mxu0 0.0
      %2046 = vmatpush.msra.mxu0 0.0
      %2047 = vmatpush.msra.mxu0 0.0
      %2048 = vmatpush.msra.mxu0 0.0
      %2049 = vmatpush.msra.mxu0 0.0
      %2050 = vmatpush.msra.mxu0 %v2037
      %2051 = vmatpush.msra.mxu0 %v1932
      %2052 = vmatpush.msra.mxu0 %v1931
      %2053 = vmatpush.msra.mxu0 %v1930
      %2054 = vmatpush.msra.mxu0 %v1929
      %2055 = vmatmul.f32.gmra.mxu0 %v1940
      %v2056 = vpop.f32.mrf.mxu0
      %v2057 = vadd.f32 %v1936, %v2056
      %2058 = vmatmul.f32.gmra.mxu0 %v1943
      %v2059 = vpop.f32.mrf.mxu0
      %v2060 = vadd.f32 %v1936, %v2059
      %2061 = vmatmul.f32.gmra.mxu0 %v1946
      %v2062 = vpop.f32.mrf.mxu0
      %v2063 = vadd.f32 %v1936, %v2062
      %2064 = vmatmul.f32.gmra.mxu0 %v1949
      %v2065 = vpop.f32.mrf.mxu0
      %v2066 = vadd.f32 %v1936, %v2065
      %2067 = vmatmul.f32.gmra.mxu0 %v1952
      %v2068 = vpop.f32.mrf.mxu0
      %v2069 = vadd.f32 %v1936, %v2068
      %2070 = vmatmul.f32.gmra.mxu0 %v1955
      %v2071 = vpop.f32.mrf.mxu0
      %v2072 = vadd.f32 %v1936, %v2071
      %2073 = vmatmul.f32.gmra.mxu0 %v1958
      %v2074 = vpop.f32.mrf.mxu0
      %v2075 = vadd.f32 %v1936, %v2074
      %2076 = vmatmul.f32.gmra.mxu0 %v1961
      %v2077 = vpop.f32.mrf.mxu0
      %v2078 = vadd.f32 %v1936, %v2077
      %2079 = vmatmul.f32.gmra.mxu0 %v1964
      %v2080 = vpop.f32.mrf.mxu0
      %v2081 = vadd.f32 %v1936, %v2080
      %2082 = vmatmul.f32.gmra.mxu0 %v1967
      %v2083 = vpop.f32.mrf.mxu0
      %v2084 = vadd.f32 %v1936, %v2083
      %2085 = vmatmul.f32.gmra.mxu0 %v1970
      %v2086 = vpop.f32.mrf.mxu0
      %v2087 = vadd.f32 %v1936, %v2086
      %2088 = vmatmul.f32.gmra.mxu0 %v1973
      %v2089 = vpop.f32.mrf.mxu0
      %v2090 = vadd.f32 %v1936, %v2089
      %2091 = vmatmul.f32.gmra.mxu0 %v1976
      %v2092 = vpop.f32.mrf.mxu0
      %v2093 = vadd.f32 %v1936, %v2092
      %2094 = vmatmul.f32.gmra.mxu0 %v1979
      %v2095 = vpop.f32.mrf.mxu0
      %v2096 = vadd.f32 %v1936, %v2095
      %2097 = vmatmul.f32.gmra.mxu0 %v1982
      %v2098 = vpop.f32.mrf.mxu0
      %v2099 = vadd.f32 %v1936, %v2098
      %2100 = vmatmul.f32.gmra.mxu0 %v1985
      %v2101 = vpop.f32.mrf.mxu0
      %v2102 = vadd.f32 %v1936, %v2101
      %2103 = vmatmul.f32.gmra.mxu0 %v1988
      %v2104 = vpop.f32.mrf.mxu0
      %v2105 = vadd.f32 %v1936, %v2104
      %2106 = vmatmul.f32.gmra.mxu0 %v1991
      %v2107 = vpop.f32.mrf.mxu0
      %v2108 = vadd.f32 %v1936, %v2107
      %2109 = vmatmul.f32.gmra.mxu0 %v1994
      %v2110 = vpop.f32.mrf.mxu0
      %v2111 = vadd.f32 %v1936, %v2110
      %2112 = vmatmul.f32.gmra.mxu0 %v1997
      %v2113 = vpop.f32.mrf.mxu0
      %v2114 = vadd.f32 %v1936, %v2113
      %2115 = vmatmul.f32.gmra.mxu0 %v2000
      %v2116 = vpop.f32.mrf.mxu0
      %v2117 = vadd.f32 %v1936, %v2116
      %2118 = vmatmul.f32.gmra.mxu0 %v2003
      %v2119 = vpop.f32.mrf.mxu0
      %v2120 = vadd.f32 %v1936, %v2119
      %2121 = vmatmul.f32.gmra.mxu0 %v2006
      %v2122 = vpop.f32.mrf.mxu0
      %v2123 = vadd.f32 %v1936, %v2122
      %2124 = vmatmul.f32.gmra.mxu0 %v2009
      %v2125 = vpop.f32.mrf.mxu0
      %v2126 = vadd.f32 %v1936, %v2125
      %2127 = vmatmul.f32.gmra.mxu0 %v2012
      %v2128 = vpop.f32.mrf.mxu0
      %v2129 = vadd.f32 %v1936, %v2128
      %2130 = vmatmul.f32.gmra.mxu0 %v2015
      %v2131 = vpop.f32.mrf.mxu0
      %v2132 = vadd.f32 %v1936, %v2131
      %2133 = vmatmul.f32.gmra.mxu0 %v2018
      %v2134 = vpop.f32.mrf.mxu0
      %v2135 = vadd.f32 %v1936, %v2134
      %2136 = vmatmul.f32.gmra.mxu0 %v2021
      %v2137 = vpop.f32.mrf.mxu0
      %v2138 = vadd.f32 %v1936, %v2137
      %2139 = vmatmul.f32.gmra.mxu0 %v2024
      %v2140 = vpop.f32.mrf.mxu0
      %v2141 = vadd.f32 %v1936, %v2140
      %2142 = vmatmul.f32.gmra.mxu0 %v2027
      %v2143 = vpop.f32.mrf.mxu0
      %v2144 = vadd.f32 %v1936, %v2143
      %2145 = vmatmul.f32.gmra.mxu0 %v2030
      %v2146 = vpop.f32.mrf.mxu0
      %v2147 = vadd.f32 %v1936, %v2146
      %2148 = vmatmul.f32.gmra.mxu0 %v2033
      %v2149 = vpop.f32.mrf.mxu0
      %v2150 = vadd.f32 %v1936, %v2149
      %2151 = vdwg.mxu0
      %2152 = vst.msk [vmem:[%s235] sm:$0xff] %vm1698, %v2057
      %2153 = vst.msk [vmem:[%s235 + $0x8] sm:$0xff] %vm1698, %v2060
      %2154 = vst.msk [vmem:[%s235 + $0x10] sm:$0xff] %vm1698, %v2063
      %2155 = vst.msk [vmem:[%s235 + $0x18] sm:$0xff] %vm1698, %v2066
      %2156 = vst.msk [vmem:[%s235 + $0x20] sm:$0xff] %vm1698, %v2069
      %2157 = vst.msk [vmem:[%s235 + $0x28] sm:$0xff] %vm1698, %v2072
      %2158 = vst.msk [vmem:[%s235 + $0x30] sm:$0xff] %vm1698, %v2075
      %2159 = vst.msk [vmem:[%s235 + $0x38] sm:$0xff] %vm1698, %v2078
      %2160 = vst.msk [vmem:[%s235 + $0x40] sm:$0xff] %vm1698, %v2081
      %2161 = vst.msk [vmem:[%s235 + $0x48] sm:$0xff] %vm1698, %v2084
      %2162 = vst.msk [vmem:[%s235 + $0x50] sm:$0xff] %vm1698, %v2087
      %2163 = vst.msk [vmem:[%s235 + $0x58] sm:$0xff] %vm1698, %v2090
      %2164 = vst.msk [vmem:[%s235 + $0x60] sm:$0xff] %vm1698, %v2093
      %2165 = vst.msk [vmem:[%s235 + $0x68] sm:$0xff] %vm1698, %v2096
      %2166 = vst.msk [vmem:[%s235 + $0x70] sm:$0xff] %vm1698, %v2099
      %2167 = vst.msk [vmem:[%s235 + $0x78] sm:$0xff] %vm1698, %v2102
      %2168 = vst.msk [vmem:[%s235 + $0x80] sm:$0xff] %vm1698, %v2105
      %2169 = vst.msk [vmem:[%s235 + $0x88] sm:$0xff] %vm1698, %v2108
      %2170 = vst.msk [vmem:[%s235 + $0x90] sm:$0xff] %vm1698, %v2111
      %2171 = vst.msk [vmem:[%s235 + $0x98] sm:$0xff] %vm1698, %v2114
      %2172 = vst.msk [vmem:[%s235 + $0xa0] sm:$0xff] %vm1698, %v2117
      %2173 = vst.msk [vmem:[%s235 + $0xa8] sm:$0xff] %vm1698, %v2120
      %2174 = vst.msk [vmem:[%s235 + $0xb0] sm:$0xff] %vm1698, %v2123
      %2175 = vst.msk [vmem:[%s235 + $0xb8] sm:$0xff] %vm1698, %v2126
      %2176 = vst.msk [vmem:[%s235 + $0xc0] sm:$0xff] %vm1698, %v2129
      %2177 = vst.msk [vmem:[%s235 + $0xc8] sm:$0xff] %vm1698, %v2132
      %2178 = vst.msk [vmem:[%s235 + $0xd0] sm:$0xff] %vm1698, %v2135
      %2179 = vst.msk [vmem:[%s235 + $0xd8] sm:$0xff] %vm1698, %v2138
      %2180 = vst.msk [vmem:[%s235 + $0xe0] sm:$0xff] %vm1698, %v2141
      %2181 = vst.msk [vmem:[%s235 + $0xe8] sm:$0xff] %vm1698, %v2144
      %2182 = vst.msk [vmem:[%s235 + $0xf0] sm:$0xff] %vm1698, %v2147
      %2183 = vst.msk [vmem:[%s235 + $0xf8] sm:$0xff] %vm1698, %v2150
      %v2184 = vsel %vm1698, %v2057, 0.0
      %v2185 = vsel %vm1698, %v2060, 0.0
      %v2186 = vadd.f32 %v2184, %v2185
      %v2187 = vsel %vm1698, %v2063, 0.0
      %v2188 = vadd.f32 %v2186, %v2187
      %v2189 = vsel %vm1698, %v2066, 0.0
      %v2190 = vadd.f32 %v2188, %v2189
      %v2191 = vsel %vm1698, %v2069, 0.0
      %v2192 = vadd.f32 %v2190, %v2191
      %v2193 = vsel %vm1698, %v2072, 0.0
      %v2194 = vadd.f32 %v2192, %v2193
      %v2195 = vsel %vm1698, %v2075, 0.0
      %v2196 = vadd.f32 %v2194, %v2195
      %v2197 = vsel %vm1698, %v2078, 0.0
      %v2198 = vadd.f32 %v2196, %v2197
      %v2199 = vsel %vm1698, %v2081, 0.0
      %v2200 = vadd.f32 %v2198, %v2199
      %v2201 = vsel %vm1698, %v2084, 0.0
      %v2202 = vadd.f32 %v2200, %v2201
      %v2203 = vsel %vm1698, %v2087, 0.0
      %v2204 = vadd.f32 %v2202, %v2203
      %v2205 = vsel %vm1698, %v2090, 0.0
      %v2206 = vadd.f32 %v2204, %v2205
      %v2207 = vsel %vm1698, %v2093, 0.0
      %v2208 = vadd.f32 %v2206, %v2207
      %v2209 = vsel %vm1698, %v2096, 0.0
      %v2210 = vadd.f32 %v2208, %v2209
      %v2211 = vsel %vm1698, %v2099, 0.0
      %v2212 = vadd.f32 %v2210, %v2211
      %v2213 = vsel %vm1698, %v2102, 0.0
      %v2214 = vadd.f32 %v2212, %v2213
      %v2215 = vsel %vm1698, %v2105, 0.0
      %v2216 = vadd.f32 %v2214, %v2215
      %v2217 = vsel %vm1698, %v2108, 0.0
      %v2218 = vadd.f32 %v2216, %v2217
      %v2219 = vsel %vm1698, %v2111, 0.0
      %v2220 = vadd.f32 %v2218, %v2219
      %v2221 = vsel %vm1698, %v2114, 0.0
      %v2222 = vadd.f32 %v2220, %v2221
      %v2223 = vsel %vm1698, %v2117, 0.0
      %v2224 = vadd.f32 %v2222, %v2223
      %v2225 = vsel %vm1698, %v2120, 0.0
      %v2226 = vadd.f32 %v2224, %v2225
      %v2227 = vsel %vm1698, %v2123, 0.0
      %v2228 = vadd.f32 %v2226, %v2227
      %v2229 = vsel %vm1698, %v2126, 0.0
      %v2230 = vadd.f32 %v2228, %v2229
      %v2231 = vsel %vm1698, %v2129, 0.0
      %v2232 = vadd.f32 %v2230, %v2231
      %v2233 = vsel %vm1698, %v2132, 0.0
      %v2234 = vadd.f32 %v2232, %v2233
      %v2235 = vsel %vm1698, %v2135, 0.0
      %v2236 = vadd.f32 %v2234, %v2235
      %v2237 = vsel %vm1698, %v2138, 0.0
      %v2238 = vadd.f32 %v2236, %v2237
      %v2239 = vsel %vm1698, %v2141, 0.0
      %v2240 = vadd.f32 %v2238, %v2239
      %v2241 = vsel %vm1698, %v2144, 0.0
      %v2242 = vadd.f32 %v2240, %v2241
      %v2243 = vsel %vm1698, %v2147, 0.0
      %v2244 = vadd.f32 %v2242, %v2243
      %v2245 = vsel %vm1698, %v2150, 0.0
      %v2246 = vadd.f32 %v2244, %v2245
      %v2247 = vrot.slane %v2246, 4
      %v2248 = vadd.f32 %v2246, %v2247
      %v2249 = vrot.slane %v2248, 2
      %v2250 = vadd.f32 %v2248, %v2249
      %v2251 = vrot.slane %v2250, 1
      %v2252 = vadd.f32 %v2250, %v2251
      %vm2253 = vcmask 57344
      %2254 = vst.msk [vmem:[%s238] sm:$0x1] %vm2253, %v2252
      %v2255 = vmul.f32 %v2057, %v2057
      %v2256 = vmul.f32 %v2060, %v2060
      %v2257 = vmul.f32 %v2063, %v2063
      %v2258 = vmul.f32 %v2066, %v2066
      %v2259 = vmul.f32 %v2069, %v2069
      %v2260 = vmul.f32 %v2072, %v2072
      %v2261 = vmul.f32 %v2075, %v2075
      %v2262 = vmul.f32 %v2078, %v2078
      %v2263 = vmul.f32 %v2081, %v2081
      %v2264 = vmul.f32 %v2084, %v2084
      %v2265 = vmul.f32 %v2087, %v2087
      %v2266 = vmul.f32 %v2090, %v2090
      %v2267 = vmul.f32 %v2093, %v2093
      %v2268 = vmul.f32 %v2096, %v2096
      %v2269 = vmul.f32 %v2099, %v2099
      %v2270 = vmul.f32 %v2102, %v2102
      %v2271 = vmul.f32 %v2105, %v2105
      %v2272 = vmul.f32 %v2108, %v2108
      %v2273 = vmul.f32 %v2111, %v2111
      %v2274 = vmul.f32 %v2114, %v2114
      %v2275 = vmul.f32 %v2117, %v2117
      %v2276 = vmul.f32 %v2120, %v2120
      %v2277 = vmul.f32 %v2123, %v2123
      %v2278 = vmul.f32 %v2126, %v2126
      %v2279 = vmul.f32 %v2129, %v2129
      %v2280 = vmul.f32 %v2132, %v2132
      %v2281 = vmul.f32 %v2135, %v2135
      %v2282 = vmul.f32 %v2138, %v2138
      %v2283 = vmul.f32 %v2141, %v2141
      %v2284 = vmul.f32 %v2144, %v2144
      %v2285 = vmul.f32 %v2147, %v2147
      %v2286 = vmul.f32 %v2150, %v2150
      %v2287 = vsel %vm1698, %v2255, 0.0
      %v2288 = vsel %vm1698, %v2256, 0.0
      %v2289 = vadd.f32 %v2287, %v2288
      %v2290 = vsel %vm1698, %v2257, 0.0
      %v2291 = vadd.f32 %v2289, %v2290
      %v2292 = vsel %vm1698, %v2258, 0.0
      %v2293 = vadd.f32 %v2291, %v2292
      %v2294 = vsel %vm1698, %v2259, 0.0
      %v2295 = vadd.f32 %v2293, %v2294
      %v2296 = vsel %vm1698, %v2260, 0.0
      %v2297 = vadd.f32 %v2295, %v2296
      %v2298 = vsel %vm1698, %v2261, 0.0
      %v2299 = vadd.f32 %v2297, %v2298
      %v2300 = vsel %vm1698, %v2262, 0.0
      %v2301 = vadd.f32 %v2299, %v2300
      %v2302 = vsel %vm1698, %v2263, 0.0
      %v2303 = vadd.f32 %v2301, %v2302
      %v2304 = vsel %vm1698, %v2264, 0.0
      %v2305 = vadd.f32 %v2303, %v2304
      %v2306 = vsel %vm1698, %v2265, 0.0
      %v2307 = vadd.f32 %v2305, %v2306
      %v2308 = vsel %vm1698, %v2266, 0.0
      %v2309 = vadd.f32 %v2307, %v2308
      %v2310 = vsel %vm1698, %v2267, 0.0
      %v2311 = vadd.f32 %v2309, %v2310
      %v2312 = vsel %vm1698, %v2268, 0.0
      %v2313 = vadd.f32 %v2311, %v2312
      %v2314 = vsel %vm1698, %v2269, 0.0
      %v2315 = vadd.f32 %v2313, %v2314
      %v2316 = vsel %vm1698, %v2270, 0.0
      %v2317 = vadd.f32 %v2315, %v2316
      %v2318 = vsel %vm1698, %v2271, 0.0
      %v2319 = vadd.f32 %v2317, %v2318
      %v2320 = vsel %vm1698, %v2272, 0.0
      %v2321 = vadd.f32 %v2319, %v2320
      %v2322 = vsel %vm1698, %v2273, 0.0
      %v2323 = vadd.f32 %v2321, %v2322
      %v2324 = vsel %vm1698, %v2274, 0.0
      %v2325 = vadd.f32 %v2323, %v2324
      %v2326 = vsel %vm1698, %v2275, 0.0
      %v2327 = vadd.f32 %v2325, %v2326
      %v2328 = vsel %vm1698, %v2276, 0.0
      %v2329 = vadd.f32 %v2327, %v2328
      %v2330 = vsel %vm1698, %v2277, 0.0
      %v2331 = vadd.f32 %v2329, %v2330
      %v2332 = vsel %vm1698, %v2278, 0.0
      %v2333 = vadd.f32 %v2331, %v2332
      %v2334 = vsel %vm1698, %v2279, 0.0
      %v2335 = vadd.f32 %v2333, %v2334
      %v2336 = vsel %vm1698, %v2280, 0.0
      %v2337 = vadd.f32 %v2335, %v2336
      %v2338 = vsel %vm1698, %v2281, 0.0
      %v2339 = vadd.f32 %v2337, %v2338
      %v2340 = vsel %vm1698, %v2282, 0.0
      %v2341 = vadd.f32 %v2339, %v2340
      %v2342 = vsel %vm1698, %v2283, 0.0
      %v2343 = vadd.f32 %v2341, %v2342
      %v2344 = vsel %vm1698, %v2284, 0.0
      %v2345 = vadd.f32 %v2343, %v2344
      %v2346 = vsel %vm1698, %v2285, 0.0
      %v2347 = vadd.f32 %v2345, %v2346
      %v2348 = vsel %vm1698, %v2286, 0.0
      %v2349 = vadd.f32 %v2347, %v2348
      %v2350 = vrot.slane %v2349, 4
      %v2351 = vadd.f32 %v2349, %v2350
      %v2352 = vrot.slane %v2351, 2
      %v2353 = vadd.f32 %v2351, %v2352
      %v2354 = vrot.slane %v2353, 1
      %v2355 = vadd.f32 %v2353, %v2354
      %2356 = vst.msk [vmem:[%s241] sm:$0x1] %vm2253, %v2355
      %p2357 = scmp.lt.s32.totalorder %s17, 1
      %s2358 = scalar_select %p2357, %s17, 1
      %s2359 = smul.addr %s2358, 32
      %s2360 = smul.addr %s2359, 8
      %s2361 = scalar_lea.vmem %s3, %s2360
      %p2362 = scmp.lt.s32.totalorder %s17, 1
      %s2363 = scalar_select %p2362, %s17, 1
      %s2364 = scalar_lea.vmem %s4, %s2363
      %p2365 = scmp.lt.s32.totalorder %s17, 1
      %s2366 = scalar_select %p2365, %s17, 1
      %s2367 = scalar_lea.vmem %s5, %s2366
      // Predicated region
      $region33: #{vgg_block_forward.3} parent=31 // pred_check
        %p2368 = pneg %p103
      $region34: #{vgg_block_forward.3} parent=31 // pred_check_branch
        %2370 = sbr.rel (%p2368) target = $region36
      $region35: #{vgg_block_forward.3} parent=31 // pred_region
        _
      $region36: #{vgg_block_forward.3} parent=31 // pred_fallthru
        _
      // Predicated region
      $region37: #{vgg_block_forward.3} parent=31 // pred_check
        %p2371 = pneg %p129
      $region38: #{vgg_block_forward.3} parent=31 // pred_check_branch
        %2373 = sbr.rel (%p2371) target = $region40
      $region39: #{vgg_block_forward.3} parent=31 // pred_region
        _
      $region40: #{vgg_block_forward.3} parent=31 // pred_fallthru
        _
      // Predicated region
      $region41: #{vgg_block_forward.3} parent=31 // pred_check
        %p2374 = pneg %p155
      $region42: #{vgg_block_forward.3} parent=31 // pred_check_branch
        %2376 = sbr.rel (%p2374) target = $region44
      $region43: #{vgg_block_forward.3} parent=31 // pred_region
        _
      $region44: #{vgg_block_forward.3} parent=31 // pred_fallthru
        _
    $region32: #{vgg_block_forward.3} parent=5 // pred_fallthru
      _
    %p2377 = scmp.le.s32.totalorder 2, %s12
    // Predicated region
    $region45: #{vgg_block_forward.3} parent=5 // pred_check
      %p2378 = pneg %p2377
    $region46: #{vgg_block_forward.3} parent=5 // pred_check_branch
      %2380 = sbr.rel (%p2378) target = $region48
    $region47: #{vgg_block_forward.3} parent=5 // pred_region
      %s2381 = ssub.s32 %s12, 2
      // Predicated region
      $region49: #{vgg_block_forward.3} parent=47 // pred_check
        %p2382 = pneg %p109
      $region50: #{vgg_block_forward.3} parent=47 // pred_check_branch
        %2384 = sbr.rel (%p2382) target = $region52
      $region51: #{vgg_block_forward.3} parent=47 // pred_region
        %p2385 = scmp.lt.s32.totalorder %s18, 1
        %s2386 = scalar_select %p2385, %s18, 1
        %s2387 = smul.addr %s2386, 32
        %s2388 = smul.addr %s2387, 8
        %s2389 = scalar_lea.vmem %s3, %s2388
      $region52: #{vgg_block_forward.3} parent=47 // pred_fallthru
        _
      // Predicated region
      $region53: #{vgg_block_forward.3} parent=47 // pred_check
        %p2390 = pneg %p135
      $region54: #{vgg_block_forward.3} parent=47 // pred_check_branch
        %2392 = sbr.rel (%p2390) target = $region56
      $region55: #{vgg_block_forward.3} parent=47 // pred_region
        %p2393 = scmp.lt.s32.totalorder %s18, 1
        %s2394 = scalar_select %p2393, %s18, 1
        %s2395 = scalar_lea.vmem %s4, %s2394
      $region56: #{vgg_block_forward.3} parent=47 // pred_fallthru
        _
      // Predicated region
      $region57: #{vgg_block_forward.3} parent=47 // pred_check
        %p2396 = pneg %p161
      $region58: #{vgg_block_forward.3} parent=47 // pred_check_branch
        %2398 = sbr.rel (%p2396) target = $region60
      $region59: #{vgg_block_forward.3} parent=47 // pred_region
        %p2399 = scmp.lt.s32.totalorder %s18, 1
        %s2400 = scalar_select %p2399, %s18, 1
        %s2401 = scalar_lea.vmem %s5, %s2400
      $region60: #{vgg_block_forward.3} parent=47 // pred_fallthru
        _
    $region48: #{vgg_block_forward.3} parent=5 // pred_fallthru
      _
  $region6: #{vgg_block_forward.3} parent=0 // loop_footer
    %s16 = sadd.s32 1, %s12
  $region7: #{vgg_block_forward.3} parent=0 // loop_footer_branch
    %11 = sbr.rel target = $region3
  $region8: #{vgg_block_forward.3} parent=0 // loop_exit
    _

// kernel: vgg_block_forward.4
$region0: #{vgg_block_forward.4}
  #allocation0 [shape = 'u32[]', space=smem, size = 0x4, offset = 0x4, fixed_abs, tag = 'smem constant byte address 0x4 - core index']
  #allocation1 [shape = 'u32[72,128]{1,0:T(1,128)}', space=vmem, size = 0x9000, scoped, tag = 'internal scratch']
  #allocation2 [shape = 'f32[18,18,8]{2,1,0:T(8,128)}', space=vmem, size = 0x36000, scoped, tag = 'scratch operand']
  %s0 = inlined_call_operand.vmem [shape: f32[2,16,16,8], index: 0, kind: input, shape index: {}]
  %s1 = inlined_call_operand.vmem [shape: f32[1,1,8], index: 1, kind: input, shape index: {}]
  %s2 = inlined_call_operand.vmem [shape: f32[1,1,8], index: 2, kind: input, shape index: {}]
  %s3 = inlined_call_operand.vmem [shape: f32[72,8], index: 3, kind: input, shape index: {}]
  %s4 = inlined_call_operand.vmem [shape: f32[1,8], index: 4, kind: input, shape index: {}]
  %s5 = inlined_call_operand.vmem [shape: f32[2,16,16,8], index: 5, kind: output, shape index: {0}]
  %s6 = inlined_call_operand.vmem [shape: f32[2,1,8], index: 6, kind: output, shape index: {1}]
  %s7 = inlined_call_operand.vmem [shape: f32[2,1,8], index: 7, kind: output, shape index: {2}]
  %8 = xla_tuple %s5, %s6, %s7
  %s9 = sld [smem:[#allocation0]]
  $region69: #{vgg_block_forward.4} parent=0
    _
  %s11 = ssub.s32 1, %s9
  %s12 = scalar_select 0, %s11, %s9
  loop: start=0, step=1, limit=4
  $region2: #{vgg_block_forward.4} parent=0 // loop_pre_header
    _
  $region3: #{vgg_block_forward.4} parent=0 // loop_header
    %s14 = sphi 0, %s18
    %p15 = scmp.ge.s32.totalorder %s14, 4
    %s24 = sphi 0, %s26
    %s27 = sphi 0, %s24
    %s28 = sphi 0, %s27
    %s44 = sphi 0, %s28
    %s48 = sphi 0, %s48
    %s50 = sphi 0, %s48
    %s51 = sphi 0, %s50
    %s65 = sphi 0, %s51
    %s69 = sphi 0, %s69
    %s71 = sphi 0, %s69
    %s72 = sphi 0, %s71
    %s86 = sphi 0, %s72
    %s90 = sphi 0, %s90
    %s92 = sphi 0, %s90
    %s93 = sphi 0, %s92
    %s107 = sphi 0, %s93
    %s111 = sphi 0, %s111
    %s113 = sphi 0, %s111
    %s114 = sphi 0, %s113
    %s128 = sphi 0, %s114
    %s134 = sphi 0, %s136
    %s137 = sphi 0, %s134
    %s138 = sphi 0, %s137
    %s154 = sphi 0, %s138
    %s160 = sphi 0, %s162
    %s163 = sphi 0, %s160
    %s164 = sphi 0, %s163
    %s180 = sphi 0, %s164
    %s186 = sphi 0, %s188
    %s189 = sphi 0, %s186
    %s190 = sphi 0, %s189
    %s206 = sphi 0, %s190
  $region4: #{vgg_block_forward.4} parent=0 // loop_header_branch
    %17 = sbr.rel (%p15) target = $region8
  $region5: #{vgg_block_forward.4} parent=0 // loop_body
    %s19 = ssub.s32 %s14, 1
    %s20 = ssub.s32 %s14, 2
    %s21 = sadd.s32 %s14, 1
    %s22 = ssub.s32 %s14, %s21
    %p23 = scmp.eq.s32.totalorder %s22, 0
    %s25 = sadd.s32 %s24, 1
    %s26 = scalar_select %p23, %s24, %s25
    %p29 = pneg %p23
    %p30 = scmp.eq.s32.totalorder %s14, 1
    %p31 = por %p29, %p30
    %p32 = scmp.ne.s32.totalorder %s24, %s27
    %p33 = scmp.eq.s32.totalorder %s14, 0
    %p34 = por %p32, %p33
    %p35 = scmp.ne.s32.totalorder %s24, %s27
    %p36 = scmp.eq.s32.totalorder %s19, 1
    %p37 = por %p35, %p36
    %p38 = scmp.ne.s32.totalorder %s27, %s28
    %p39 = scmp.eq.s32.totalorder %s19, 0
    %p40 = por %p38, %p39
    %p41 = scmp.ne.s32.totalorder %s27, %s28
    %p42 = scmp.eq.s32.totalorder %s20, 1
    %p43 = por %p41, %p42
    %p45 = scmp.ne.s32.totalorder %s28, %s44
    %p46 = scmp.eq.s32.totalorder %s20, 0
    %p47 = por %p45, %p46
    %s49 = sadd.s32 %s48, 1
    %p52 = scmp.eq.s32.totalorder %s14, 1
    %p53 = scmp.ne.s32.totalorder %s48, %s50
    %p54 = scmp.eq.s32.totalorder %s14, 0
    %p55 = por %p53, %p54
    %p56 = scmp.ne.s32.totalorder %s48, %s50
    %p57 = scmp.eq.s32.totalorder %s19, 1
    %p58 = por %p56, %p57
    %p59 = scmp.ne.s32.totalorder %s50, %s51
    %p60 = scmp.eq.s32.totalorder %s19, 0
    %p61 = por %p59, %p60
    %p62 = scmp.ne.s32.totalorder %s50, %s51
    %p63 = scmp.eq.s32.totalorder %s20, 1
    %p64 = por %p62, %p63
    %p66 = scmp.ne.s32.totalorder %s51, %s65
    %p67 = scmp.eq.s32.totalorder %s20, 0
    %p68 = por %p66, %p67
    %s70 = sadd.s32 %s69, 1
    %p73 = scmp.eq.s32.totalorder %s14, 1
    %p74 = scmp.ne.s32.totalorder %s69, %s71
    %p75 = scmp.eq.s32.totalorder %s14, 0
    %p76 = por %p74, %p75
    %p77 = scmp.ne.s32.totalorder %s69, %s71
    %p78 = scmp.eq.s32.totalorder %s19, 1
    %p79 = por %p77, %p78
    %p80 = scmp.ne.s32.totalorder %s71, %s72
    %p81 = scmp.eq.s32.totalorder %s19, 0
    %p82 = por %p80, %p81
    %p83 = scmp.ne.s32.totalorder %s71, %s72
    %p84 = scmp.eq.s32.totalorder %s20, 1
    %p85 = por %p83, %p84
    %p87 = scmp.ne.s32.totalorder %s72, %s86
    %p88 = scmp.eq.s32.totalorder %s20, 0
    %p89 = por %p87, %p88
    %s91 = sadd.s32 %s90, 1
    %p94 = scmp.eq.s32.totalorder %s14, 1
    %p95 = scmp.ne.s32.totalorder %s90, %s92
    %p96 = scmp.eq.s32.totalorder %s14, 0
    %p97 = por %p95, %p96
    %p98 = scmp.ne.s32.totalorder %s90, %s92
    %p99 = scmp.eq.s32.totalorder %s19, 1
    %p100 = por %p98, %p99
    %p101 = scmp.ne.s32.totalorder %s92, %s93
    %p102 = scmp.eq.s32.totalorder %s19, 0
    %p103 = por %p101, %p102
    %p104 = scmp.ne.s32.totalorder %s92, %s93
    %p105 = scmp.eq.s32.totalorder %s20, 1
    %p106 = por %p104, %p105
    %p108 = scmp.ne.s32.totalorder %s93, %s107
    %p109 = scmp.eq.s32.totalorder %s20, 0
    %p110 = por %p108, %p109
    %s112 = sadd.s32 %s111, 1
    %p115 = scmp.eq.s32.totalorder %s14, 1
    %p116 = scmp.ne.s32.totalorder %s111, %s113
    %p117 = scmp.eq.s32.totalorder %s14, 0
    %p118 = por %p116, %p117
    %p119 = scmp.ne.s32.totalorder %s111, %s113
    %p120 = scmp.eq.s32.totalorder %s19, 1
    %p121 = por %p119, %p120
    %p122 = scmp.ne.s32.totalorder %s113, %s114
    %p123 = scmp.eq.s32.totalorder %s19, 0
    %p124 = por %p122, %p123
    %p125 = scmp.ne.s32.totalorder %s113, %s114
    %p126 = scmp.eq.s32.totalorder %s20, 1
    %p127 = por %p125, %p126
    %p129 = scmp.ne.s32.totalorder %s114, %s128
    %p130 = scmp.eq.s32.totalorder %s20, 0
    %p131 = por %p129, %p130
    %s132 = ssub.s32 %s14, %s21
    %p133 = scmp.eq.s32.totalorder %s132, 0
    %s135 = sadd.s32 %s134, 1
    %s136 = scalar_select %p133, %s134, %s135
    %p139 = pneg %p133
    %p140 = scmp.eq.s32.totalorder %s14, 1
    %p141 = por %p139, %p140
    %p142 = scmp.ne.s32.totalorder %s134, %s137
    %p143 = scmp.eq.s32.totalorder %s14, 0
    %p144 = por %p142, %p143
    %p145 = scmp.ne.s32.totalorder %s134, %s137
    %p146 = scmp.eq.s32.totalorder %s19, 1
    %p147 = por %p145, %p146
    %p148 = scmp.ne.s32.totalorder %s137, %s138
    %p149 = scmp.eq.s32.totalorder %s19, 0
    %p150 = por %p148, %p149
    %p151 = scmp.ne.s32.totalorder %s137, %s138
    %p152 = scmp.eq.s32.totalorder %s20, 1
    %p153 = por %p151, %p152
    %p155 = scmp.ne.s32.totalorder %s138, %s154
    %p156 = scmp.eq.s32.totalorder %s20, 0
    %p157 = por %p155, %p156
    %s158 = ssub.s32 %s14, %s21
    %p159 = scmp.eq.s32.totalorder %s158, 0
    %s161 = sadd.s32 %s160, 1
    %s162 = scalar_select %p159, %s160, %s161
    %p165 = pneg %p159
    %p166 = scmp.eq.s32.totalorder %s14, 1
    %p167 = por %p165, %p166
    %p168 = scmp.ne.s32.totalorder %s160, %s163
    %p169 = scmp.eq.s32.totalorder %s14, 0
    %p170 = por %p168, %p169
    %p171 = scmp.ne.s32.totalorder %s160, %s163
    %p172 = scmp.eq.s32.totalorder %s19, 1
    %p173 = por %p171, %p172
    %p174 = scmp.ne.s32.totalorder %s163, %s164
    %p175 = scmp.eq.s32.totalorder %s19, 0
    %p176 = por %p174, %p175
    %p177 = scmp.ne.s32.totalorder %s163, %s164
    %p178 = scmp.eq.s32.totalorder %s20, 1
    %p179 = por %p177, %p178
    %p181 = scmp.ne.s32.totalorder %s164, %s180
    %p182 = scmp.eq.s32.totalorder %s20, 0
    %p183 = por %p181, %p182
    %s184 = ssub.s32 %s14, %s21
    %p185 = scmp.eq.s32.totalorder %s184, 0
    %s187 = sadd.s32 %s186, 1
    %s188 = scalar_select %p185, %s186, %s187
    %p191 = pneg %p185
    %p192 = scmp.eq.s32.totalorder %s14, 1
    %p193 = por %p191, %p192
    %p194 = scmp.ne.s32.totalorder %s186, %s189
    %p195 = scmp.eq.s32.totalorder %s14, 0
    %p196 = por %p194, %p195
    %p197 = scmp.ne.s32.totalorder %s186, %s189
    %p198 = scmp.eq.s32.totalorder %s19, 1
    %p199 = por %p197, %p198
    %p200 = scmp.ne.s32.totalorder %s189, %s190
    %p201 = scmp.eq.s32.totalorder %s19, 0
    %p202 = por %p200, %p201
    %p203 = scmp.ne.s32.totalorder %s189, %s190
    %p204 = scmp.eq.s32.totalorder %s20, 1
    %p205 = por %p203, %p204
    %p207 = scmp.ne.s32.totalorder %s190, %s206
    %p208 = scmp.eq.s32.totalorder %s20, 0
    %p209 = por %p207, %p208
    %p210 = scmp.le.s32.totalorder 1, %s14
    %p211 = scmp.lt.s32.totalorder %s14, 3
    %p212 = pnand %p210, %p211
    %p213 = pneg %p212
    // Predicated region
    $region9: #{vgg_block_forward.4} parent=5 // pred_check
      _
    $region10: #{vgg_block_forward.4} parent=5 // pred_check_branch
      %215 = sbr.rel (%p212) target = $region12
    $region11: #{vgg_block_forward.4} parent=5 // pred_region
      %s216 = ssub.s32 %s14, 1
      // Predicated region
      $region13: #{vgg_block_forward.4} parent=11 // pred_check
        %p217 = pneg %p61
      $region14: #{vgg_block_forward.4} parent=11 // pred_check_branch
        %219 = sbr.rel (%p217) target = $region16
      $region15: #{vgg_block_forward.4} parent=11 // pred_region
        _
      $region16: #{vgg_block_forward.4} parent=11 // pred_fallthru
        _
      // Predicated region
      $region17: #{vgg_block_forward.4} parent=11 // pred_check
        %p220 = pneg %p82
      $region18: #{vgg_block_forward.4} parent=11 // pred_check_branch
        %222 = sbr.rel (%p220) target = $region20
      $region19: #{vgg_block_forward.4} parent=11 // pred_region
        _
      $region20: #{vgg_block_forward.4} parent=11 // pred_fallthru
        _
      // Predicated region
      $region21: #{vgg_block_forward.4} parent=11 // pred_check
        %p223 = pneg %p103
      $region22: #{vgg_block_forward.4} parent=11 // pred_check_branch
        %225 = sbr.rel (%p223) target = $region24
      $region23: #{vgg_block_forward.4} parent=11 // pred_region
        _
      $region24: #{vgg_block_forward.4} parent=11 // pred_fallthru
        _
      // Predicated region
      $region25: #{vgg_block_forward.4} parent=11 // pred_check
        %p226 = pneg %p124
      $region26: #{vgg_block_forward.4} parent=11 // pred_check_branch
        %228 = sbr.rel (%p226) target = $region28
      $region27: #{vgg_block_forward.4} parent=11 // pred_region
        _
      $region28: #{vgg_block_forward.4} parent=11 // pred_fallthru
        _
    $region12: #{vgg_block_forward.4} parent=5 // pred_fallthru
      _
    %p229 = scmp.lt.s32.totalorder %s14, 2
    // Predicated region
    $region29: #{vgg_block_forward.4} parent=5 // pred_check
      %p230 = pneg %p229
    $region30: #{vgg_block_forward.4} parent=5 // pred_check_branch
      %232 = sbr.rel (%p230) target = $region32
    $region31: #{vgg_block_forward.4} parent=5 // pred_region
      // Predicated region
      $region33: #{vgg_block_forward.4} parent=31 // pred_check
        %p233 = pneg %p34
      $region34: #{vgg_block_forward.4} parent=31 // pred_check_branch
        %235 = sbr.rel (%p233) target = $region36
      $region35: #{vgg_block_forward.4} parent=31 // pred_region
        %p236 = scmp.lt.s32.totalorder %s14, 1
        %s237 = scalar_select %p236, %s14, 1
        %s238 = smul.addr %s237, 32
        %s239 = smul.addr %s238, 8
        %s240 = scalar_lea.vmem %s0, %s239
      $region36: #{vgg_block_forward.4} parent=31 // pred_fallthru
        _
    $region32: #{vgg_block_forward.4} parent=5 // pred_fallthru
      _
    %p241 = scmp.le.s32.totalorder 1, %s14
    %p242 = scmp.lt.s32.totalorder %s14, 3
    %p243 = pnand %p241, %p242
    %p244 = pneg %p243
    // Predicated region
    $region37: #{vgg_block_forward.4} parent=5 // pred_check
      _
    $region38: #{vgg_block_forward.4} parent=5 // pred_check_branch
      %246 = sbr.rel (%p243) target = $region40
    $region39: #{vgg_block_forward.4} parent=5 // pred_region
      %s247 = ssub.s32 %s14, 1
      %p248 = scmp.lt.s32.totalorder %s19, 1
      %s249 = scalar_select %p248, %s19, 1
      %s250 = smul.addr %s249, 32
      %s251 = smul.addr %s250, 8
      %s252 = scalar_lea.vmem %s0, %s251
      %p253 = pneg %p40
      %p254 = pneg %p37
      %p255 = pneg %p61
      %p256 = pneg %p58
      %p257 = pneg %p82
      %p258 = pneg %p79
      %p259 = pneg %p103
      %p260 = pneg %p100
      %p261 = pneg %p124
      %p262 = pneg %p121
      %p263 = pneg %p150
      %p264 = pneg %p147
      %p265 = scmp.lt.s32.totalorder %s19, 1
      %s266 = scalar_select %p265, %s19, 1
      %s267 = smul.addr %s266, 32
      %s268 = smul.addr %s267, 8
      %s269 = scalar_lea.vmem %s5, %s268
      %p270 = pneg %p176
      %p271 = pneg %p173
      %p272 = scmp.lt.s32.totalorder %s19, 1
      %s273 = scalar_select %p272, %s19, 1
      %s274 = scalar_lea.vmem %s6, %s273
      %p275 = pneg %p202
      %p276 = pneg %p199
      %p277 = scmp.lt.s32.totalorder %s19, 1
      %s278 = scalar_select %p277, %s19, 1
      %s279 = scalar_lea.vmem %s7, %s278
      %p280 = scmp.lt.s32.totalorder %s19, 1
      %s281 = scalar_select %p280, %s19, 1
      %s282 = smul.addr %s281, 32
      %s283 = smul.addr %s282, 8
      %s284 = scalar_lea.vmem %s0, %s283
      %p285 = scmp.lt.s32.totalorder %s19, 1
      %s286 = scalar_select %p285, %s19, 1
      %s287 = smul.addr %s286, 32
      %s288 = smul.addr %s287, 8
      %s289 = scalar_lea.vmem %s5, %s288
      %p290 = scmp.lt.s32.totalorder %s19, 1
      %s291 = scalar_select %p290, %s19, 1
      %s292 = scalar_lea.vmem %s6, %s291
      %p293 = scmp.lt.s32.totalorder %s19, 1
      %s294 = scalar_select %p293, %s19, 1
      %s295 = scalar_lea.vmem %s7, %s294
      %v296 = vld [vmem:[%s284] sm:$0xff]
      %v297 = vld [vmem:[%s284 + $0x8] sm:$0xff]
      %v298 = vld [vmem:[%s284 + $0x10] sm:$0xff]
      %v299 = vld [vmem:[%s284 + $0x18] sm:$0xff]
      %v300 = vld [vmem:[%s284 + $0x20] sm:$0xff]
      %v301 = vld [vmem:[%s284 + $0x28] sm:$0xff]
      %v302 = vld [vmem:[%s284 + $0x30] sm:$0xff]
      %v303 = vld [vmem:[%s284 + $0x38] sm:$0xff]
      %v304 = vld [vmem:[%s284 + $0x40] sm:$0xff]
      %v305 = vld [vmem:[%s284 + $0x48] sm:$0xff]
      %v306 = vld [vmem:[%s284 + $0x50] sm:$0xff]
      %v307 = vld [vmem:[%s284 + $0x58] sm:$0xff]
      %v308 = vld [vmem:[%s284 + $0x60] sm:$0xff]
      %v309 = vld [vmem:[%s284 + $0x68] sm:$0xff]
      %v310 = vld [vmem:[%s284 + $0x70] sm:$0xff]
      %v311 = vld [vmem:[%s284 + $0x78] sm:$0xff]
      %v312 = vld [vmem:[%s284 + $0x80] sm:$0xff]
      %v313 = vld [vmem:[%s284 + $0x88] sm:$0xff]
      %v314 = vld [vmem:[%s284 + $0x90] sm:$0xff]
      %v315 = vld [vmem:[%s284 + $0x98] sm:$0xff]
      %v316 = vld [vmem:[%s284 + $0xa0] sm:$0xff]
      %v317 = vld [vmem:[%s284 + $0xa8] sm:$0xff]
      %v318 = vld [vmem:[%s284 + $0xb0] sm:$0xff]
      %v319 = vld [vmem:[%s284 + $0xb8] sm:$0xff]
      %v320 = vld [vmem:[%s284 + $0xc0] sm:$0xff]
      %v321 = vld [vmem:[%s284 + $0xc8] sm:$0xff]
      %v322 = vld [vmem:[%s284 + $0xd0] sm:$0xff]
      %v323 = vld [vmem:[%s284 + $0xd8] sm:$0xff]
      %v324 = vld [vmem:[%s284 + $0xe0] sm:$0xff]
      %v325 = vld [vmem:[%s284 + $0xe8] sm:$0xff]
      %v326 = vld [vmem:[%s284 + $0xf0] sm:$0xff]
      %v327 = vld [vmem:[%s284 + $0xf8] sm:$0xff]
      %v328 = vld [vmem:[%s1] sm:$0x1]
      %v330 = vperm.slane %v328, 0
      %v332 = vmul.f32 %v296, %v330
      %v333 = vmul.f32 %v297, %v330
      %v334 = vmul.f32 %v298, %v330
      %v335 = vmul.f32 %v299, %v330
      %v336 = vmul.f32 %v300, %v330
      %v337 = vmul.f32 %v301, %v330
      %v338 = vmul.f32 %v302, %v330
      %v339 = vmul.f32 %v303, %v330
      %v340 = vmul.f32 %v304, %v330
      %v341 = vmul.f32 %v305, %v330
      %v342 = vmul.f32 %v306, %v330
      %v343 = vmul.f32 %v307, %v330
      %v344 = vmul.f32 %v308, %v330
      %v345 = vmul.f32 %v309, %v330
      %v346 = vmul.f32 %v310, %v330
      %v347 = vmul.f32 %v311, %v330
      %v348 = vmul.f32 %v312, %v330
      %v349 = vmul.f32 %v313, %v330
      %v350 = vmul.f32 %v314, %v330
      %v351 = vmul.f32 %v315, %v330
      %v352 = vmul.f32 %v316, %v330
      %v353 = vmul.f32 %v317, %v330
      %v354 = vmul.f32 %v318, %v330
      %v355 = vmul.f32 %v319, %v330
      %v356 = vmul.f32 %v320, %v330
      %v357 = vmul.f32 %v321, %v330
      %v358 = vmul.f32 %v322, %v330
      %v359 = vmul.f32 %v323, %v330
      %v360 = vmul.f32 %v324, %v330
      %v361 = vmul.f32 %v325, %v330
      %v362 = vmul.f32 %v326, %v330
      %v363 = vmul.f32 %v327, %v330
      %v364 = vld [vmem:[%s2] sm:$0x1]
      %v366 = vperm.slane %v364, 0
      %v368 = vadd.f32 %v332, %v366
      %v369 = vadd.f32 %v333, %v366
      %v370 = vadd.f32 %v334, %v366
      %v371 = vadd.f32 %v335, %v366
      %v372 = vadd.f32 %v336, %v366
      %v373 = vadd.f32 %v337, %v366
      %v374 = vadd.f32 %v338, %v366
      %v375 = vadd.f32 %v339, %v366
      %v376 = vadd.f32 %v340, %v366
      %v377 = vadd.f32 %v341, %v366
      %v378 = vadd.f32 %v342, %v366
      %v379 = vadd.f32 %v343, %v366
      %v380 = vadd.f32 %v344, %v366
      %v381 = vadd.f32 %v345, %v366
      %v382 = vadd.f32 %v346, %v366
      %v383 = vadd.f32 %v347, %v366
      %v384 = vadd.f32 %v348, %v366
      %v385 = vadd.f32 %v349, %v366
      %v386 = vadd.f32 %v350, %v366
      %v387 = vadd.f32 %v351, %v366
      %v388 = vadd.f32 %v352, %v366
      %v389 = vadd.f32 %v353, %v366
      %v390 = vadd.f32 %v354, %v366
      %v391 = vadd.f32 %v355, %v366
      %v392 = vadd.f32 %v356, %v366
      %v393 = vadd.f32 %v357, %v366
      %v394 = vadd.f32 %v358, %v366
      %v395 = vadd.f32 %v359, %v366
      %v396 = vadd.f32 %v360, %v366
      %v397 = vadd.f32 %v361, %v366
      %v398 = vadd.f32 %v362, %v366
      %v399 = vadd.f32 %v363, %v366
      %v400 = vmax.f32 %v368, 0.0
      %v401 = vmax.f32 %v369, 0.0
      %v402 = vmax.f32 %v370, 0.0
      %v403 = vmax.f32 %v371, 0.0
      %v404 = vmax.f32 %v372, 0.0
      %v405 = vmax.f32 %v373, 0.0
      %v406 = vmax.f32 %v374, 0.0
      %v407 = vmax.f32 %v375, 0.0
      %v408 = vmax.f32 %v376, 0.0
      %v409 = vmax.f32 %v377, 0.0
      %v410 = vmax.f32 %v378, 0.0
      %v411 = vmax.f32 %v379, 0.0
      %v412 = vmax.f32 %v380, 0.0
      %v413 = vmax.f32 %v381, 0.0
      %v414 = vmax.f32 %v382, 0.0
      %v415 = vmax.f32 %v383, 0.0
      %v416 = vmax.f32 %v384, 0.0
      %v417 = vmax.f32 %v385, 0.0
      %v418 = vmax.f32 %v386, 0.0
      %v419 = vmax.f32 %v387, 0.0
      %v420 = vmax.f32 %v388, 0.0
      %v421 = vmax.f32 %v389, 0.0
      %v422 = vmax.f32 %v390, 0.0
      %v423 = vmax.f32 %v391, 0.0
      %v424 = vmax.f32 %v392, 0.0
      %v425 = vmax.f32 %v393, 0.0
      %v426 = vmax.f32 %v394, 0.0
      %v427 = vmax.f32 %v395, 0.0
      %v428 = vmax.f32 %v396, 0.0
      %v429 = vmax.f32 %v397, 0.0
      %v430 = vmax.f32 %v398, 0.0
      %v431 = vmax.f32 %v399, 0.0
      %vm432 = vcmask 64512
      %433 = vst.msk [vmem:[#allocation2] sm:$0xff] %vm432, 0.0
      %434 = vst.msk [vmem:[#allocation2 + $0x8] sm:$0xff] %vm432, 0.0
      %vm435 = vcmask 58368
      %436 = vst.msk [vmem:[#allocation2 + $0x10] sm:$0x3] %vm435, 0.0
      %s437 = scalar_lea.vmem [#allocation2], 408
      %438 = vst.msk [vmem:[%s437] sm:$0xff] %vm432, 0.0
      %439 = vst.msk [vmem:[%s437 + $0x8] sm:$0xff] %vm432, 0.0
      %440 = vst.msk [vmem:[%s437 + $0x10] sm:$0x3] %vm435, 0.0
      %vm441 = vcmask 57344
      %442 = vst.msk [vmem:[#allocation2] sm:$0x1] %vm441, 0.0
      %443 = vst.msk [vmem:[#allocation2 + $0x18] sm:$0x1] %vm441, 0.0
      %444 = vst.msk [vmem:[#allocation2 + $0x30] sm:$0x1] %vm441, 0.0
      %445 = vst.msk [vmem:[#allocation2 + $0x48] sm:$0x1] %vm441, 0.0
      %446 = vst.msk [vmem:[#allocation2 + $0x60] sm:$0x1] %vm441, 0.0
      %447 = vst.msk [vmem:[#allocation2 + $0x78] sm:$0x1] %vm441, 0.0
      %448 = vst.msk [vmem:[#allocation2 + $0x90] sm:$0x1] %vm441, 0.0
      %449 = vst.msk [vmem:[#allocation2 + $0xa8] sm:$0x1] %vm441, 0.0
      %450 = vst.msk [vmem:[#allocation2 + $0xc0] sm:$0x1] %vm441, 0.0
      %451 = vst.msk [vmem:[#allocation2 + $0xd8] sm:$0x1] %vm441, 0.0
      %452 = vst.msk [vmem:[#allocation2 + $0xf0] sm:$0x1] %vm441, 0.0
      %453 = vst.msk [vmem:[#allocation2 + $0x108] sm:$0x1] %vm441, 0.0
      %454 = vst.msk [vmem:[#allocation2 + $0x120] sm:$0x1] %vm441, 0.0
      %455 = vst.msk [vmem:[#allocation2 + $0x138] sm:$0x1] %vm441, 0.0
      %456 = vst.msk [vmem:[#allocation2 + $0x150] sm:$0x1] %vm441, 0.0
      %457 = vst.msk [vmem:[#allocation2 + $0x168] sm:$0x1] %vm441, 0.0
      %458 = vst.msk [vmem:[#allocation2 + $0x180] sm:$0x1] %vm441, 0.0
      %459 = vst.msk [vmem:[#allocation2 + $0x198] sm:$0x1] %vm441, 0.0
      %460 = vst.msk [vmem:[#allocation2 + $0x11] sm:$0x1] %vm441, 0.0
      %461 = vst.msk [vmem:[#allocation2 + $0x29] sm:$0x1] %vm441, 0.0
      %462 = vst.msk [vmem:[#allocation2 + $0x41] sm:$0x1] %vm441, 0.0
      %463 = vst.msk [vmem:[#allocation2 + $0x59] sm:$0x1] %vm441, 0.0
      %464 = vst.msk [vmem:[#allocation2 + $0x71] sm:$0x1] %vm441, 0.0
      %465 = vst.msk [vmem:[#allocation2 + $0x89] sm:$0x1] %vm441, 0.0
      %466 = vst.msk [vmem:[#allocation2 + $0xa1] sm:$0x1] %vm441, 0.0
      %467 = vst.msk [vmem:[#allocation2 + $0xb9] sm:$0x1] %vm441, 0.0
      %468 = vst.msk [vmem:[#allocation2 + $0xd1] sm:$0x1] %vm441, 0.0
      %469 = vst.msk [vmem:[#allocation2 + $0xe9] sm:$0x1] %vm441, 0.0
      %470 = vst.msk [vmem:[#allocation2 + $0x101] sm:$0x1] %vm441, 0.0
      %471 = vst.msk [vmem:[#allocation2 + $0x119] sm:$0x1] %vm441, 0.0
      %472 = vst.msk [vmem:[#allocation2 + $0x131] sm:$0x1] %vm441, 0.0
      %473 = vst.msk [vmem:[#allocation2 + $0x149] sm:$0x1] %vm441, 0.0
      %474 = vst.msk [vmem:[#allocation2 + $0x161] sm:$0x1] %vm441, 0.0
      %475 = vst.msk [vmem:[#allocation2 + $0x179] sm:$0x1] %vm441, 0.0
      %476 = vst.msk [vmem:[#allocation2 + $0x191] sm:$0x1] %vm441, 0.0
      %477 = vst.msk [vmem:[#allocation2 + $0x1a9] sm:$0x1] %vm441, 0.0
      %s478 = scalar_lea.vmem [#allocation2], 24
      %479 = vst.msk [vmem:[%s478 + $0x1] sm:$0xff] %vm432, %v400
      %480 = vst.msk [vmem:[%s478 + $0x9] sm:$0xff] %vm432, %v401
      %481 = vst.msk [vmem:[%s478 + $0x19] sm:$0xff] %vm432, %v402
      %482 = vst.msk [vmem:[%s478 + $0x21] sm:$0xff] %vm432, %v403
      %483 = vst.msk [vmem:[%s478 + $0x31] sm:$0xff] %vm432, %v404
      %484 = vst.msk [vmem:[%s478 + $0x39] sm:$0xff] %vm432, %v405
      %485 = vst.msk [vmem:[%s478 + $0x49] sm:$0xff] %vm432, %v406
      %486 = vst.msk [vmem:[%s478 + $0x51] sm:$0xff] %vm432, %v407
      %487 = vst.msk [vmem:[%s478 + $0x61] sm:$0xff] %vm432, %v408
      %488 = vst.msk [vmem:[%s478 + $0x69] sm:$0xff] %vm432, %v409
      %489 = vst.msk [vmem:[%s478 + $0x79] sm:$0xff] %vm432, %v410
      %490 = vst.msk [vmem:[%s478 + $0x81] sm:$0xff] %vm432, %v411
      %491 = vst.msk [vmem:[%s478 + $0x91] sm:$0xff] %vm432, %v412
      %492 = vst.msk [vmem:[%s478 + $0x99] sm:$0xff] %vm432, %v413
      %493 = vst.msk [vmem:[%s478 + $0xa9] sm:$0xff] %vm432, %v414
      %494 = vst.msk [vmem:[%s478 + $0xb1] sm:$0xff] %vm432, %v415
      %495 = vst.msk [vmem:[%s478 + $0xc1] sm:$0xff] %vm432, %v416
      %496 = vst.msk [vmem:[%s478 + $0xc9] sm:$0xff] %vm432, %v417
      %497 = vst.msk [vmem:[%s478 + $0xd9] sm:$0xff] %vm432, %v418
      %498 = vst.msk [vmem:[%s478 + $0xe1] sm:$0xff] %vm432, %v419
      %499 = vst.msk [vmem:[%s478 + $0xf1] sm:$0xff] %vm432, %v420
      %500 = vst.msk [vmem:[%s478 + $0xf9] sm:$0xff] %vm432, %v421
      %501 = vst.msk [vmem:[%s478 + $0x109] sm:$0xff] %vm432, %v422
      %502 = vst.msk [vmem:[%s478 + $0x111] sm:$0xff] %vm432, %v423
      %503 = vst.msk [vmem:[%s478 + $0x121] sm:$0xff] %vm432, %v424
      %504 = vst.msk [vmem:[%s478 + $0x129] sm:$0xff] %vm432, %v425
      %505 = vst.msk [vmem:[%s478 + $0x139] sm:$0xff] %vm432, %v426
      %506 = vst.msk [vmem:[%s478 + $0x141] sm:$0xff] %vm432, %v427
      %507 = vst.msk [vmem:[%s478 + $0x151] sm:$0xff] %vm432, %v428
      %508 = vst.msk [vmem:[%s478 + $0x159] sm:$0xff] %vm432, %v429
      %509 = vst.msk [vmem:[%s478 + $0x169] sm:$0xff] %vm432, %v430
      %510 = vst.msk [vmem:[%s478 + $0x171] sm:$0xff] %vm432, %v431
      %v511 = vld [vmem:[#allocation2] sm:$0xff]
      %v512 = vld [vmem:[#allocation2 + $0x8] sm:$0xff]
      %v513 = vld [vmem:[#allocation2 + $0x18] sm:$0xff]
      %v514 = vld [vmem:[#allocation2 + $0x20] sm:$0xff]
      %v515 = vld [vmem:[#allocation2 + $0x30] sm:$0xff]
      %v516 = vld [vmem:[#allocation2 + $0x38] sm:$0xff]
      %v517 = vld [vmem:[#allocation2 + $0x48] sm:$0xff]
      %v518 = vld [vmem:[#allocation2 + $0x50] sm:$0xff]
      %v519 = vld [vmem:[#allocation2 + $0x60] sm:$0xff]
      %v520 = vld [vmem:[#allocation2 + $0x68] sm:$0xff]
      %v521 = vld [vmem:[#allocation2 + $0x78] sm:$0xff]
      %v522 = vld [vmem:[#allocation2 + $0x80] sm:$0xff]
      %v523 = vld [vmem:[#allocation2 + $0x90] sm:$0xff]
      %v524 = vld [vmem:[#allocation2 + $0x98] sm:$0xff]
      %v525 = vld [vmem:[#allocation2 + $0xa8] sm:$0xff]
      %v526 = vld [vmem:[#allocation2 + $0xb0] sm:$0xff]
      %v527 = vld [vmem:[#allocation2 + $0xc0] sm:$0xff]
      %v528 = vld [vmem:[#allocation2 + $0xc8] sm:$0xff]
      %v529 = vld [vmem:[#allocation2 + $0xd8] sm:$0xff]
      %v530 = vld [vmem:[#allocation2 + $0xe0] sm:$0xff]
      %v531 = vld [vmem:[#allocation2 + $0xf0] sm:$0xff]
      %v532 = vld [vmem:[#allocation2 + $0xf8] sm:$0xff]
      %v533 = vld [vmem:[#allocation2 + $0x108] sm:$0xff]
      %v534 = vld [vmem:[#allocation2 + $0x110] sm:$0xff]
      %v535 = vld [vmem:[#allocation2 + $0x120] sm:$0xff]
      %v536 = vld [vmem:[#allocation2 + $0x128] sm:$0xff]
      %v537 = vld [vmem:[#allocation2 + $0x138] sm:$0xff]
      %v538 = vld [vmem:[#allocation2 + $0x140] sm:$0xff]
      %v539 = vld [vmem:[#allocation2 + $0x150] sm:$0xff]
      %v540 = vld [vmem:[#allocation2 + $0x158] sm:$0xff]
      %v541 = vld [vmem:[#allocation2 + $0x168] sm:$0xff]
      %v542 = vld [vmem:[#allocation2 + $0x170] sm:$0xff]
      %v543 = vld [vmem:[#allocation2 + $0x1] sm:$0xff]
      %v544 = vld [vmem:[#allocation2 + $0x9] sm:$0xff]
      %v545 = vld [vmem:[#allocation2 + $0x19] sm:$0xff]
      %v546 = vld [vmem:[#allocation2 + $0x21] sm:$0xff]
      %v547 = vld [vmem:[#allocation2 + $0x31] sm:$0xff]
      %v548 = vld [vmem:[#allocation2 + $0x39] sm:$0xff]
      %v549 = vld [vmem:[#allocation2 + $0x49] sm:$0xff]
      %v550 = vld [vmem:[#allocation2 + $0x51] sm:$0xff]
      %v551 = vld [vmem:[#allocation2 + $0x61] sm:$0xff]
      %v552 = vld [vmem:[#allocation2 + $0x69] sm:$0xff]
      %v553 = vld [vmem:[#allocation2 + $0x79] sm:$0xff]
      %v554 = vld [vmem:[#allocation2 + $0x81] sm:$0xff]
      %v555 = vld [vmem:[#allocation2 + $0x91] sm:$0xff]
      %v556 = vld [vmem:[#allocation2 + $0x99] sm:$0xff]
      %v557 = vld [vmem:[#allocation2 + $0xa9] sm:$0xff]
      %v558 = vld [vmem:[#allocation2 + $0xb1] sm:$0xff]
      %v559 = vld [vmem:[#allocation2 + $0xc1] sm:$0xff]
      %v560 = vld [vmem:[#allocation2 + $0xc9] sm:$0xff]
      %v561 = vld [vmem:[#allocation2 + $0xd9] sm:$0xff]
      %v562 = vld [vmem:[#allocation2 + $0xe1] sm:$0xff]
      %v563 = vld [vmem:[#allocation2 + $0xf1] sm:$0xff]
      %v564 = vld [vmem:[#allocation2 + $0xf9] sm:$0xff]
      %v565 = vld [vmem:[#allocation2 + $0x109] sm:$0xff]
      %v566 = vld [vmem:[#allocation2 + $0x111] sm:$0xff]
      %v567 = vld [vmem:[#allocation2 + $0x121] sm:$0xff]
      %v568 = vld [vmem:[#allocation2 + $0x129] sm:$0xff]
      %v569 = vld [vmem:[#allocation2 + $0x139] sm:$0xff]
      %v570 = vld [vmem:[#allocation2 + $0x141] sm:$0xff]
      %v571 = vld [vmem:[#allocation2 + $0x151] sm:$0xff]
      %v572 = vld [vmem:[#allocation2 + $0x159] sm:$0xff]
      %v573 = vld [vmem:[#allocation2 + $0x169] sm:$0xff]
      %v574 = vld [vmem:[#allocation2 + $0x171] sm:$0xff]
      %v575 = vld [vmem:[#allocation2 + $0x2] sm:$0xff]
      %v576 = vld [vmem:[#allocation2 + $0xa] sm:$0xff]
      %v577 = vld [vmem:[#allocation2 + $0x1a] sm:$0xff]
      %v578 = vld [vmem:[#allocation2 + $0x22] sm:$0xff]
      %v579 = vld [vmem:[#allocation2 + $0x32] sm:$0xff]
      %v580 = vld [vmem:[#allocation2 + $0x3a] sm:$0xff]
      %v581 = vld [vmem:[#allocation2 + $0x4a] sm:$0xff]
      %v582 = vld [vmem:[#allocation2 + $0x52] sm:$0xff]
      %v583 = vld [vmem:[#allocation2 + $0x62] sm:$0xff]
      %v584 = vld [vmem:[#allocation2 + $0x6a] sm:$0xff]
      %v585 = vld [vmem:[#allocation2 + $0x7a] sm:$0xff]
      %v586 = vld [vmem:[#allocation2 + $0x82] sm:$0xff]
      %v587 = vld [vmem:[#allocation2 + $0x92] sm:$0xff]
      %v588 = vld [vmem:[#allocation2 + $0x9a] sm:$0xff]
      %v589 = vld [vmem:[#allocation2 + $0xaa] sm:$0xff]
      %v590 = vld [vmem:[#allocation2 + $0xb2] sm:$0xff]
      %v591 = vld [vmem:[#allocation2 + $0xc2] sm:$0xff]
      %v592 = vld [vmem:[#allocation2 + $0xca] sm:$0xff]
      %v593 = vld [vmem:[#allocation2 + $0xda] sm:$0xff]
      %v594 = vld [vmem:[#allocation2 + $0xe2] sm:$0xff]
      %v595 = vld [vmem:[#allocation2 + $0xf2] sm:$0xff]
      %v596 = vld [vmem:[#allocation2 + $0xfa] sm:$0xff]
      %v597 = vld [vmem:[#allocation2 + $0x10a] sm:$0xff]
      %v598 = vld [vmem:[#allocation2 + $0x112] sm:$0xff]
      %v599 = vld [vmem:[#allocation2 + $0x122] sm:$0xff]
      %v600 = vld [vmem:[#allocation2 + $0x12a] sm:$0xff]
      %v601 = vld [vmem:[#allocation2 + $0x13a] sm:$0xff]
      %v602 = vld [vmem:[#allocation2 + $0x142] sm:$0xff]
      %v603 = vld [vmem:[#allocation2 + $0x152] sm:$0xff]
      %v604 = vld [vmem:[#allocation2 + $0x15a] sm:$0xff]
      %v605 = vld [vmem:[#allocation2 + $0x16a] sm:$0xff]
      %v606 = vld [vmem:[#allocation2 + $0x172] sm:$0xff]
      %v607 = vld [vmem:[%s478] sm:$0xff]
      %v608 = vld [vmem:[%s478 + $0x8] sm:$0xff]
      %v609 = vld [vmem:[%s478 + $0x18] sm:$0xff]
      %v610 = vld [vmem:[%s478 + $0x20] sm:$0xff]
      %v611 = vld [vmem:[%s478 + $0x30] sm:$0xff]
      %v612 = vld [vmem:[%s478 + $0x38] sm:$0xff]
      %v613 = vld [vmem:[%s478 + $0x48] sm:$0xff]
      %v614 = vld [vmem:[%s478 + $0x50] sm:$0xff]
      %v615 = vld [vmem:[%s478 + $0x60] sm:$0xff]
      %v616 = vld [vmem:[%s478 + $0x68] sm:$0xff]
      %v617 = vld [vmem:[%s478 + $0x78] sm:$0xff]
      %v618 = vld [vmem:[%s478 + $0x80] sm:$0xff]
      %v619 = vld [vmem:[%s478 + $0x90] sm:$0xff]
      %v620 = vld [vmem:[%s478 + $0x98] sm:$0xff]
      %v621 = vld [vmem:[%s478 + $0xa8] sm:$0xff]
      %v622 = vld [vmem:[%s478 + $0xb0] sm:$0xff]
      %v623 = vld [vmem:[%s478 + $0xc0] sm:$0xff]
      %v624 = vld [vmem:[%s478 + $0xc8] sm:$0xff]
      %v625 = vld [vmem:[%s478 + $0xd8] sm:$0xff]
      %v626 = vld [vmem:[%s478 + $0xe0] sm:$0xff]
      %v627 = vld [vmem:[%s478 + $0xf0] sm:$0xff]
      %v628 = vld [vmem:[%s478 + $0xf8] sm:$0xff]
      %v629 = vld [vmem:[%s478 + $0x108] sm:$0xff]
      %v630 = vld [vmem:[%s478 + $0x110] sm:$0xff]
      %v631 = vld [vmem:[%s478 + $0x120] sm:$0xff]
      %v632 = vld [vmem:[%s478 + $0x128] sm:$0xff]
      %v633 = vld [vmem:[%s478 + $0x138] sm:$0xff]
      %v634 = vld [vmem:[%s478 + $0x140] sm:$0xff]
      %v635 = vld [vmem:[%s478 + $0x150] sm:$0xff]
      %v636 = vld [vmem:[%s478 + $0x158] sm:$0xff]
      %v637 = vld [vmem:[%s478 + $0x168] sm:$0xff]
      %v638 = vld [vmem:[%s478 + $0x170] sm:$0xff]
      %v639 = vld [vmem:[%s478 + $0x1] sm:$0xff]
      %v640 = vld [vmem:[%s478 + $0x9] sm:$0xff]
      %v641 = vld [vmem:[%s478 + $0x19] sm:$0xff]
      %v642 = vld [vmem:[%s478 + $0x21] sm:$0xff]
      %v643 = vld [vmem:[%s478 + $0x31] sm:$0xff]
      %v644 = vld [vmem:[%s478 + $0x39] sm:$0xff]
      %v645 = vld [vmem:[%s478 + $0x49] sm:$0xff]
      %v646 = vld [vmem:[%s478 + $0x51] sm:$0xff]
      %v647 = vld [vmem:[%s478 + $0x61] sm:$0xff]
      %v648 = vld [vmem:[%s478 + $0x69] sm:$0xff]
      %v649 = vld [vmem:[%s478 + $0x79] sm:$0xff]
      %v650 = vld [vmem:[%s478 + $0x81] sm:$0xff]
      %v651 = vld [vmem:[%s478 + $0x91] sm:$0xff]
      %v652 = vld [vmem:[%s478 + $0x99] sm:$0xff]
      %v653 = vld [vmem:[%s478 + $0xa9] sm:$0xff]
      %v654 = vld [vmem:[%s478 + $0xb1] sm:$0xff]
      %v655 = vld [vmem:[%s478 + $0xc1] sm:$0xff]
      %v656 = vld [vmem:[%s478 + $0xc9] sm:$0xff]
      %v657 = vld [vmem:[%s478 + $0xd9] sm:$0xff]
      %v658 = vld [vmem:[%s478 + $0xe1] sm:$0xff]
      %v659 = vld [vmem:[%s478 + $0xf1] sm:$0xff]
      %v660 = vld [vmem:[%s478 + $0xf9] sm:$0xff]
      %v661 = vld [vmem:[%s478 + $0x109] sm:$0xff]
      %v662 = vld [vmem:[%s478 + $0x111] sm:$0xff]
      %v663 = vld [vmem:[%s478 + $0x121] sm:$0xff]
      %v664 = vld [vmem:[%s478 + $0x129] sm:$0xff]
      %v665 = vld [vmem:[%s478 + $0x139] sm:$0xff]
      %v666 = vld [vmem:[%s478 + $0x141] sm:$0xff]
      %v667 = vld [vmem:[%s478 + $0x151] sm:$0xff]
      %v668 = vld [vmem:[%s478 + $0x159] sm:$0xff]
      %v669 = vld [vmem:[%s478 + $0x169] sm:$0xff]
      %v670 = vld [vmem:[%s478 + $0x171] sm:$0xff]
      %v671 = vld [vmem:[%s478 + $0x2] sm:$0xff]
      %v672 = vld [vmem:[%s478 + $0xa] sm:$0xff]
      %v673 = vld [vmem:[%s478 + $0x1a] sm:$0xff]
      %v674 = vld [vmem:[%s478 + $0x22] sm:$0xff]
      %v675 = vld [vmem:[%s478 + $0x32] sm:$0xff]
      %v676 = vld [vmem:[%s478 + $0x3a] sm:$0xff]
      %v677 = vld [vmem:[%s478 + $0x4a] sm:$0xff]
      %v678 = vld [vmem:[%s478 + $0x52] sm:$0xff]
      %v679 = vld [vmem:[%s478 + $0x62] sm:$0xff]
      %v680 = vld [vmem:[%s478 + $0x6a] sm:$0xff]
      %v681 = vld [vmem:[%s478 + $0x7a] sm:$0xff]
      %v682 = vld [vmem:[%s478 + $0x82] sm:$0xff]
      %v683 = vld [vmem:[%s478 + $0x92] sm:$0xff]
      %v684 = vld [vmem:[%s478 + $0x9a] sm:$0xff]
      %v685 = vld [vmem:[%s478 + $0xaa] sm:$0xff]
      %v686 = vld [vmem:[%s478 + $0xb2] sm:$0xff]
      %v687 = vld [vmem:[%s478 + $0xc2] sm:$0xff]
      %v688 = vld [vmem:[%s478 + $0xca] sm:$0xff]
      %v689 = vld [vmem:[%s478 + $0xda] sm:$0xff]
      %v690 = vld [vmem:[%s478 + $0xe2] sm:$0xff]
      %v691 = vld [vmem:[%s478 + $0xf2] sm:$0xff]
      %v692 = vld [vmem:[%s478 + $0xfa] sm:$0xff]
      %v693 = vld [vmem:[%s478 + $0x10a] sm:$0xff]
      %v694 = vld [vmem:[%s478 + $0x112] sm:$0xff]
      %v695 = vld [vmem:[%s478 + $0x122] sm:$0xff]
      %v696 = vld [vmem:[%s478 + $0x12a] sm:$0xff]
      %v697 = vld [vmem:[%s478 + $0x13a] sm:$0xff]
      %v698 = vld [vmem:[%s478 + $0x142] sm:$0xff]
      %v699 = vld [vmem:[%s478 + $0x152] sm:$0xff]
      %v700 = vld [vmem:[%s478 + $0x15a] sm:$0xff]
      %v701 = vld [vmem:[%s478 + $0x16a] sm:$0xff]
      %v702 = vld [vmem:[%s478 + $0x172] sm:$0xff]
      %s703 = scalar_lea.vmem [#allocation2], 48
      %v704 = vld [vmem:[%s703] sm:$0xff]
      %v705 = vld [vmem:[%s703 + $0x8] sm:$0xff]
      %v706 = vld [vmem:[%s703 + $0x18] sm:$0xff]
      %v707 = vld [vmem:[%s703 + $0x20] sm:$0xff]
      %v708 = vld [vmem:[%s703 + $0x30] sm:$0xff]
      %v709 = vld [vmem:[%s703 + $0x38] sm:$0xff]
      %v710 = vld [vmem:[%s703 + $0x48] sm:$0xff]
      %v711 = vld [vmem:[%s703 + $0x50] sm:$0xff]
      %v712 = vld [vmem:[%s703 + $0x60] sm:$0xff]
      %v713 = vld [vmem:[%s703 + $0x68] sm:$0xff]
      %v714 = vld [vmem:[%s703 + $0x78] sm:$0xff]
      %v715 = vld [vmem:[%s703 + $0x80] sm:$0xff]
      %v716 = vld [vmem:[%s703 + $0x90] sm:$0xff]
      %v717 = vld [vmem:[%s703 + $0x98] sm:$0xff]
      %v718 = vld [vmem:[%s703 + $0xa8] sm:$0xff]
      %v719 = vld [vmem:[%s703 + $0xb0] sm:$0xff]
      %v720 = vld [vmem:[%s703 + $0xc0] sm:$0xff]
      %v721 = vld [vmem:[%s703 + $0xc8] sm:$0xff]
      %v722 = vld [vmem:[%s703 + $0xd8] sm:$0xff]
      %v723 = vld [vmem:[%s703 + $0xe0] sm:$0xff]
      %v724 = vld [vmem:[%s703 + $0xf0] sm:$0xff]
      %v725 = vld [vmem:[%s703 + $0xf8] sm:$0xff]
      %v726 = vld [vmem:[%s703 + $0x108] sm:$0xff]
      %v727 = vld [vmem:[%s703 + $0x110] sm:$0xff]
      %v728 = vld [vmem:[%s703 + $0x120] sm:$0xff]
      %v729 = vld [vmem:[%s703 + $0x128] sm:$0xff]
      %v730 = vld [vmem:[%s703 + $0x138] sm:$0xff]
      %v731 = vld [vmem:[%s703 + $0x140] sm:$0xff]
      %v732 = vld [vmem:[%s703 + $0x150] sm:$0xff]
      %v733 = vld [vmem:[%s703 + $0x158] sm:$0xff]
      %v734 = vld [vmem:[%s703 + $0x168] sm:$0xff]
      %v735 = vld [vmem:[%s703 + $0x170] sm:$0xff]
      %v736 = vld [vmem:[%s703 + $0x1] sm:$0xff]
      %v737 = vld [vmem:[%s703 + $0x9] sm:$0xff]
      %v738 = vld [vmem:[%s703 + $0x19] sm:$0xff]
      %v739 = vld [vmem:[%s703 + $0x21] sm:$0xff]
      %v740 = vld [vmem:[%s703 + $0x31] sm:$0xff]
      %v741 = vld [vmem:[%s703 + $0x39] sm:$0xff]
      %v742 = vld [vmem:[%s703 + $0x49] sm:$0xff]
      %v743 = vld [vmem:[%s703 + $0x51] sm:$0xff]
      %v744 = vld [vmem:[%s703 + $0x61] sm:$0xff]
      %v745 = vld [vmem:[%s703 + $0x69] sm:$0xff]
      %v746 = vld [vmem:[%s703 + $0x79] sm:$0xff]
      %v747 = vld [vmem:[%s703 + $0x81] sm:$0xff]
      %v748 = vld [vmem:[%s703 + $0x91] sm:$0xff]
      %v749 = vld [vmem:[%s703 + $0x99] sm:$0xff]
      %v750 = vld [vmem:[%s703 + $0xa9] sm:$0xff]
      %v751 = vld [vmem:[%s703 + $0xb1] sm:$0xff]
      %v752 = vld [vmem:[%s703 + $0xc1] sm:$0xff]
      %v753 = vld [vmem:[%s703 + $0xc9] sm:$0xff]
      %v754 = vld [vmem:[%s703 + $0xd9] sm:$0xff]
      %v755 = vld [vmem:[%s703 + $0xe1] sm:$0xff]
      %v756 = vld [vmem:[%s703 + $0xf1] sm:$0xff]
      %v757 = vld [vmem:[%s703 + $0xf9] sm:$0xff]
      %v758 = vld [vmem:[%s703 + $0x109] sm:$0xff]
      %v759 = vld [vmem:[%s703 + $0x111] sm:$0xff]
      %v760 = vld [vmem:[%s703 + $0x121] sm:$0xff]
      %v761 = vld [vmem:[%s703 + $0x129] sm:$0xff]
      %v762 = vld [vmem:[%s703 + $0x139] sm:$0xff]
      %v763 = vld [vmem:[%s703 + $0x141] sm:$0xff]
      %v764 = vld [vmem:[%s703 + $0x151] sm:$0xff]
      %v765 = vld [vmem:[%s703 + $0x159] sm:$0xff]
      %v766 = vld [vmem:[%s703 + $0x169] sm:$0xff]
      %v767 = vld [vmem:[%s703 + $0x171] sm:$0xff]
      %v768 = vld [vmem:[%s703 + $0x2] sm:$0xff]
      %v769 = vld [vmem:[%s703 + $0xa] sm:$0xff]
      %v770 = vld [vmem:[%s703 + $0x1a] sm:$0xff]
      %v771 = vld [vmem:[%s703 + $0x22] sm:$0xff]
      %v772 = vld [vmem:[%s703 + $0x32] sm:$0xff]
      %v773 = vld [vmem:[%s703 + $0x3a] sm:$0xff]
      %v774 = vld [vmem:[%s703 + $0x4a] sm:$0xff]
      %v775 = vld [vmem:[%s703 + $0x52] sm:$0xff]
      %v776 = vld [vmem:[%s703 + $0x62] sm:$0xff]
      %v777 = vld [vmem:[%s703 + $0x6a] sm:$0xff]
      %v778 = vld [vmem:[%s703 + $0x7a] sm:$0xff]
      %v779 = vld [vmem:[%s703 + $0x82] sm:$0xff]
      %v780 = vld [vmem:[%s703 + $0x92] sm:$0xff]
      %v781 = vld [vmem:[%s703 + $0x9a] sm:$0xff]
      %v782 = vld [vmem:[%s703 + $0xaa] sm:$0xff]
      %v783 = vld [vmem:[%s703 + $0xb2] sm:$0xff]
      %v784 = vld [vmem:[%s703 + $0xc2] sm:$0xff]
      %v785 = vld [vmem:[%s703 + $0xca] sm:$0xff]
      %v786 = vld [vmem:[%s703 + $0xda] sm:$0xff]
      %v787 = vld [vmem:[%s703 + $0xe2] sm:$0xff]
      %v788 = vld [vmem:[%s703 + $0xf2] sm:$0xff]
      %v789 = vld [vmem:[%s703 + $0xfa] sm:$0xff]
      %v790 = vld [vmem:[%s703 + $0x10a] sm:$0xff]
      %v791 = vld [vmem:[%s703 + $0x112] sm:$0xff]
      %v792 = vld [vmem:[%s703 + $0x122] sm:$0xff]
      %v793 = vld [vmem:[%s703 + $0x12a] sm:$0xff]
      %v794 = vld [vmem:[%s703 + $0x13a] sm:$0xff]
      %v795 = vld [vmem:[%s703 + $0x142] sm:$0xff]
      %v796 = vld [vmem:[%s703 + $0x152] sm:$0xff]
      %v797 = vld [vmem:[%s703 + $0x15a] sm:$0xff]
      %v798 = vld [vmem:[%s703 + $0x16a] sm:$0xff]
      %v799 = vld [vmem:[%s703 + $0x172] sm:$0xff]
      %832 = vrot.lane.b32.xlu0 %v543, 8
      %v833 = vpop.permute.xlu0 %832
      %834 = vrot.lane.b32.xlu0 %v544, 8
      %v835 = vpop.permute.xlu0 %834
      %836 = vrot.lane.b32.xlu0 %v545, 8
      %v837 = vpop.permute.xlu0 %836
      %838 = vrot.lane.b32.xlu0 %v546, 8
      %v839 = vpop.permute.xlu0 %838
      %840 = vrot.lane.b32.xlu0 %v547, 8
      %v841 = vpop.permute.xlu0 %840
      %842 = vrot.lane.b32.xlu0 %v548, 8
      %v843 = vpop.permute.xlu0 %842
      %844 = vrot.lane.b32.xlu0 %v549, 8
      %v845 = vpop.permute.xlu0 %844
      %846 = vrot.lane.b32.xlu0 %v550, 8
      %v847 = vpop.permute.xlu0 %846
      %848 = vrot.lane.b32.xlu0 %v551, 8
      %v849 = vpop.permute.xlu0 %848
      %850 = vrot.lane.b32.xlu0 %v552, 8
      %v851 = vpop.permute.xlu0 %850
      %852 = vrot.lane.b32.xlu0 %v553, 8
      %v853 = vpop.permute.xlu0 %852
      %854 = vrot.lane.b32.xlu0 %v554, 8
      %v855 = vpop.permute.xlu0 %854
      %856 = vrot.lane.b32.xlu0 %v555, 8
      %v857 = vpop.permute.xlu0 %856
      %858 = vrot.lane.b32.xlu0 %v556, 8
      %v859 = vpop.permute.xlu0 %858
      %860 = vrot.lane.b32.xlu0 %v557, 8
      %v861 = vpop.permute.xlu0 %860
      %862 = vrot.lane.b32.xlu0 %v558, 8
      %v863 = vpop.permute.xlu0 %862
      %864 = vrot.lane.b32.xlu0 %v559, 8
      %v865 = vpop.permute.xlu0 %864
      %866 = vrot.lane.b32.xlu0 %v560, 8
      %v867 = vpop.permute.xlu0 %866
      %868 = vrot.lane.b32.xlu0 %v561, 8
      %v869 = vpop.permute.xlu0 %868
      %870 = vrot.lane.b32.xlu0 %v562, 8
      %v871 = vpop.permute.xlu0 %870
      %872 = vrot.lane.b32.xlu0 %v563, 8
      %v873 = vpop.permute.xlu0 %872
      %874 = vrot.lane.b32.xlu0 %v564, 8
      %v875 = vpop.permute.xlu0 %874
      %876 = vrot.lane.b32.xlu0 %v565, 8
      %v877 = vpop.permute.xlu0 %876
      %878 = vrot.lane.b32.xlu0 %v566, 8
      %v879 = vpop.permute.xlu0 %878
      %880 = vrot.lane.b32.xlu0 %v567, 8
      %v881 = vpop.permute.xlu0 %880
      %882 = vrot.lane.b32.xlu0 %v568, 8
      %v883 = vpop.permute.xlu0 %882
      %884 = vrot.lane.b32.xlu0 %v569, 8
      %v885 = vpop.permute.xlu0 %884
      %886 = vrot.lane.b32.xlu0 %v570, 8
      %v887 = vpop.permute.xlu0 %886
      %888 = vrot.lane.b32.xlu0 %v571, 8
      %v889 = vpop.permute.xlu0 %888
      %890 = vrot.lane.b32.xlu0 %v572, 8
      %v891 = vpop.permute.xlu0 %890
      %892 = vrot.lane.b32.xlu0 %v573, 8
      %v893 = vpop.permute.xlu0 %892
      %894 = vrot.lane.b32.xlu0 %v574, 8
      %v895 = vpop.permute.xlu0 %894
      %960 = vrot.lane.b32.xlu0 %v575, 16
      %v961 = vpop.permute.xlu0 %960
      %962 = vrot.lane.b32.xlu0 %v576, 16
      %v963 = vpop.permute.xlu0 %962
      %964 = vrot.lane.b32.xlu0 %v577, 16
      %v965 = vpop.permute.xlu0 %964
      %966 = vrot.lane.b32.xlu0 %v578, 16
      %v967 = vpop.permute.xlu0 %966
      %968 = vrot.lane.b32.xlu0 %v579, 16
      %v969 = vpop.permute.xlu0 %968
      %970 = vrot.lane.b32.xlu0 %v580, 16
      %v971 = vpop.permute.xlu0 %970
      %972 = vrot.lane.b32.xlu0 %v581, 16
      %v973 = vpop.permute.xlu0 %972
      %974 = vrot.lane.b32.xlu0 %v582, 16
      %v975 = vpop.permute.xlu0 %974
      %976 = vrot.lane.b32.xlu0 %v583, 16
      %v977 = vpop.permute.xlu0 %976
      %978 = vrot.lane.b32.xlu0 %v584, 16
      %v979 = vpop.permute.xlu0 %978
      %980 = vrot.lane.b32.xlu0 %v585, 16
      %v981 = vpop.permute.xlu0 %980
      %982 = vrot.lane.b32.xlu0 %v586, 16
      %v983 = vpop.permute.xlu0 %982
      %984 = vrot.lane.b32.xlu0 %v587, 16
      %v985 = vpop.permute.xlu0 %984
      %986 = vrot.lane.b32.xlu0 %v588, 16
      %v987 = vpop.permute.xlu0 %986
      %988 = vrot.lane.b32.xlu0 %v589, 16
      %v989 = vpop.permute.xlu0 %988
      %990 = vrot.lane.b32.xlu0 %v590, 16
      %v991 = vpop.permute.xlu0 %990
      %992 = vrot.lane.b32.xlu0 %v591, 16
      %v993 = vpop.permute.xlu0 %992
      %994 = vrot.lane.b32.xlu0 %v592, 16
      %v995 = vpop.permute.xlu0 %994
      %996 = vrot.lane.b32.xlu0 %v593, 16
      %v997 = vpop.permute.xlu0 %996
      %998 = vrot.lane.b32.xlu0 %v594, 16
      %v999 = vpop.permute.xlu0 %998
      %1000 = vrot.lane.b32.xlu0 %v595, 16
      %v1001 = vpop.permute.xlu0 %1000
      %1002 = vrot.lane.b32.xlu0 %v596, 16
      %v1003 = vpop.permute.xlu0 %1002
      %1004 = vrot.lane.b32.xlu0 %v597, 16
      %v1005 = vpop.permute.xlu0 %1004
      %1006 = vrot.lane.b32.xlu0 %v598, 16
      %v1007 = vpop.permute.xlu0 %1006
      %1008 = vrot.lane.b32.xlu0 %v599, 16
      %v1009 = vpop.permute.xlu0 %1008
      %1010 = vrot.lane.b32.xlu0 %v600, 16
      %v1011 = vpop.permute.xlu0 %1010
      %1012 = vrot.lane.b32.xlu0 %v601, 16
      %v1013 = vpop.permute.xlu0 %1012
      %1014 = vrot.lane.b32.xlu0 %v602, 16
      %v1015 = vpop.permute.xlu0 %1014
      %1016 = vrot.lane.b32.xlu0 %v603, 16
      %v1017 = vpop.permute.xlu0 %1016
      %1018 = vrot.lane.b32.xlu0 %v604, 16
      %v1019 = vpop.permute.xlu0 %1018
      %1020 = vrot.lane.b32.xlu0 %v605, 16
      %v1021 = vpop.permute.xlu0 %1020
      %1022 = vrot.lane.b32.xlu0 %v606, 16
      %v1023 = vpop.permute.xlu0 %1022
      %1088 = vrot.lane.b32.xlu0 %v607, 24
      %v1089 = vpop.permute.xlu0 %1088
      %1090 = vrot.lane.b32.xlu0 %v608, 24
      %v1091 = vpop.permute.xlu0 %1090
      %1092 = vrot.lane.b32.xlu0 %v609, 24
      %v1093 = vpop.permute.xlu0 %1092
      %1094 = vrot.lane.b32.xlu0 %v610, 24
      %v1095 = vpop.permute.xlu0 %1094
      %1096 = vrot.lane.b32.xlu0 %v611, 24
      %v1097 = vpop.permute.xlu0 %1096
      %1098 = vrot.lane.b32.xlu0 %v612, 24
      %v1099 = vpop.permute.xlu0 %1098
      %1100 = vrot.lane.b32.xlu0 %v613, 24
      %v1101 = vpop.permute.xlu0 %1100
      %1102 = vrot.lane.b32.xlu0 %v614, 24
      %v1103 = vpop.permute.xlu0 %1102
      %1104 = vrot.lane.b32.xlu0 %v615, 24
      %v1105 = vpop.permute.xlu0 %1104
      %1106 = vrot.lane.b32.xlu0 %v616, 24
      %v1107 = vpop.permute.xlu0 %1106
      %1108 = vrot.lane.b32.xlu0 %v617, 24
      %v1109 = vpop.permute.xlu0 %1108
      %1110 = vrot.lane.b32.xlu0 %v618, 24
      %v1111 = vpop.permute.xlu0 %1110
      %1112 = vrot.lane.b32.xlu0 %v619, 24
      %v1113 = vpop.permute.xlu0 %1112
      %1114 = vrot.lane.b32.xlu0 %v620, 24
      %v1115 = vpop.permute.xlu0 %1114
      %1116 = vrot.lane.b32.xlu0 %v621, 24
      %v1117 = vpop.permute.xlu0 %1116
      %1118 = vrot.lane.b32.xlu0 %v622, 24
      %v1119 = vpop.permute.xlu0 %1118
      %1120 = vrot.lane.b32.xlu0 %v623, 24
      %v1121 = vpop.permute.xlu0 %1120
      %1122 = vrot.lane.b32.xlu0 %v624, 24
      %v1123 = vpop.permute.xlu0 %1122
      %1124 = vrot.lane.b32.xlu0 %v625, 24
      %v1125 = vpop.permute.xlu0 %1124
      %1126 = vrot.lane.b32.xlu0 %v626, 24
      %v1127 = vpop.permute.xlu0 %1126
      %1128 = vrot.lane.b32.xlu0 %v627, 24
      %v1129 = vpop.permute.xlu0 %1128
      %1130 = vrot.lane.b32.xlu0 %v628, 24
      %v1131 = vpop.permute.xlu0 %1130
      %1132 = vrot.lane.b32.xlu0 %v629, 24
      %v1133 = vpop.permute.xlu0 %1132
      %1134 = vrot.lane.b32.xlu0 %v630, 24
      %v1135 = vpop.permute.xlu0 %1134
      %1136 = vrot.lane.b32.xlu0 %v631, 24
      %v1137 = vpop.permute.xlu0 %1136
      %1138 = vrot.lane.b32.xlu0 %v632, 24
      %v1139 = vpop.permute.xlu0 %1138
      %1140 = vrot.lane.b32.xlu0 %v633, 24
      %v1141 = vpop.permute.xlu0 %1140
      %1142 = vrot.lane.b32.xlu0 %v634, 24
      %v1143 = vpop.permute.xlu0 %1142
      %1144 = vrot.lane.b32.xlu0 %v635, 24
      %v1145 = vpop.permute.xlu0 %1144
      %1146 = vrot.lane.b32.xlu0 %v636, 24
      %v1147 = vpop.permute.xlu0 %1146
      %1148 = vrot.lane.b32.xlu0 %v637, 24
      %v1149 = vpop.permute.xlu0 %1148
      %1150 = vrot.lane.b32.xlu0 %v638, 24
      %v1151 = vpop.permute.xlu0 %1150
      %1216 = vrot.lane.b32.xlu0 %v639, 32
      %v1217 = vpop.permute.xlu0 %1216
      %1218 = vrot.lane.b32.xlu0 %v640, 32
      %v1219 = vpop.permute.xlu0 %1218
      %1220 = vrot.lane.b32.xlu0 %v641, 32
      %v1221 = vpop.permute.xlu0 %1220
      %1222 = vrot.lane.b32.xlu0 %v642, 32
      %v1223 = vpop.permute.xlu0 %1222
      %1224 = vrot.lane.b32.xlu0 %v643, 32
      %v1225 = vpop.permute.xlu0 %1224
      %1226 = vrot.lane.b32.xlu0 %v644, 32
      %v1227 = vpop.permute.xlu0 %1226
      %1228 = vrot.lane.b32.xlu0 %v645, 32
      %v1229 = vpop.permute.xlu0 %1228
      %1230 = vrot.lane.b32.xlu0 %v646, 32
      %v1231 = vpop.permute.xlu0 %1230
      %1232 = vrot.lane.b32.xlu0 %v647, 32
      %v1233 = vpop.permute.xlu0 %1232
      %1234 = vrot.lane.b32.xlu0 %v648, 32
      %v1235 = vpop.permute.xlu0 %1234
      %1236 = vrot.lane.b32.xlu0 %v649, 32
      %v1237 = vpop.permute.xlu0 %1236
      %1238 = vrot.lane.b32.xlu0 %v650, 32
      %v1239 = vpop.permute.xlu0 %1238
      %1240 = vrot.lane.b32.xlu0 %v651, 32
      %v1241 = vpop.permute.xlu0 %1240
      %1242 = vrot.lane.b32.xlu0 %v652, 32
      %v1243 = vpop.permute.xlu0 %1242
      %1244 = vrot.lane.b32.xlu0 %v653, 32
      %v1245 = vpop.permute.xlu0 %1244
      %1246 = vrot.lane.b32.xlu0 %v654, 32
      %v1247 = vpop.permute.xlu0 %1246
      %1248 = vrot.lane.b32.xlu0 %v655, 32
      %v1249 = vpop.permute.xlu0 %1248
      %1250 = vrot.lane.b32.xlu0 %v656, 32
      %v1251 = vpop.permute.xlu0 %1250
      %1252 = vrot.lane.b32.xlu0 %v657, 32
      %v1253 = vpop.permute.xlu0 %1252
      %1254 = vrot.lane.b32.xlu0 %v658, 32
      %v1255 = vpop.permute.xlu0 %1254
      %1256 = vrot.lane.b32.xlu0 %v659, 32
      %v1257 = vpop.permute.xlu0 %1256
      %1258 = vrot.lane.b32.xlu0 %v660, 32
      %v1259 = vpop.permute.xlu0 %1258
      %1260 = vrot.lane.b32.xlu0 %v661, 32
      %v1261 = vpop.permute.xlu0 %1260
      %1262 = vrot.lane.b32.xlu0 %v662, 32
      %v1263 = vpop.permute.xlu0 %1262
      %1264 = vrot.lane.b32.xlu0 %v663, 32
      %v1265 = vpop.permute.xlu0 %1264
      %1266 = vrot.lane.b32.xlu0 %v664, 32
      %v1267 = vpop.permute.xlu0 %1266
      %1268 = vrot.lane.b32.xlu0 %v665, 32
      %v1269 = vpop.permute.xlu0 %1268
      %1270 = vrot.lane.b32.xlu0 %v666, 32
      %v1271 = vpop.permute.xlu0 %1270
      %1272 = vrot.lane.b32.xlu0 %v667, 32
      %v1273 = vpop.permute.xlu0 %1272
      %1274 = vrot.lane.b32.xlu0 %v668, 32
      %v1275 = vpop.permute.xlu0 %1274
      %1276 = vrot.lane.b32.xlu0 %v669, 32
      %v1277 = vpop.permute.xlu0 %1276
      %1278 = vrot.lane.b32.xlu0 %v670, 32
      %v1279 = vpop.permute.xlu0 %1278
      %1344 = vrot.lane.b32.xlu0 %v671, 40
      %v1345 = vpop.permute.xlu0 %1344
      %1346 = vrot.lane.b32.xlu0 %v672, 40
      %v1347 = vpop.permute.xlu0 %1346
      %1348 = vrot.lane.b32.xlu0 %v673, 40
      %v1349 = vpop.permute.xlu0 %1348
      %1350 = vrot.lane.b32.xlu0 %v674, 40
      %v1351 = vpop.permute.xlu0 %1350
      %1352 = vrot.lane.b32.xlu0 %v675, 40
      %v1353 = vpop.permute.xlu0 %1352
      %1354 = vrot.lane.b32.xlu0 %v676, 40
      %v1355 = vpop.permute.xlu0 %1354
      %1356 = vrot.lane.b32.xlu0 %v677, 40
      %v1357 = vpop.permute.xlu0 %1356
      %1358 = vrot.lane.b32.xlu0 %v678, 40
      %v1359 = vpop.permute.xlu0 %1358
      %1360 = vrot.lane.b32.xlu0 %v679, 40
      %v1361 = vpop.permute.xlu0 %1360
      %1362 = vrot.lane.b32.xlu0 %v680, 40
      %v1363 = vpop.permute.xlu0 %1362
      %1364 = vrot.lane.b32.xlu0 %v681, 40
      %v1365 = vpop.permute.xlu0 %1364
      %1366 = vrot.lane.b32.xlu0 %v682, 40
      %v1367 = vpop.permute.xlu0 %1366
      %1368 = vrot.lane.b32.xlu0 %v683, 40
      %v1369 = vpop.permute.xlu0 %1368
      %1370 = vrot.lane.b32.xlu0 %v684, 40
      %v1371 = vpop.permute.xlu0 %1370
      %1372 = vrot.lane.b32.xlu0 %v685, 40
      %v1373 = vpop.permute.xlu0 %1372
      %1374 = vrot.lane.b32.xlu0 %v686, 40
      %v1375 = vpop.permute.xlu0 %1374
      %1376 = vrot.lane.b32.xlu0 %v687, 40
      %v1377 = vpop.permute.xlu0 %1376
      %1378 = vrot.lane.b32.xlu0 %v688, 40
      %v1379 = vpop.permute.xlu0 %1378
      %1380 = vrot.lane.b32.xlu0 %v689, 40
      %v1381 = vpop.permute.xlu0 %1380
      %1382 = vrot.lane.b32.xlu0 %v690, 40
      %v1383 = vpop.permute.xlu0 %1382
      %1384 = vrot.lane.b32.xlu0 %v691, 40
      %v1385 = vpop.permute.xlu0 %1384
      %1386 = vrot.lane.b32.xlu0 %v692, 40
      %v1387 = vpop.permute.xlu0 %1386
      %1388 = vrot.lane.b32.xlu0 %v693, 40
      %v1389 = vpop.permute.xlu0 %1388
      %1390 = vrot.lane.b32.xlu0 %v694, 40
      %v1391 = vpop.permute.xlu0 %1390
      %1392 = vrot.lane.b32.xlu0 %v695, 40
      %v1393 = vpop.permute.xlu0 %1392
      %1394 = vrot.lane.b32.xlu0 %v696, 40
      %v1395 = vpop.permute.xlu0 %1394
      %1396 = vrot.lane.b32.xlu0 %v697, 40
      %v1397 = vpop.permute.xlu0 %1396
      %1398 = vrot.lane.b32.xlu0 %v698, 40
      %v1399 = vpop.permute.xlu0 %1398
      %1400 = vrot.lane.b32.xlu0 %v699, 40
      %v1401 = vpop.permute.xlu0 %1400
      %1402 = vrot.lane.b32.xlu0 %v700, 40
      %v1403 = vpop.permute.xlu0 %1402
      %1404 = vrot.lane.b32.xlu0 %v701, 40
      %v1405 = vpop.permute.xlu0 %1404
      %1406 = vrot.lane.b32.xlu0 %v702, 40
      %v1407 = vpop.permute.xlu0 %1406
      %1472 = vrot.lane.b32.xlu0 %v704, 48
      %v1473 = vpop.permute.xlu0 %1472
      %1474 = vrot.lane.b32.xlu0 %v705, 48
      %v1475 = vpop.permute.xlu0 %1474
      %1476 = vrot.lane.b32.xlu0 %v706, 48
      %v1477 = vpop.permute.xlu0 %1476
      %1478 = vrot.lane.b32.xlu0 %v707, 48
      %v1479 = vpop.permute.xlu0 %1478
      %1480 = vrot.lane.b32.xlu0 %v708, 48
      %v1481 = vpop.permute.xlu0 %1480
      %1482 = vrot.lane.b32.xlu0 %v709, 48
      %v1483 = vpop.permute.xlu0 %1482
      %1484 = vrot.lane.b32.xlu0 %v710, 48
      %v1485 = vpop.permute.xlu0 %1484
      %1486 = vrot.lane.b32.xlu0 %v711, 48
      %v1487 = vpop.permute.xlu0 %1486
      %1488 = vrot.lane.b32.xlu0 %v712, 48
      %v1489 = vpop.permute.xlu0 %1488
      %1490 = vrot.lane.b32.xlu0 %v713, 48
      %v1491 = vpop.permute.xlu0 %1490
      %1492 = vrot.lane.b32.xlu0 %v714, 48
      %v1493 = vpop.permute.xlu0 %1492
      %1494 = vrot.lane.b32.xlu0 %v715, 48
      %v1495 = vpop.permute.xlu0 %1494
      %1496 = vrot.lane.b32.xlu0 %v716, 48
      %v1497 = vpop.permute.xlu0 %1496
      %1498 = vrot.lane.b32.xlu0 %v717, 48
      %v1499 = vpop.permute.xlu0 %1498
      %1500 = vrot.lane.b32.xlu0 %v718, 48
      %v1501 = vpop.permute.xlu0 %1500
      %1502 = vrot.lane.b32.xlu0 %v719, 48
      %v1503 = vpop.permute.xlu0 %1502
      %1504 = vrot.lane.b32.xlu0 %v720, 48
      %v1505 = vpop.permute.xlu0 %1504
      %1506 = vrot.lane.b32.xlu0 %v721, 48
      %v1507 = vpop.permute.xlu0 %1506
      %1508 = vrot.lane.b32.xlu0 %v722, 48
      %v1509 = vpop.permute.xlu0 %1508
      %1510 = vrot.lane.b32.xlu0 %v723, 48
      %v1511 = vpop.permute.xlu0 %1510
      %1512 = vrot.lane.b32.xlu0 %v724, 48
      %v1513 = vpop.permute.xlu0 %1512
      %1514 = vrot.lane.b32.xlu0 %v725, 48
      %v1515 = vpop.permute.xlu0 %1514
      %1516 = vrot.lane.b32.xlu0 %v726, 48
      %v1517 = vpop.permute.xlu0 %1516
      %1518 = vrot.lane.b32.xlu0 %v727, 48
      %v1519 = vpop.permute.xlu0 %1518
      %1520 = vrot.lane.b32.xlu0 %v728, 48
      %v1521 = vpop.permute.xlu0 %1520
      %1522 = vrot.lane.b32.xlu0 %v729, 48
      %v1523 = vpop.permute.xlu0 %1522
      %1524 = vrot.lane.b32.xlu0 %v730, 48
      %v1525 = vpop.permute.xlu0 %1524
      %1526 = vrot.lane.b32.xlu0 %v731, 48
      %v1527 = vpop.permute.xlu0 %1526
      %1528 = vrot.lane.b32.xlu0 %v732, 48
      %v1529 = vpop.permute.xlu0 %1528
      %1530 = vrot.lane.b32.xlu0 %v733, 48
      %v1531 = vpop.permute.xlu0 %1530
      %1532 = vrot.lane.b32.xlu0 %v734, 48
      %v1533 = vpop.permute.xlu0 %1532
      %1534 = vrot.lane.b32.xlu0 %v735, 48
      %v1535 = vpop.permute.xlu0 %1534
      %1600 = vrot.lane.b32.xlu0 %v736, 56
      %v1601 = vpop.permute.xlu0 %1600
      %1602 = vrot.lane.b32.xlu0 %v737, 56
      %v1603 = vpop.permute.xlu0 %1602
      %1604 = vrot.lane.b32.xlu0 %v738, 56
      %v1605 = vpop.permute.xlu0 %1604
      %1606 = vrot.lane.b32.xlu0 %v739, 56
      %v1607 = vpop.permute.xlu0 %1606
      %1608 = vrot.lane.b32.xlu0 %v740, 56
      %v1609 = vpop.permute.xlu0 %1608
      %1610 = vrot.lane.b32.xlu0 %v741, 56
      %v1611 = vpop.permute.xlu0 %1610
      %1612 = vrot.lane.b32.xlu0 %v742, 56
      %v1613 = vpop.permute.xlu0 %1612
      %1614 = vrot.lane.b32.xlu0 %v743, 56
      %v1615 = vpop.permute.xlu0 %1614
      %1616 = vrot.lane.b32.xlu0 %v744, 56
      %v1617 = vpop.permute.xlu0 %1616
      %1618 = vrot.lane.b32.xlu0 %v745, 56
      %v1619 = vpop.permute.xlu0 %1618
      %1620 = vrot.lane.b32.xlu0 %v746, 56
      %v1621 = vpop.permute.xlu0 %1620
      %1622 = vrot.lane.b32.xlu0 %v747, 56
      %v1623 = vpop.permute.xlu0 %1622
      %1624 = vrot.lane.b32.xlu0 %v748, 56
      %v1625 = vpop.permute.xlu0 %1624
      %1626 = vrot.lane.b32.xlu0 %v749, 56
      %v1627 = vpop.permute.xlu0 %1626
      %1628 = vrot.lane.b32.xlu0 %v750, 56
      %v1629 = vpop.permute.xlu0 %1628
      %1630 = vrot.lane.b32.xlu0 %v751, 56
      %v1631 = vpop.permute.xlu0 %1630
      %1632 = vrot.lane.b32.xlu0 %v752, 56
      %v1633 = vpop.permute.xlu0 %1632
      %1634 = vrot.lane.b32.xlu0 %v753, 56
      %v1635 = vpop.permute.xlu0 %1634
      %1636 = vrot.lane.b32.xlu0 %v754, 56
      %v1637 = vpop.permute.xlu0 %1636
      %1638 = vrot.lane.b32.xlu0 %v755, 56
      %v1639 = vpop.permute.xlu0 %1638
      %1640 = vrot.lane.b32.xlu0 %v756, 56
      %v1641 = vpop.permute.xlu0 %1640
      %1642 = vrot.lane.b32.xlu0 %v757, 56
      %v1643 = vpop.permute.xlu0 %1642
      %1644 = vrot.lane.b32.xlu0 %v758, 56
      %v1645 = vpop.permute.xlu0 %1644
      %1646 = vrot.lane.b32.xlu0 %v759, 56
      %v1647 = vpop.permute.xlu0 %1646
      %1648 = vrot.lane.b32.xlu0 %v760, 56
      %v1649 = vpop.permute.xlu0 %1648
      %1650 = vrot.lane.b32.xlu0 %v761, 56
      %v1651 = vpop.permute.xlu0 %1650
      %1652 = vrot.lane.b32.xlu0 %v762, 56
      %v1653 = vpop.permute.xlu0 %1652
      %1654 = vrot.lane.b32.xlu0 %v763, 56
      %v1655 = vpop.permute.xlu0 %1654
      %1656 = vrot.lane.b32.xlu0 %v764, 56
      %v1657 = vpop.permute.xlu0 %1656
      %1658 = vrot.lane.b32.xlu0 %v765, 56
      %v1659 = vpop.permute.xlu0 %1658
      %1660 = vrot.lane.b32.xlu0 %v766, 56
      %v1661 = vpop.permute.xlu0 %1660
      %1662 = vrot.lane.b32.xlu0 %v767, 56
      %v1663 = vpop.permute.xlu0 %1662
      %1728 = vrot.lane.b32.xlu0 %v768, 64
      %v1729 = vpop.permute.xlu0 %1728
      %1730 = vrot.lane.b32.xlu0 %v769, 64
      %v1731 = vpop.permute.xlu0 %1730
      %1732 = vrot.lane.b32.xlu0 %v770, 64
      %v1733 = vpop.permute.xlu0 %1732
      %1734 = vrot.lane.b32.xlu0 %v771, 64
      %v1735 = vpop.permute.xlu0 %1734
      %1736 = vrot.lane.b32.xlu0 %v772, 64
      %v1737 = vpop.permute.xlu0 %1736
      %1738 = vrot.lane.b32.xlu0 %v773, 64
      %v1739 = vpop.permute.xlu0 %1738
      %1740 = vrot.lane.b32.xlu0 %v774, 64
      %v1741 = vpop.permute.xlu0 %1740
      %1742 = vrot.lane.b32.xlu0 %v775, 64
      %v1743 = vpop.permute.xlu0 %1742
      %1744 = vrot.lane.b32.xlu0 %v776, 64
      %v1745 = vpop.permute.xlu0 %1744
      %1746 = vrot.lane.b32.xlu0 %v777, 64
      %v1747 = vpop.permute.xlu0 %1746
      %1748 = vrot.lane.b32.xlu0 %v778, 64
      %v1749 = vpop.permute.xlu0 %1748
      %1750 = vrot.lane.b32.xlu0 %v779, 64
      %v1751 = vpop.permute.xlu0 %1750
      %1752 = vrot.lane.b32.xlu0 %v780, 64
      %v1753 = vpop.permute.xlu0 %1752
      %1754 = vrot.lane.b32.xlu0 %v781, 64
      %v1755 = vpop.permute.xlu0 %1754
      %1756 = vrot.lane.b32.xlu0 %v782, 64
      %v1757 = vpop.permute.xlu0 %1756
      %1758 = vrot.lane.b32.xlu0 %v783, 64
      %v1759 = vpop.permute.xlu0 %1758
      %1760 = vrot.lane.b32.xlu0 %v784, 64
      %v1761 = vpop.permute.xlu0 %1760
      %1762 = vrot.lane.b32.xlu0 %v785, 64
      %v1763 = vpop.permute.xlu0 %1762
      %1764 = vrot.lane.b32.xlu0 %v786, 64
      %v1765 = vpop.permute.xlu0 %1764
      %1766 = vrot.lane.b32.xlu0 %v787, 64
      %v1767 = vpop.permute.xlu0 %1766
      %1768 = vrot.lane.b32.xlu0 %v788, 64
      %v1769 = vpop.permute.xlu0 %1768
      %1770 = vrot.lane.b32.xlu0 %v789, 64
      %v1771 = vpop.permute.xlu0 %1770
      %1772 = vrot.lane.b32.xlu0 %v790, 64
      %v1773 = vpop.permute.xlu0 %1772
      %1774 = vrot.lane.b32.xlu0 %v791, 64
      %v1775 = vpop.permute.xlu0 %1774
      %1776 = vrot.lane.b32.xlu0 %v792, 64
      %v1777 = vpop.permute.xlu0 %1776
      %1778 = vrot.lane.b32.xlu0 %v793, 64
      %v1779 = vpop.permute.xlu0 %1778
      %1780 = vrot.lane.b32.xlu0 %v794, 64
      %v1781 = vpop.permute.xlu0 %1780
      %1782 = vrot.lane.b32.xlu0 %v795, 64
      %v1783 = vpop.permute.xlu0 %1782
      %1784 = vrot.lane.b32.xlu0 %v796, 64
      %v1785 = vpop.permute.xlu0 %1784
      %1786 = vrot.lane.b32.xlu0 %v797, 64
      %v1787 = vpop.permute.xlu0 %1786
      %1788 = vrot.lane.b32.xlu0 %v798, 64
      %v1789 = vpop.permute.xlu0 %1788
      %1790 = vrot.lane.b32.xlu0 %v799, 64
      %v1791 = vpop.permute.xlu0 %1790
      %v1824 = vsel %vm432, %v511, %v833
      %v1825 = vsel %vm432, %v512, %v835
      %v1826 = vsel %vm432, %v513, %v837
      %v1827 = vsel %vm432, %v514, %v839
      %v1828 = vsel %vm432, %v515, %v841
      %v1829 = vsel %vm432, %v516, %v843
      %v1830 = vsel %vm432, %v517, %v845
      %v1831 = vsel %vm432, %v518, %v847
      %v1832 = vsel %vm432, %v519, %v849
      %v1833 = vsel %vm432, %v520, %v851
      %v1834 = vsel %vm432, %v521, %v853
      %v1835 = vsel %vm432, %v522, %v855
      %v1836 = vsel %vm432, %v523, %v857
      %v1837 = vsel %vm432, %v524, %v859
      %v1838 = vsel %vm432, %v525, %v861
      %v1839 = vsel %vm432, %v526, %v863
      %v1840 = vsel %vm432, %v527, %v865
      %v1841 = vsel %vm432, %v528, %v867
      %v1842 = vsel %vm432, %v529, %v869
      %v1843 = vsel %vm432, %v530, %v871
      %v1844 = vsel %vm432, %v531, %v873
      %v1845 = vsel %vm432, %v532, %v875
      %v1846 = vsel %vm432, %v533, %v877
      %v1847 = vsel %vm432, %v534, %v879
      %v1848 = vsel %vm432, %v535, %v881
      %v1849 = vsel %vm432, %v536, %v883
      %v1850 = vsel %vm432, %v537, %v885
      %v1851 = vsel %vm432, %v538, %v887
      %v1852 = vsel %vm432, %v539, %v889
      %v1853 = vsel %vm432, %v540, %v891
      %v1854 = vsel %vm432, %v541, %v893
      %v1855 = vsel %vm432, %v542, %v895
      %vm1856 = vcmask 130048
      %v1857 = vsel %vm1856, %v1824, %v961
      %v1858 = vsel %vm1856, %v1825, %v963
      %v1859 = vsel %vm1856, %v1826, %v965
      %v1860 = vsel %vm1856, %v1827, %v967
      %v1861 = vsel %vm1856, %v1828, %v969
      %v1862 = vsel %vm1856, %v1829, %v971
      %v1863 = vsel %vm1856, %v1830, %v973
      %v1864 = vsel %vm1856, %v1831, %v975
      %v1865 = vsel %vm1856, %v1832, %v977
      %v1866 = vsel %vm1856, %v1833, %v979
      %v1867 = vsel %vm1856, %v1834, %v981
      %v1868 = vsel %vm1856, %v1835, %v983
      %v1869 = vsel %vm1856, %v1836, %v985
      %v1870 = vsel %vm1856, %v1837, %v987
      %v1871 = vsel %vm1856, %v1838, %v989
      %v1872 = vsel %vm1856, %v1839, %v991
      %v1873 = vsel %vm1856, %v1840, %v993
      %v1874 = vsel %vm1856, %v1841, %v995
      %v1875 = vsel %vm1856, %v1842, %v997
      %v1876 = vsel %vm1856, %v1843, %v999
      %v1877 = vsel %vm1856, %v1844, %v1001
      %v1878 = vsel %vm1856, %v1845, %v1003
      %v1879 = vsel %vm1856, %v1846, %v1005
      %v1880 = vsel %vm1856, %v1847, %v1007
      %v1881 = vsel %vm1856, %v1848, %v1009
      %v1882 = vsel %vm1856, %v1849, %v1011
      %v1883 = vsel %vm1856, %v1850, %v1013
      %v1884 = vsel %vm1856, %v1851, %v1015
      %v1885 = vsel %vm1856, %v1852, %v1017
      %v1886 = vsel %vm1856, %v1853, %v1019
      %v1887 = vsel %vm1856, %v1854, %v1021
      %v1888 = vsel %vm1856, %v1855, %v1023
      %vm1889 = vcmask 195584
      %v1890 = vsel %vm1889, %v1857, %v1089
      %v1891 = vsel %vm1889, %v1858, %v1091
      %v1892 = vsel %vm1889, %v1859, %v1093
      %v1893 = vsel %vm1889, %v1860, %v1095
      %v1894 = vsel %vm1889, %v1861, %v1097
      %v1895 = vsel %vm1889, %v1862, %v1099
      %v1896 = vsel %vm1889, %v1863, %v1101
      %v1897 = vsel %vm1889, %v1864, %v1103
      %v1898 = vsel %vm1889, %v1865, %v1105
      %v1899 = vsel %vm1889, %v1866, %v1107
      %v1900 = vsel %vm1889, %v1867, %v1109
      %v1901 = vsel %vm1889, %v1868, %v1111
      %v1902 = vsel %vm1889, %v1869, %v1113
      %v1903 = vsel %vm1889, %v1870, %v1115
      %v1904 = vsel %vm1889, %v1871, %v1117
      %v1905 = vsel %vm1889, %v1872, %v1119
      %v1906 = vsel %vm1889, %v1873, %v1121
      %v1907 = vsel %vm1889, %v1874, %v1123
      %v1908 = vsel %vm1889, %v1875, %v1125
      %v1909 = vsel %vm1889, %v1876, %v1127
      %v1910 = vsel %vm1889, %v1877, %v1129
      %v1911 = vsel %vm1889, %v1878, %v1131
      %v1912 = vsel %vm1889, %v1879, %v1133
      %v1913 = vsel %vm1889, %v1880, %v1135
      %v1914 = vsel %vm1889, %v1881, %v1137
      %v1915 = vsel %vm1889, %v1882, %v1139
      %v1916 = vsel %vm1889, %v1883, %v1141
      %v1917 = vsel %vm1889, %v1884, %v1143
      %v1918 = vsel %vm1889, %v1885, %v1145
      %v1919 = vsel %vm1889, %v1886, %v1147
      %v1920 = vsel %vm1889, %v1887, %v1149
      %v1921 = vsel %vm1889, %v1888, %v1151
      %vm1922 = vcmask 261120
      %v1923 = vsel %vm1922, %v1890, %v1217
      %v1924 = vsel %vm1922, %v1891, %v1219
      %v1925 = vsel %vm1922, %v1892, %v1221
      %v1926 = vsel %vm1922, %v1893, %v1223
      %v1927 = vsel %vm1922, %v1894, %v1225
      %v1928 = vsel %vm1922, %v1895, %v1227
      %v1929 = vsel %vm1922, %v1896, %v1229
      %v1930 = vsel %vm1922, %v1897, %v1231
      %v1931 = vsel %vm1922, %v1898, %v1233
      %v1932 = vsel %vm1922, %v1899, %v1235
      %v1933 = vsel %vm1922, %v1900, %v1237
      %v1934 = vsel %vm1922, %v1901, %v1239
      %v1935 = vsel %vm1922, %v1902, %v1241
      %v1936 = vsel %vm1922, %v1903, %v1243
      %v1937 = vsel %vm1922, %v1904, %v1245
      %v1938 = vsel %vm1922, %v1905, %v1247
      %v1939 = vsel %vm1922, %v1906, %v1249
      %v1940 = vsel %vm1922, %v1907, %v1251
      %v1941 = vsel %vm1922, %v1908, %v1253
      %v1942 = vsel %vm1922, %v1909, %v1255
      %v1943 = vsel %vm1922, %v1910, %v1257
      %v1944 = vsel %vm1922, %v1911, %v1259
      %v1945 = vsel %vm1922, %v1912, %v1261
      %v1946 = vsel %vm1922, %v1913, %v1263
      %v1947 = vsel %vm1922, %v1914, %v1265
      %v1948 = vsel %vm1922, %v1915, %v1267
      %v1949 = vsel %vm1922, %v1916, %v1269
      %v1950 = vsel %vm1922, %v1917, %v1271
      %v1951 = vsel %vm1922, %v1918, %v1273
      %v1952 = vsel %vm1922, %v1919, %v1275
      %v1953 = vsel %vm1922, %v1920, %v1277
      %v1954 = vsel %vm1922, %v1921, %v1279
      %vm1955 = vcmask 326656
      %v1956 = vsel %vm1955, %v1923, %v1345
      %v1957 = vsel %vm1955, %v1924, %v1347
      %v1958 = vsel %vm1955, %v1925, %v1349
      %v1959 = vsel %vm1955, %v1926, %v1351
      %v1960 = vsel %vm1955, %v1927, %v1353
      %v1961 = vsel %vm1955, %v1928, %v1355
      %v1962 = vsel %vm1955, %v1929, %v1357
      %v1963 = vsel %vm1955, %v1930, %v1359
      %v1964 = vsel %vm1955, %v1931, %v1361
      %v1965 = vsel %vm1955, %v1932, %v1363
      %v1966 = vsel %vm1955, %v1933, %v1365
      %v1967 = vsel %vm1955, %v1934, %v1367
      %v1968 = vsel %vm1955, %v1935, %v1369
      %v1969 = vsel %vm1955, %v1936, %v1371
      %v1970 = vsel %vm1955, %v1937, %v1373
      %v1971 = vsel %vm1955, %v1938, %v1375
      %v1972 = vsel %vm1955, %v1939, %v1377
      %v1973 = vsel %vm1955, %v1940, %v1379
      %v1974 = vsel %vm1955, %v1941, %v1381
      %v1975 = vsel %vm1955, %v1942, %v1383
      %v1976 = vsel %vm1955, %v1943, %v1385
      %v1977 = vsel %vm1955, %v1944, %v1387
      %v1978 = vsel %vm1955, %v1945, %v1389
      %v1979 = vsel %vm1955, %v1946, %v1391
      %v1980 = vsel %vm1955, %v1947, %v1393
      %v1981 = vsel %vm1955, %v1948, %v1395
      %v1982 = vsel %vm1955, %v1949, %v1397
      %v1983 = vsel %vm1955, %v1950, %v1399
      %v1984 = vsel %vm1955, %v1951, %v1401
      %v1985 = vsel %vm1955, %v1952, %v1403
      %v1986 = vsel %vm1955, %v1953, %v1405
      %v1987 = vsel %vm1955, %v1954, %v1407
      %vm1988 = vcmask 392192
      %v1989 = vsel %vm1988, %v1956, %v1473
      %v1990 = vsel %vm1988, %v1957, %v1475
      %v1991 = vsel %vm1988, %v1958, %v1477
      %v1992 = vsel %vm1988, %v1959, %v1479
      %v1993 = vsel %vm1988, %v1960, %v1481
      %v1994 = vsel %vm1988, %v1961, %v1483
      %v1995 = vsel %vm1988, %v1962, %v1485
      %v1996 = vsel %vm1988, %v1963, %v1487
      %v1997 = vsel %vm1988, %v1964, %v1489
      %v1998 = vsel %vm1988, %v1965, %v1491
      %v1999 = vsel %vm1988, %v1966, %v1493
      %v2000 = vsel %vm1988, %v1967, %v1495
      %v2001 = vsel %vm1988, %v1968, %v1497
      %v2002 = vsel %vm1988, %v1969, %v1499
      %v2003 = vsel %vm1988, %v1970, %v1501
      %v2004 = vsel %vm1988, %v1971, %v1503
      %v2005 = vsel %vm1988, %v1972, %v1505
      %v2006 = vsel %vm1988, %v1973, %v1507
      %v2007 = vsel %vm1988, %v1974, %v1509
      %v2008 = vsel %vm1988, %v1975, %v1511
      %v2009 = vsel %vm1988, %v1976, %v1513
      %v2010 = vsel %vm1988, %v1977, %v1515
      %v2011 = vsel %vm1988, %v1978, %v1517
      %v2012 = vsel %vm1988, %v1979, %v1519
      %v2013 = vsel %vm1988, %v1980, %v1521
      %v2014 = vsel %vm1988, %v1981, %v1523
      %v2015 = vsel %vm1988, %v1982, %v1525
      %v2016 = vsel %vm1988, %v1983, %v1527
      %v2017 = vsel %vm1988, %v1984, %v1529
      %v2018 = vsel %vm1988, %v1985, %v1531
      %v2019 = vsel %vm1988, %v1986, %v1533
      %v2020 = vsel %vm1988, %v1987, %v1535
      %vm2021 = vcmask 457728
      %v2022 = vsel %vm2021, %v1989, %v1601
      %v2023 = vsel %vm2021, %v1990, %v1603
      %v2024 = vsel %vm2021, %v1991, %v1605
      %v2025 = vsel %vm2021, %v1992, %v1607
      %v2026 = vsel %vm2021, %v1993, %v1609
      %v2027 = vsel %vm2021, %v1994, %v1611
      %v2028 = vsel %vm2021, %v1995, %v1613
      %v2029 = vsel %vm2021, %v1996, %v1615
      %v2030 = vsel %vm2021, %v1997, %v1617
      %v2031 = vsel %vm2021, %v1998, %v1619
      %v2032 = vsel %vm2021, %v1999, %v1621
      %v2033 = vsel %vm2021, %v2000, %v1623
      %v2034 = vsel %vm2021, %v2001, %v1625
      %v2035 = vsel %vm2021, %v2002, %v1627
      %v2036 = vsel %vm2021, %v2003, %v1629
      %v2037 = vsel %vm2021, %v2004, %v1631
      %v2038 = vsel %vm2021, %v2005, %v1633
      %v2039 = vsel %vm2021, %v2006, %v1635
      %v2040 = vsel %vm2021, %v2007, %v1637
      %v2041 = vsel %vm2021, %v2008, %v1639
      %v2042 = vsel %vm2021, %v2009, %v1641
      %v2043 = vsel %vm2021, %v2010, %v1643
      %v2044 = vsel %vm2021, %v2011, %v1645
      %v2045 = vsel %vm2021, %v2012, %v1647
      %v2046 = vsel %vm2021, %v2013, %v1649
      %v2047 = vsel %vm2021, %v2014, %v1651
      %v2048 = vsel %vm2021, %v2015, %v1653
      %v2049 = vsel %vm2021, %v2016, %v1655
      %v2050 = vsel %vm2021, %v2017, %v1657
      %v2051 = vsel %vm2021, %v2018, %v1659
      %v2052 = vsel %vm2021, %v2019, %v1661
      %v2053 = vsel %vm2021, %v2020, %v1663
      %vm2054 = vcmask 523264
      %v2055 = vsel %vm2054, %v2022, %v1729
      %v2056 = vsel %vm2054, %v2023, %v1731
      %v2057 = vsel %vm2054, %v2024, %v1733
      %v2058 = vsel %vm2054, %v2025, %v1735
      %v2059 = vsel %vm2054, %v2026, %v1737
      %v2060 = vsel %vm2054, %v2027, %v1739
      %v2061 = vsel %vm2054, %v2028, %v1741
      %v2062 = vsel %vm2054, %v2029, %v1743
      %v2063 = vsel %vm2054, %v2030, %v1745
      %v2064 = vsel %vm2054, %v2031, %v1747
      %v2065 = vsel %vm2054, %v2032, %v1749
      %v2066 = vsel %vm2054, %v2033, %v1751
      %v2067 = vsel %vm2054, %v2034, %v1753
      %v2068 = vsel %vm2054, %v2035, %v1755
      %v2069 = vsel %vm2054, %v2036, %v1757
      %v2070 = vsel %vm2054, %v2037, %v1759
      %v2071 = vsel %vm2054, %v2038, %v1761
      %v2072 = vsel %vm2054, %v2039, %v1763
      %v2073 = vsel %vm2054, %v2040, %v1765
      %v2074 = vsel %vm2054, %v2041, %v1767
      %v2075 = vsel %vm2054, %v2042, %v1769
      %v2076 = vsel %vm2054, %v2043, %v1771
      %v2077 = vsel %vm2054, %v2044, %v1773
      %v2078 = vsel %vm2054, %v2045, %v1775
      %v2079 = vsel %vm2054, %v2046, %v1777
      %v2080 = vsel %vm2054, %v2047, %v1779
      %v2081 = vsel %vm2054, %v2048, %v1781
      %v2082 = vsel %vm2054, %v2049, %v1783
      %v2083 = vsel %vm2054, %v2050, %v1785
      %v2084 = vsel %vm2054, %v2051, %v1787
      %v2085 = vsel %vm2054, %v2052, %v1789
      %v2086 = vsel %vm2054, %v2053, %v1791
      %v2087 = vld [vmem:[%s3] sm:$0xff]
      %v2088 = vld [vmem:[%s3 + $0x8] sm:$0xff]
      %v2089 = vld [vmem:[%s3 + $0x10] sm:$0xff]
      %v2090 = vld [vmem:[%s3 + $0x18] sm:$0xff]
      %v2091 = vld [vmem:[%s3 + $0x20] sm:$0xff]
      %v2092 = vld [vmem:[%s3 + $0x28] sm:$0xff]
      %v2093 = vld [vmem:[%s3 + $0x30] sm:$0xff]
      %v2094 = vld [vmem:[%s3 + $0x38] sm:$0xff]
      %v2095 = vld [vmem:[%s3 + $0x40] sm:$0xff]
      %v2096 = vld [vmem:[%s4] sm:$0x1]
      %v2098 = vperm.slane %v2096, 0
      %vm2100 = vcmask 588800
      %v2102 = vsel %vm2100, %v2055, 0
      %v2105 = vsel %vm2100, %v2056, 0
      %v2108 = vsel %vm2100, %v2057, 0
      %v2111 = vsel %vm2100, %v2058, 0
      %v2114 = vsel %vm2100, %v2059, 0
      %v2117 = vsel %vm2100, %v2060, 0
      %v2120 = vsel %vm2100, %v2061, 0
      %v2123 = vsel %vm2100, %v2062, 0
      %v2126 = vsel %vm2100, %v2063, 0
      %v2129 = vsel %vm2100, %v2064, 0
      %v2132 = vsel %vm2100, %v2065, 0
      %v2135 = vsel %vm2100, %v2066, 0
      %v2138 = vsel %vm2100, %v2067, 0
      %v2141 = vsel %vm2100, %v2068, 0
      %v2144 = vsel %vm2100, %v2069, 0
      %v2147 = vsel %vm2100, %v2070, 0
      %v2150 = vsel %vm2100, %v2071, 0
      %v2153 = vsel %vm2100, %v2072, 0
      %v2156 = vsel %vm2100, %v2073, 0
      %v2159 = vsel %vm2100, %v2074, 0
      %v2162 = vsel %vm2100, %v2075, 0
      %v2165 = vsel %vm2100, %v2076, 0
      %v2168 = vsel %vm2100, %v2077, 0
      %v2171 = vsel %vm2100, %v2078, 0
      %v2174 = vsel %vm2100, %v2079, 0
      %v2177 = vsel %vm2100, %v2080, 0
      %v2180 = vsel %vm2100, %v2081, 0
      %v2183 = vsel %vm2100, %v2082, 0
      %v2186 = vsel %vm2100, %v2083, 0
      %v2189 = vsel %vm2100, %v2084, 0
      %v2192 = vsel %vm2100, %v2085, 0
      %v2195 = vsel %vm2100, %v2086, 0
      %2197 = vmatpush.msra.mxu0 0.0
      %2198 = vmatpush.msra.mxu0 0.0
      %2199 = vmatpush.msra.mxu0 0.0
      %2200 = vmatpush.msra.mxu0 0.0
      %2201 = vmatpush.msra.mxu0 0.0
      %2202 = vmatpush.msra.mxu0 0.0
      %2203 = vmatpush.msra.mxu0 0.0
      %2204 = vmatpush.msra.mxu0 %v2095
      %2205 = vmatpush.msra.mxu0 %v2094
      %2206 = vmatpush.msra.mxu0 %v2093
      %2207 = vmatpush.msra.mxu0 %v2092
      %2208 = vmatpush.msra.mxu0 %v2091
      %2209 = vmatpush.msra.mxu0 %v2090
      %2210 = vmatpush.msra.mxu0 %v2089
      %2211 = vmatpush.msra.mxu0 %v2088
      %2212 = vmatpush.msra.mxu0 %v2087
      %2213 = vmatmul.f32.gmra.mxu0 %v2102
      %v2214 = vpop.f32.mrf.mxu0
      %v2215 = vadd.f32 %v2098, %v2214
      %2216 = vmatmul.f32.gmra.mxu0 %v2105
      %v2217 = vpop.f32.mrf.mxu0
      %v2218 = vadd.f32 %v2098, %v2217
      %2219 = vmatmul.f32.gmra.mxu0 %v2108
      %v2220 = vpop.f32.mrf.mxu0
      %v2221 = vadd.f32 %v2098, %v2220
      %2222 = vmatmul.f32.gmra.mxu0 %v2111
      %v2223 = vpop.f32.mrf.mxu0
      %v2224 = vadd.f32 %v2098, %v2223
      %2225 = vmatmul.f32.gmra.mxu0 %v2114
      %v2226 = vpop.f32.mrf.mxu0
      %v2227 = vadd.f32 %v2098, %v2226
      %2228 = vmatmul.f32.gmra.mxu0 %v2117
      %v2229 = vpop.f32.mrf.mxu0
      %v2230 = vadd.f32 %v2098, %v2229
      %2231 = vmatmul.f32.gmra.mxu0 %v2120
      %v2232 = vpop.f32.mrf.mxu0
      %v2233 = vadd.f32 %v2098, %v2232
      %2234 = vmatmul.f32.gmra.mxu0 %v2123
      %v2235 = vpop.f32.mrf.mxu0
      %v2236 = vadd.f32 %v2098, %v2235
      %2237 = vmatmul.f32.gmra.mxu0 %v2126
      %v2238 = vpop.f32.mrf.mxu0
      %v2239 = vadd.f32 %v2098, %v2238
      %2240 = vmatmul.f32.gmra.mxu0 %v2129
      %v2241 = vpop.f32.mrf.mxu0
      %v2242 = vadd.f32 %v2098, %v2241
      %2243 = vmatmul.f32.gmra.mxu0 %v2132
      %v2244 = vpop.f32.mrf.mxu0
      %v2245 = vadd.f32 %v2098, %v2244
      %2246 = vmatmul.f32.gmra.mxu0 %v2135
      %v2247 = vpop.f32.mrf.mxu0
      %v2248 = vadd.f32 %v2098, %v2247
      %2249 = vmatmul.f32.gmra.mxu0 %v2138
      %v2250 = vpop.f32.mrf.mxu0
      %v2251 = vadd.f32 %v2098, %v2250
      %2252 = vmatmul.f32.gmra.mxu0 %v2141
      %v2253 = vpop.f32.mrf.mxu0
      %v2254 = vadd.f32 %v2098, %v2253
      %2255 = vmatmul.f32.gmra.mxu0 %v2144
      %v2256 = vpop.f32.mrf.mxu0
      %v2257 = vadd.f32 %v2098, %v2256
      %2258 = vmatmul.f32.gmra.mxu0 %v2147
      %v2259 = vpop.f32.mrf.mxu0
      %v2260 = vadd.f32 %v2098, %v2259
      %2261 = vmatmul.f32.gmra.mxu0 %v2150
      %v2262 = vpop.f32.mrf.mxu0
      %v2263 = vadd.f32 %v2098, %v2262
      %2264 = vmatmul.f32.gmra.mxu0 %v2153
      %v2265 = vpop.f32.mrf.mxu0
      %v2266 = vadd.f32 %v2098, %v2265
      %2267 = vmatmul.f32.gmra.mxu0 %v2156
      %v2268 = vpop.f32.mrf.mxu0
      %v2269 = vadd.f32 %v2098, %v2268
      %2270 = vmatmul.f32.gmra.mxu0 %v2159
      %v2271 = vpop.f32.mrf.mxu0
      %v2272 = vadd.f32 %v2098, %v2271
      %2273 = vmatmul.f32.gmra.mxu0 %v2162
      %v2274 = vpop.f32.mrf.mxu0
      %v2275 = vadd.f32 %v2098, %v2274
      %2276 = vmatmul.f32.gmra.mxu0 %v2165
      %v2277 = vpop.f32.mrf.mxu0
      %v2278 = vadd.f32 %v2098, %v2277
      %2279 = vmatmul.f32.gmra.mxu0 %v2168
      %v2280 = vpop.f32.mrf.mxu0
      %v2281 = vadd.f32 %v2098, %v2280
      %2282 = vmatmul.f32.gmra.mxu0 %v2171
      %v2283 = vpop.f32.mrf.mxu0
      %v2284 = vadd.f32 %v2098, %v2283
      %2285 = vmatmul.f32.gmra.mxu0 %v2174
      %v2286 = vpop.f32.mrf.mxu0
      %v2287 = vadd.f32 %v2098, %v2286
      %2288 = vmatmul.f32.gmra.mxu0 %v2177
      %v2289 = vpop.f32.mrf.mxu0
      %v2290 = vadd.f32 %v2098, %v2289
      %2291 = vmatmul.f32.gmra.mxu0 %v2180
      %v2292 = vpop.f32.mrf.mxu0
      %v2293 = vadd.f32 %v2098, %v2292
      %2294 = vmatmul.f32.gmra.mxu0 %v2183
      %v2295 = vpop.f32.mrf.mxu0
      %v2296 = vadd.f32 %v2098, %v2295
      %2297 = vmatmul.f32.gmra.mxu0 %v2186
      %v2298 = vpop.f32.mrf.mxu0
      %v2299 = vadd.f32 %v2098, %v2298
      %2300 = vmatmul.f32.gmra.mxu0 %v2189
      %v2301 = vpop.f32.mrf.mxu0
      %v2302 = vadd.f32 %v2098, %v2301
      %2303 = vmatmul.f32.gmra.mxu0 %v2192
      %v2304 = vpop.f32.mrf.mxu0
      %v2305 = vadd.f32 %v2098, %v2304
      %2306 = vmatmul.f32.gmra.mxu0 %v2195
      %v2307 = vpop.f32.mrf.mxu0
      %v2308 = vadd.f32 %v2098, %v2307
      %2309 = vdwg.mxu0
      %2310 = vst.msk [vmem:[%s289] sm:$0xff] %vm432, %v2215
      %2311 = vst.msk [vmem:[%s289 + $0x8] sm:$0xff] %vm432, %v2218
      %2312 = vst.msk [vmem:[%s289 + $0x10] sm:$0xff] %vm432, %v2221
      %2313 = vst.msk [vmem:[%s289 + $0x18] sm:$0xff] %vm432, %v2224
      %2314 = vst.msk [vmem:[%s289 + $0x20] sm:$0xff] %vm432, %v2227
      %2315 = vst.msk [vmem:[%s289 + $0x28] sm:$0xff] %vm432, %v2230
      %2316 = vst.msk [vmem:[%s289 + $0x30] sm:$0xff] %vm432, %v2233
      %2317 = vst.msk [vmem:[%s289 + $0x38] sm:$0xff] %vm432, %v2236
      %2318 = vst.msk [vmem:[%s289 + $0x40] sm:$0xff] %vm432, %v2239
      %2319 = vst.msk [vmem:[%s289 + $0x48] sm:$0xff] %vm432, %v2242
      %2320 = vst.msk [vmem:[%s289 + $0x50] sm:$0xff] %vm432, %v2245
      %2321 = vst.msk [vmem:[%s289 + $0x58] sm:$0xff] %vm432, %v2248
      %2322 = vst.msk [vmem:[%s289 + $0x60] sm:$0xff] %vm432, %v2251
      %2323 = vst.msk [vmem:[%s289 + $0x68] sm:$0xff] %vm432, %v2254
      %2324 = vst.msk [vmem:[%s289 + $0x70] sm:$0xff] %vm432, %v2257
      %2325 = vst.msk [vmem:[%s289 + $0x78] sm:$0xff] %vm432, %v2260
      %2326 = vst.msk [vmem:[%s289 + $0x80] sm:$0xff] %vm432, %v2263
      %2327 = vst.msk [vmem:[%s289 + $0x88] sm:$0xff] %vm432, %v2266
      %2328 = vst.msk [vmem:[%s289 + $0x90] sm:$0xff] %vm432, %v2269
      %2329 = vst.msk [vmem:[%s289 + $0x98] sm:$0xff] %vm432, %v2272
      %2330 = vst.msk [vmem:[%s289 + $0xa0] sm:$0xff] %vm432, %v2275
      %2331 = vst.msk [vmem:[%s289 + $0xa8] sm:$0xff] %vm432, %v2278
      %2332 = vst.msk [vmem:[%s289 + $0xb0] sm:$0xff] %vm432, %v2281
      %2333 = vst.msk [vmem:[%s289 + $0xb8] sm:$0xff] %vm432, %v2284
      %2334 = vst.msk [vmem:[%s289 + $0xc0] sm:$0xff] %vm432, %v2287
      %2335 = vst.msk [vmem:[%s289 + $0xc8] sm:$0xff] %vm432, %v2290
      %2336 = vst.msk [vmem:[%s289 + $0xd0] sm:$0xff] %vm432, %v2293
      %2337 = vst.msk [vmem:[%s289 + $0xd8] sm:$0xff] %vm432, %v2296
      %2338 = vst.msk [vmem:[%s289 + $0xe0] sm:$0xff] %vm432, %v2299
      %2339 = vst.msk [vmem:[%s289 + $0xe8] sm:$0xff] %vm432, %v2302
      %2340 = vst.msk [vmem:[%s289 + $0xf0] sm:$0xff] %vm432, %v2305
      %2341 = vst.msk [vmem:[%s289 + $0xf8] sm:$0xff] %vm432, %v2308
      %v2342 = vsel %vm432, %v2215, 0.0
      %v2343 = vsel %vm432, %v2218, 0.0
      %v2344 = vadd.f32 %v2342, %v2343
      %v2345 = vsel %vm432, %v2221, 0.0
      %v2346 = vadd.f32 %v2344, %v2345
      %v2347 = vsel %vm432, %v2224, 0.0
      %v2348 = vadd.f32 %v2346, %v2347
      %v2349 = vsel %vm432, %v2227, 0.0
      %v2350 = vadd.f32 %v2348, %v2349
      %v2351 = vsel %vm432, %v2230, 0.0
      %v2352 = vadd.f32 %v2350, %v2351
      %v2353 = vsel %vm432, %v2233, 0.0
      %v2354 = vadd.f32 %v2352, %v2353
      %v2355 = vsel %vm432, %v2236, 0.0
      %v2356 = vadd.f32 %v2354, %v2355
      %v2357 = vsel %vm432, %v2239, 0.0
      %v2358 = vadd.f32 %v2356, %v2357
      %v2359 = vsel %vm432, %v2242, 0.0
      %v2360 = vadd.f32 %v2358, %v2359
      %v2361 = vsel %vm432, %v2245, 0.0
      %v2362 = vadd.f32 %v2360, %v2361
      %v2363 = vsel %vm432, %v2248, 0.0
      %v2364 = vadd.f32 %v2362, %v2363
      %v2365 = vsel %vm432, %v2251, 0.0
      %v2366 = vadd.f32 %v2364, %v2365
      %v2367 = vsel %vm432, %v2254, 0.0
      %v2368 = vadd.f32 %v2366, %v2367
      %v2369 = vsel %vm432, %v2257, 0.0
      %v2370 = vadd.f32 %v2368, %v2369
      %v2371 = vsel %vm432, %v2260, 0.0
      %v2372 = vadd.f32 %v2370, %v2371
      %v2373 = vsel %vm432, %v2263, 0.0
      %v2374 = vadd.f32 %v2372, %v2373
      %v2375 = vsel %vm432, %v2266, 0.0
      %v2376 = vadd.f32 %v2374, %v2375
      %v2377 = vsel %vm432, %v2269, 0.0
      %v2378 = vadd.f32 %v2376, %v2377
      %v2379 = vsel %vm432, %v2272, 0.0
      %v2380 = vadd.f32 %v2378, %v2379
      %v2381 = vsel %vm432, %v2275, 0.0
      %v2382 = vadd.f32 %v2380, %v2381
      %v2383 = vsel %vm432, %v2278, 0.0
      %v2384 = vadd.f32 %v2382, %v2383
      %v2385 = vsel %vm432, %v2281, 0.0
      %v2386 = vadd.f32 %v2384, %v2385
      %v2387 = vsel %vm432, %v2284, 0.0
      %v2388 = vadd.f32 %v2386, %v2387
      %v2389 = vsel %vm432, %v2287, 0.0
      %v2390 = vadd.f32 %v2388, %v2389
      %v2391 = vsel %vm432, %v2290, 0.0
      %v2392 = vadd.f32 %v2390, %v2391
      %v2393 = vsel %vm432, %v2293, 0.0
      %v2394 = vadd.f32 %v2392, %v2393
      %v2395 = vsel %vm432, %v2296, 0.0
      %v2396 = vadd.f32 %v2394, %v2395
      %v2397 = vsel %vm432, %v2299, 0.0
      %v2398 = vadd.f32 %v2396, %v2397
      %v2399 = vsel %vm432, %v2302, 0.0
      %v2400 = vadd.f32 %v2398, %v2399
      %v2401 = vsel %vm432, %v2305, 0.0
      %v2402 = vadd.f32 %v2400, %v2401
      %v2403 = vsel %vm432, %v2308, 0.0
      %v2404 = vadd.f32 %v2402, %v2403
      %v2405 = vrot.slane %v2404, 4
      %v2406 = vadd.f32 %v2404, %v2405
      %v2407 = vrot.slane %v2406, 2
      %v2408 = vadd.f32 %v2406, %v2407
      %v2409 = vrot.slane %v2408, 1
      %v2410 = vadd.f32 %v2408, %v2409
      %2411 = vst.msk [vmem:[%s292] sm:$0x1] %vm441, %v2410
      %v2412 = vmul.f32 %v2215, %v2215
      %v2413 = vmul.f32 %v2218, %v2218
      %v2414 = vmul.f32 %v2221, %v2221
      %v2415 = vmul.f32 %v2224, %v2224
      %v2416 = vmul.f32 %v2227, %v2227
      %v2417 = vmul.f32 %v2230, %v2230
      %v2418 = vmul.f32 %v2233, %v2233
      %v2419 = vmul.f32 %v2236, %v2236
      %v2420 = vmul.f32 %v2239, %v2239
      %v2421 = vmul.f32 %v2242, %v2242
      %v2422 = vmul.f32 %v2245, %v2245
      %v2423 = vmul.f32 %v2248, %v2248
      %v2424 = vmul.f32 %v2251, %v2251
      %v2425 = vmul.f32 %v2254, %v2254
      %v2426 = vmul.f32 %v2257, %v2257
      %v2427 = vmul.f32 %v2260, %v2260
      %v2428 = vmul.f32 %v2263, %v2263
      %v2429 = vmul.f32 %v2266, %v2266
      %v2430 = vmul.f32 %v2269, %v2269
      %v2431 = vmul.f32 %v2272, %v2272
      %v2432 = vmul.f32 %v2275, %v2275
      %v2433 = vmul.f32 %v2278, %v2278
      %v2434 = vmul.f32 %v2281, %v2281
      %v2435 = vmul.f32 %v2284, %v2284
      %v2436 = vmul.f32 %v2287, %v2287
      %v2437 = vmul.f32 %v2290, %v2290
      %v2438 = vmul.f32 %v2293, %v2293
      %v2439 = vmul.f32 %v2296, %v2296
      %v2440 = vmul.f32 %v2299, %v2299
      %v2441 = vmul.f32 %v2302, %v2302
      %v2442 = vmul.f32 %v2305, %v2305
      %v2443 = vmul.f32 %v2308, %v2308
      %v2444 = vsel %vm432, %v2412, 0.0
      %v2445 = vsel %vm432, %v2413, 0.0
      %v2446 = vadd.f32 %v2444, %v2445
      %v2447 = vsel %vm432, %v2414, 0.0
      %v2448 = vadd.f32 %v2446, %v2447
      %v2449 = vsel %vm432, %v2415, 0.0
      %v2450 = vadd.f32 %v2448, %v2449
      %v2451 = vsel %vm432, %v2416, 0.0
      %v2452 = vadd.f32 %v2450, %v2451
      %v2453 = vsel %vm432, %v2417, 0.0
      %v2454 = vadd.f32 %v2452, %v2453
      %v2455 = vsel %vm432, %v2418, 0.0
      %v2456 = vadd.f32 %v2454, %v2455
      %v2457 = vsel %vm432, %v2419, 0.0
      %v2458 = vadd.f32 %v2456, %v2457
      %v2459 = vsel %vm432, %v2420, 0.0
      %v2460 = vadd.f32 %v2458, %v2459
      %v2461 = vsel %vm432, %v2421, 0.0
      %v2462 = vadd.f32 %v2460, %v2461
      %v2463 = vsel %vm432, %v2422, 0.0
      %v2464 = vadd.f32 %v2462, %v2463
      %v2465 = vsel %vm432, %v2423, 0.0
      %v2466 = vadd.f32 %v2464, %v2465
      %v2467 = vsel %vm432, %v2424, 0.0
      %v2468 = vadd.f32 %v2466, %v2467
      %v2469 = vsel %vm432, %v2425, 0.0
      %v2470 = vadd.f32 %v2468, %v2469
      %v2471 = vsel %vm432, %v2426, 0.0
      %v2472 = vadd.f32 %v2470, %v2471
      %v2473 = vsel %vm432, %v2427, 0.0
      %v2474 = vadd.f32 %v2472, %v2473
      %v2475 = vsel %vm432, %v2428, 0.0
      %v2476 = vadd.f32 %v2474, %v2475
      %v2477 = vsel %vm432, %v2429, 0.0
      %v2478 = vadd.f32 %v2476, %v2477
      %v2479 = vsel %vm432, %v2430, 0.0
      %v2480 = vadd.f32 %v2478, %v2479
      %v2481 = vsel %vm432, %v2431, 0.0
      %v2482 = vadd.f32 %v2480, %v2481
      %v2483 = vsel %vm432, %v2432, 0.0
      %v2484 = vadd.f32 %v2482, %v2483
      %v2485 = vsel %vm432, %v2433, 0.0
      %v2486 = vadd.f32 %v2484, %v2485
      %v2487 = vsel %vm432, %v2434, 0.0
      %v2488 = vadd.f32 %v2486, %v2487
      %v2489 = vsel %vm432, %v2435, 0.0
      %v2490 = vadd.f32 %v2488, %v2489
      %v2491 = vsel %vm432, %v2436, 0.0
      %v2492 = vadd.f32 %v2490, %v2491
      %v2493 = vsel %vm432, %v2437, 0.0
      %v2494 = vadd.f32 %v2492, %v2493
      %v2495 = vsel %vm432, %v2438, 0.0
      %v2496 = vadd.f32 %v2494, %v2495
      %v2497 = vsel %vm432, %v2439, 0.0
      %v2498 = vadd.f32 %v2496, %v2497
      %v2499 = vsel %vm432, %v2440, 0.0
      %v2500 = vadd.f32 %v2498, %v2499
      %v2501 = vsel %vm432, %v2441, 0.0
      %v2502 = vadd.f32 %v2500, %v2501
      %v2503 = vsel %vm432, %v2442, 0.0
      %v2504 = vadd.f32 %v2502, %v2503
      %v2505 = vsel %vm432, %v2443, 0.0
      %v2506 = vadd.f32 %v2504, %v2505
      %v2507 = vrot.slane %v2506, 4
      %v2508 = vadd.f32 %v2506, %v2507
      %v2509 = vrot.slane %v2508, 2
      %v2510 = vadd.f32 %v2508, %v2509
      %v2511 = vrot.slane %v2510, 1
      %v2512 = vadd.f32 %v2510, %v2511
      %2513 = vst.msk [vmem:[%s295] sm:$0x1] %vm441, %v2512
      %p2514 = scmp.lt.s32.totalorder %s19, 1
      %s2515 = scalar_select %p2514, %s19, 1
      %s2516 = smul.addr %s2515, 32
      %s2517 = smul.addr %s2516, 8
      %s2518 = scalar_lea.vmem %s5, %s2517
      %p2519 = scmp.lt.s32.totalorder %s19, 1
      %s2520 = scalar_select %p2519, %s19, 1
      %s2521 = scalar_lea.vmem %s6, %s2520
      %p2522 = scmp.lt.s32.totalorder %s19, 1
      %s2523 = scalar_select %p2522, %s19, 1
      %s2524 = scalar_lea.vmem %s7, %s2523
      // Predicated region
      $region41: #{vgg_block_forward.4} parent=39 // pred_check
        %p2525 = pneg %p147
      $region42: #{vgg_block_forward.4} parent=39 // pred_check_branch
        %2527 = sbr.rel (%p2525) target = $region44
      $region43: #{vgg_block_forward.4} parent=39 // pred_region
        _
      $region44: #{vgg_block_forward.4} parent=39 // pred_fallthru
        _
      // Predicated region
      $region45: #{vgg_block_forward.4} parent=39 // pred_check
        %p2528 = pneg %p173
      $region46: #{vgg_block_forward.4} parent=39 // pred_check_branch
        %2530 = sbr.rel (%p2528) target = $region48
      $region47: #{vgg_block_forward.4} parent=39 // pred_region
        _
      $region48: #{vgg_block_forward.4} parent=39 // pred_fallthru
        _
      // Predicated region
      $region49: #{vgg_block_forward.4} parent=39 // pred_check
        %p2531 = pneg %p199
      $region50: #{vgg_block_forward.4} parent=39 // pred_check_branch
        %2533 = sbr.rel (%p2531) target = $region52
      $region51: #{vgg_block_forward.4} parent=39 // pred_region
        _
      $region52: #{vgg_block_forward.4} parent=39 // pred_fallthru
        _
    $region40: #{vgg_block_forward.4} parent=5 // pred_fallthru
      _
    %p2534 = scmp.le.s32.totalorder 2, %s14
    // Predicated region
    $region53: #{vgg_block_forward.4} parent=5 // pred_check
      %p2535 = pneg %p2534
    $region54: #{vgg_block_forward.4} parent=5 // pred_check_branch
      %2537 = sbr.rel (%p2535) target = $region56
    $region55: #{vgg_block_forward.4} parent=5 // pred_region
      %s2538 = ssub.s32 %s14, 2
      // Predicated region
      $region57: #{vgg_block_forward.4} parent=55 // pred_check
        %p2539 = pneg %p153
      $region58: #{vgg_block_forward.4} parent=55 // pred_check_branch
        %2541 = sbr.rel (%p2539) target = $region60
      $region59: #{vgg_block_forward.4} parent=55 // pred_region
        %p2542 = scmp.lt.s32.totalorder %s20, 1
        %s2543 = scalar_select %p2542, %s20, 1
        %s2544 = smul.addr %s2543, 32
        %s2545 = smul.addr %s2544, 8
        %s2546 = scalar_lea.vmem %s5, %s2545
      $region60: #{vgg_block_forward.4} parent=55 // pred_fallthru
        _
      // Predicated region
      $region61: #{vgg_block_forward.4} parent=55 // pred_check
        %p2547 = pneg %p179
      $region62: #{vgg_block_forward.4} parent=55 // pred_check_branch
        %2549 = sbr.rel (%p2547) target = $region64
      $region63: #{vgg_block_forward.4} parent=55 // pred_region
        %p2550 = scmp.lt.s32.totalorder %s20, 1
        %s2551 = scalar_select %p2550, %s20, 1
        %s2552 = scalar_lea.vmem %s6, %s2551
      $region64: #{vgg_block_forward.4} parent=55 // pred_fallthru
        _
      // Predicated region
      $region65: #{vgg_block_forward.4} parent=55 // pred_check
        %p2553 = pneg %p205
      $region66: #{vgg_block_forward.4} parent=55 // pred_check_branch
        %2555 = sbr.rel (%p2553) target = $region68
      $region67: #{vgg_block_forward.4} parent=55 // pred_region
        %p2556 = scmp.lt.s32.totalorder %s20, 1
        %s2557 = scalar_select %p2556, %s20, 1
        %s2558 = scalar_lea.vmem %s7, %s2557
      $region68: #{vgg_block_forward.4} parent=55 // pred_fallthru
        _
    $region56: #{vgg_block_forward.4} parent=5 // pred_fallthru
      _
  $region6: #{vgg_block_forward.4} parent=0 // loop_footer
    %s18 = sadd.s32 1, %s14
  $region7: #{vgg_block_forward.4} parent=0 // loop_footer_branch
    %13 = sbr.rel target = $region3
  $region8: #{vgg_block_forward.4} parent=0 // loop_exit
    _

</llo_original>
